<compile_context>
chip_gen: v7x
topology: tpu7x:2x2x1
jax: 0.10.0
libtpu: 0.0.40
codegen_flags: <defaults>
</compile_context>

<pallas_src>
import math
from functools import partial

import jax
import jax.numpy as jnp
from jax.experimental import pallas as pl
from jax.experimental.pallas import tpu as pltpu


# ----------------------------------------------------------------------------
# small helpers
# ----------------------------------------------------------------------------
def _pick_tile(n, preferred):
    """Largest multiple-of-128 divisor of n that is <= preferred.

    Falls back to the smallest multiple-of-128 divisor, and only to n itself
    when n has no multiple-of-128 divisor (e.g. n < 128 or n % 128 != 0).
    """
    preferred = max(int(preferred), 128)
    cap = min(n, preferred)
    best = 0
    t = 128
    while t <= cap:
        if n % t == 0:
            best = t
        t += 128
    if best:
        return best
    t = 128
    while t < n:
        if n % t == 0:
            return t
        t += 128
    return n


def _padded_bytes(shape, dtype):
    s = list(shape)
    if len(s) >= 1:
        s[-1] = -(-s[-1] // 128) * 128
    if len(s) >= 2:
        s[-2] = -(-s[-2] // 8) * 8
    return math.prod(s) * jnp.dtype(dtype).itemsize


def _vmem_capacity_bytes():
    try:
        return int(pltpu.get_tpu_info().vmem_capacity_bytes)
    except Exception:
        return 64 * 1024 * 1024          # conservative (v7x per-core VMEM)


def _qkv_vmem_bytes(heads, hd, TR, D, cdt, single_buffer):
    wb = 1 if single_buffer else 2
    b = 0
    b += 2 * _padded_bytes((TR, D), cdt)                       # x block
    b += wb * 3 * _padded_bytes((D, D), cdt)                   # Wq/Wk/Wv
    b += wb * (2 * _padded_bytes((D, 1), jnp.float32)
               + _padded_bytes((1, D), jnp.float32))           # biases
    b += 2 * (2 * _padded_bytes((D, TR), cdt)
              + _padded_bytes((heads, TR, hd), cdt))           # qT / vT / k out
    b += 3 * _padded_bytes((TR, D), jnp.float32)               # f32 intermediates
    return b


def _attn_vmem_bytes(heads, hd, TQ, TK, D, cdt, out_dtype, single_buffer):
    wb = 1 if single_buffer else 2
    b = 0
    b += 2 * _padded_bytes((heads, hd, TQ), cdt)               # qT block
    b += 2 * _padded_bytes((heads, TK, hd), cdt)               # k block (lane pad)
    b += 2 * _padded_bytes((heads, hd, TK), cdt)               # vT block
    b += wb * _padded_bytes((D, D), cdt)                       # Wproj^T
    b += wb * _padded_bytes((1, D), jnp.float32)               # bproj
    b += 2 * _padded_bytes((TQ, D), out_dtype)                 # output block
    b += 2 * _padded_bytes((heads, 1, TQ), jnp.float32)        # m, l
    b += _padded_bytes((heads, hd, TQ), jnp.float32)           # acc
    b += _padded_bytes((D, TQ), cdt)                           # repacked heads
    b += 3 * _padded_bytes((TK, TQ), jnp.float32)              # s / p internals
    return b


# ----------------------------------------------------------------------------
# Kernel A: QKV projection (done once) with attention-friendly output layouts.
# ----------------------------------------------------------------------------
def _qkv_proj_kernel(x_ref, wq_ref, wk_ref, wv_ref, bq_ref, bk_ref, bv_ref,
                     qT_ref, k_ref, vT_ref, *, heads, dim_head):
    x = x_ref[0]                                               # (TR, D)

    # q^T (D, TR) = Wq_scaled @ x^T : native transpose_rhs matmul, full-width.
    qT = jax.lax.dot_general(wq_ref[...], x, (((1,), (1,)), ((), ())),
                             preferred_element_type=jnp.float32) + bq_ref[...]
    qT_ref[0] = qT.astype(qT_ref.dtype)

    vT = jax.lax.dot_general(wv_ref[...], x, (((1,), (1,)), ((), ())),
                             preferred_element_type=jnp.float32) + bv_ref[...]
    vT_ref[0] = vT.astype(vT_ref.dtype)

    # K stays row-major; split into per-head slabs once here (static lane
    # slices, amortized over the full-width projection matmul).
    k = jnp.dot(x, wk_ref[...], preferred_element_type=jnp.float32) + bk_ref[...]
    k = k.astype(k_ref.dtype)
    for h in range(heads):
        k_ref[0, h] = k[:, h * dim_head:(h + 1) * dim_head]


def _call_qkv(xc, wq_s, wk_t, wv, bq_c, bk_r, bv_c, *, heads, dim_head, TR,
              vmem_limit, single_buffer):
    B, N, D = xc.shape
    cdt = xc.dtype

    def cspec(shape, idx):
        if single_buffer:
            return pl.BlockSpec(shape, idx, pipeline_mode=pl.Buffered(1))
        return pl.BlockSpec(shape, idx)

    kernel = partial(_qkv_proj_kernel, heads=heads, dim_head=dim_head)
    return pl.pallas_call(
        kernel,
        out_shape=(
            jax.ShapeDtypeStruct((B, D, N), cdt),              # q^T (scaled)
            jax.ShapeDtypeStruct((B, heads, N, dim_head), cdt),  # k
            jax.ShapeDtypeStruct((B, D, N), cdt),              # v^T
        ),
        grid_spec=pltpu.PrefetchScalarGridSpec(
            num_scalar_prefetch=0,
            grid=(B, N // TR),
            in_specs=[
                pl.BlockSpec((1, TR, D), lambda b, r: (b, r, 0)),     # x rows
                cspec((D, D), lambda b, r: (0, 0)),                   # Wq (scaled)
                cspec((D, D), lambda b, r: (0, 0)),                   # Wk.T
                cspec((D, D), lambda b, r: (0, 0)),                   # Wv
                cspec((D, 1), lambda b, r: (0, 0)),                   # bq (col)
                cspec((1, D), lambda b, r: (0, 0)),                   # bk (row)
                cspec((D, 1), lambda b, r: (0, 0)),                   # bv (col)
            ],
            out_specs=[
                pl.BlockSpec((1, D, TR), lambda b, r: (b, 0, r)),
                pl.BlockSpec((1, heads, TR, dim_head), lambda b, r: (b, 0, r, 0)),
                pl.BlockSpec((1, D, TR), lambda b, r: (b, 0, r)),
            ],
        ),
        compiler_params=pltpu.CompilerParams(
            dimension_semantics=("parallel", "parallel"),
            vmem_limit_bytes=int(vmem_limit),
        ),
    )(xc, wq_s, wk_t, wv, bq_c, bk_r, bv_c)


# ----------------------------------------------------------------------------
# Kernel B: flash attention (transposed online softmax) + output projection.
# ----------------------------------------------------------------------------
def _attn_kernel(qT_ref, k_ref, vT_ref, wp_ref, bp_ref, o_ref,
                 m_sc, l_sc, acc_sc, ocat_sc, *, heads, dim_head):
    ki = pl.program_id(2)
    nkv = pl.num_programs(2)
    cdt = qT_ref.dtype
    unroll = heads if heads <= 8 else 4

    @pl.when(ki == 0)
    def _prologue():
        m_sc[...] = jnp.full(m_sc.shape, -jnp.inf, dtype=m_sc.dtype)
        l_sc[...] = jnp.zeros(l_sc.shape, dtype=l_sc.dtype)
        acc_sc[...] = jnp.zeros(acc_sc.shape, dtype=acc_sc.dtype)

    def head_step(h, carry):
        q_h_T = qT_ref[0, h]                                   # (hd, TQ)
        k_h = k_ref[0, h]                                      # (TK, hd)
        v_h_T = vT_ref[0, h]                                   # (hd, TK)

        # scores^T (TK, TQ) = K_h @ Q_h^T : native form, lane-full output.
        s_T = jnp.dot(k_h, q_h_T, preferred_element_type=jnp.float32)

        m_prev = m_sc[h]                                       # (1, TQ)
        m_new = jnp.maximum(m_prev, jnp.max(s_T, axis=0, keepdims=True))
        alpha = jnp.exp(m_prev - m_new)                        # (1, TQ)
        # exp in compute dtype (bf16 EUP on v6e/v7x); no-op cast for f32.
        p_T = jnp.exp((s_T - m_new).astype(cdt))               # (TK, TQ)
        l_sc[h] = alpha * l_sc[h] + jnp.sum(p_T.astype(jnp.float32),
                                            axis=0, keepdims=True)
        # acc^T (hd, TQ) += V_h^T @ P^T : full-TK contraction, lane-full output.
        acc_sc[h] = alpha * acc_sc[h] + jnp.dot(
            v_h_T, p_T, preferred_element_type=jnp.float32)
        m_sc[h] = m_new
        return carry

    jax.lax.fori_loop(0, heads, head_step, 0, unroll=unroll)

    @pl.when(ki == nkv - 1)
    def _epilogue():
        # Normalize + repack heads into a (D, TQ) slab (sublane-aligned,
        # lane-dense stores), then a single K=D projection matmul.
        for h in range(heads):
            inv_l = 1.0 / l_sc[h]                              # exact, once per tile
            ocat_sc[h * dim_head:(h + 1) * dim_head, :] = (
                acc_sc[h] * inv_l).astype(cdt)
        out = jax.lax.dot_general(ocat_sc[...], wp_ref[...],
                                  (((0,), (0,)), ((), ())),
                                  preferred_element_type=jnp.float32) + bp_ref[...]
        o_ref[0] = out.astype(o_ref.dtype)


def _call_attn(qT4, k4, vT4, wp_t, bp, *, heads, dim_head, TQ, TK, out_dtype,
               vmem_limit, single_buffer):
    B = qT4.shape[0]
    N = qT4.shape[-1]
    D = heads * dim_head
    cdt = qT4.dtype

    def cspec(shape, idx):
        if single_buffer:
            return pl.BlockSpec(shape, idx, pipeline_mode=pl.Buffered(1))
        return pl.BlockSpec(shape, idx)

    kernel = partial(_attn_kernel, heads=heads, dim_head=dim_head)
    return pl.pallas_call(
        kernel,
        out_shape=jax.ShapeDtypeStruct((B, N, D), out_dtype),
        grid_spec=pltpu.PrefetchScalarGridSpec(
            num_scalar_prefetch=0,
            grid=(B, N // TQ, N // TK),
            in_specs=[
                pl.BlockSpec((1, heads, dim_head, TQ),
                             lambda b, qi, ki: (b, 0, 0, qi)),        # q^T
                pl.BlockSpec((1, heads, TK, dim_head),
                             lambda b, qi, ki: (b, 0, ki, 0)),        # k
                pl.BlockSpec((1, heads, dim_head, TK),
                             lambda b, qi, ki: (b, 0, 0, ki)),        # v^T
                cspec((D, D), lambda b, qi, ki: (0, 0)),              # Wproj^T
                cspec((1, D), lambda b, qi, ki: (0, 0)),              # bproj
            ],
            out_specs=pl.BlockSpec((1, TQ, D), lambda b, qi, ki: (b, qi, 0)),
            scratch_shapes=[
                pltpu.VMEM((heads, 1, TQ), jnp.float32),   # running max
                pltpu.VMEM((heads, 1, TQ), jnp.float32),   # running denom
                pltpu.VMEM((heads, dim_head, TQ), jnp.float32),  # running num^T
                pltpu.VMEM((D, TQ), cdt),                  # repacked heads^T
            ],
        ),
        compiler_params=pltpu.CompilerParams(
            dimension_semantics=("parallel", "parallel", "arbitrary"),
            vmem_limit_bytes=int(vmem_limit),
        ),
    )(qT4, k4, vT4, wp_t, bp)


# ----------------------------------------------------------------------------
# public wrapper
# ----------------------------------------------------------------------------
def self_attention_context(x, wqkv, bqkv, wproj, bproj, *, heads,
                           q_tile=256, kv_tile=512, row_tile=256,
                           compute_dtype=jnp.bfloat16):
    """Forward of SelfAttentionContext.

    x: (B, N, D); weights are PyTorch-style (out_features, in_features).
    compute_dtype: MXU operand dtype (default bfloat16 for v6e/v7x MXUs);
    accumulation is always f32.  Returns (B, N, D) in x.dtype.
    """
    B, N, D = x.shape
    assert D % heads == 0, "dim must be divisible by heads"
    hd = D // heads
    assert wqkv.shape == (3 * D, D) and bqkv.shape == (3 * D,)
    assert wproj.shape == (D, D) and bproj.shape == (D,)

    out_dtype = x.dtype
    cdt = jnp.dtype(compute_dtype) if compute_dtype is not None else jnp.dtype(x.dtype)

    TR = _pick_tile(N, row_tile)
    TQ = _pick_tile(N, q_tile)
    TK = _pick_tile(N, kv_tile)

    cap = _vmem_capacity_bytes()
    budget = int(cap * 0.9)

    # Shrink attention tiles until the VMEM plan fits the device budget (v7x: 64 MiB).
    for _ in range(8):
        est = _attn_vmem_bytes(heads, hd, TQ, TK, D, cdt, out_dtype, True)
        if est <= budget:
            break
        if TK > 128:
            nt = _pick_tile(N, max(128, TK // 2))
            if nt < TK:
                TK = nt
                continue
        if TQ > 128:
            nt = _pick_tile(N, max(128, TQ // 2))
            if nt < TQ:
                TQ = nt
                continue
        break

    # One-time (XLA) weight prep: fold 1/sqrt(hd) into Wq/bq; pre-transpose as
    # needed for the in-kernel native matmul forms.
    scale = 1.0 / math.sqrt(hd)
    wq_s = (wqkv[:D] * scale).astype(cdt)                      # (D_out, D_in)
    wk_t = jnp.transpose(wqkv[D:2 * D]).astype(cdt)            # (D_in, D_out)
    wv = wqkv[2 * D:].astype(cdt)                              # (D_out, D_in)
    bq_c = (bqkv[:D] * scale).reshape(D, 1).astype(jnp.float32)
    bk_r = bqkv[D:2 * D].reshape(1, D).astype(jnp.float32)
    bv_c = bqkv[2 * D:].reshape(D, 1).astype(jnp.float32)
    wp_t = jnp.transpose(wproj).astype(cdt)                    # (D_in, D_out)
    bp = bproj.reshape(1, D).astype(jnp.float32)
    xc = x.astype(cdt)

    # --- Kernel A: QKV projection (single-buffered weights, w/ fallback) -----
    def lim(e):
        return min(budget, max(32 * 1024 * 1024, int(1.25 * e) + (2 << 20)))

    try:
        qT, k4, vT = _call_qkv(
            xc, wq_s, wk_t, wv, bq_c, bk_r, bv_c, heads=heads, dim_head=hd,
            TR=TR, vmem_limit=lim(_qkv_vmem_bytes(heads, hd, TR, D, cdt, True)),
            single_buffer=True)
    except Exception:
        qT, k4, vT = _call_qkv(
            xc, wq_s, wk_t, wv, bq_c, bk_r, bv_c, heads=heads, dim_head=hd,
            TR=TR, vmem_limit=lim(_qkv_vmem_bytes(heads, hd, TR, D, cdt, False)),
            single_buffer=False)

    # Free (view-only) reshapes into per-head layouts.
    qT4 = qT.reshape(B, heads, hd, N)
    vT4 = vT.reshape(B, heads, hd, N)

    # --- Kernel B: flash attention + output projection -----------------------
    try:
        out = _call_attn(
            qT4, k4, vT4, wp_t, bp, heads=heads, dim_head=hd, TQ=TQ, TK=TK,
            out_dtype=out_dtype,
            vmem_limit=lim(_attn_vmem_bytes(heads, hd, TQ, TK, D, cdt, out_dtype, True)),
            single_buffer=True)
    except Exception:
        out = _call_attn(
            qT4, k4, vT4, wp_t, bp, heads=heads, dim_head=hd, TQ=TQ, TK=TK,
            out_dtype=out_dtype,
            vmem_limit=lim(_attn_vmem_bytes(heads, hd, TQ, TK, D, cdt, out_dtype, False)),
            single_buffer=False)
    return out


# ----------------------------------------------------------------------------
# pure-JAX reference (mirrors the PyTorch forward exactly)
# ----------------------------------------------------------------------------
def _reference(x, wqkv, bqkv, wproj, bproj, heads):
    B, N, D = x.shape
    hd = D // heads
    qkv = jnp.einsum("bnd,od->bno", x, wqkv) + bqkv            # (B, N, 3D)
    qkv = qkv.reshape(B, N, 3, heads, hd)
    q, k, v = qkv[:, :, 0], qkv[:, :, 1], qkv[:, :, 2]         # (B, N, H, hd)
    q = q.transpose(0, 2, 1, 3)
    k = k.transpose(0, 2, 1, 3)
    v = v.transpose(0, 2, 1, 3)
    s = jnp.einsum("bhqd,bhkd->bhqk", q, k) / math.sqrt(hd)
    p = jax.nn.softmax(s, axis=-1)
    o = jnp.einsum("bhqk,bhkd->bhqd", p, v)
    o = o.transpose(0, 2, 1, 3).reshape(B, N, D)
    return jnp.einsum("bnd,od->bno", o, wproj) + bproj


if __name__ == "__main__":
    # Small but tiling-representative shapes: dim=128, heads=4 -> dim_head=32,
    # seq=256 with 128-wide tiles -> attention grid (2, 2, 2) exercises the
    # online softmax across KV tiles and multiple query tiles.
    B, N, D, heads = 2, 256, 128, 4

    key = jax.random.PRNGKey(0)
    kx, k1, k2, k3, k4 = jax.random.split(key, 5)

    x = jax.random.normal(kx, (B, N, D), dtype=jnp.float32)
    wqkv = jax.random.normal(k1, (3 * D, D), dtype=jnp.float32) * (1.0 / math.sqrt(D))
    bqkv = jax.random.normal(k2, (3 * D,), dtype=jnp.float32) * 0.02
    wproj = jax.random.normal(k3, (D, D), dtype=jnp.float32) * (1.0 / math.sqrt(D))
    bproj = jax.random.normal(k4, (D,), dtype=jnp.float32) * 0.02

    ref = _reference(x, wqkv, bqkv, wproj, bproj, heads)

    # f32 compute path -- tight check.
    out = self_attention_context(x, wqkv, bqkv, wproj, bproj, heads=heads,
                                 q_tile=128, kv_tile=128,
                                 compute_dtype=jnp.float32)
    out = jax.block_until_ready(out)
    assert out.shape == (B, N, D)
    assert jnp.allclose(out, ref, atol=2e-2, rtol=2e-2), "f32 mismatch vs reference"

    # default bf16 compute path (f32 accumulation) -- loose sanity check.
    out_bf16 = self_attention_context(x, wqkv, bqkv, wproj, bproj, heads=heads,
                                      q_tile=128, kv_tile=128)
    out_bf16 = jax.block_until_ready(out_bf16)
    assert out_bf16.shape == (B, N, D)
    assert bool(jnp.all(jnp.isfinite(out_bf16)))
    assert jnp.allclose(out_bf16, ref, atol=0.25, rtol=0.25), "bf16 mismatch vs reference"

    print("KERNEL_OK")
</pallas_src>

<mosaic_0001>
module attributes {stable_mosaic.version = 11 : i64} {
  func.func @_qkv_proj_kernel(%arg0: i32, %arg1: i32, %arg2: memref<1x256x128xf32, #tpu.memory_space<vmem>>, %arg3: memref<128x128xf32, #tpu.memory_space<vmem>>, %arg4: memref<128x128xf32, #tpu.memory_space<vmem>>, %arg5: memref<128x128xf32, #tpu.memory_space<vmem>>, %arg6: memref<128x1xf32, #tpu.memory_space<vmem>>, %arg7: memref<1x128xf32, #tpu.memory_space<vmem>>, %arg8: memref<128x1xf32, #tpu.memory_space<vmem>>, %arg9: memref<1x128x256xf32, #tpu.memory_space<vmem>>, %arg10: memref<1x4x256x32xf32, #tpu.memory_space<vmem>>, %arg11: memref<1x128x256xf32, #tpu.memory_space<vmem>>) attributes {dimension_semantics = [#tpu.dimension_semantics<parallel>, #tpu.dimension_semantics<parallel>], iteration_bounds = array<i64: 2, 1>, scalar_prefetch = 0 : i64, scratch_operands = 0 : i64, tpu.core_type = #tpu.core_type<tc>, window_params = [{transform_indices = @transform_0, window_bounds = array<i64: 1, 256, 128>}, {pipeline_mode = #tpu.pipeline_mode<synchronous>, transform_indices = @transform_1, window_bounds = array<i64: 128, 128>}, {pipeline_mode = #tpu.pipeline_mode<synchronous>, transform_indices = @transform_2, window_bounds = array<i64: 128, 128>}, {pipeline_mode = #tpu.pipeline_mode<synchronous>, transform_indices = @transform_3, window_bounds = array<i64: 128, 128>}, {pipeline_mode = #tpu.pipeline_mode<synchronous>, transform_indices = @transform_4, window_bounds = array<i64: 128, 1>}, {pipeline_mode = #tpu.pipeline_mode<synchronous>, transform_indices = @transform_5, window_bounds = array<i64: 1, 128>}, {pipeline_mode = #tpu.pipeline_mode<synchronous>, transform_indices = @transform_6, window_bounds = array<i64: 128, 1>}, {transform_indices = @transform_7, window_bounds = array<i64: 1, 128, 256>}, {transform_indices = @transform_8, window_bounds = array<i64: 1, 4, 256, 32>}, {transform_indices = @transform_9, window_bounds = array<i64: 1, 128, 256>}]} {
    %c0 = arith.constant 0 : index
    %c0_0 = arith.constant 0 : index
    %c0_1 = arith.constant 0 : index
    %0 = vector.load %arg2[%c0, %c0_0, %c0_1] : memref<1x256x128xf32, #tpu.memory_space<vmem>>, vector<1x256x128xf32>
    %1 = vector.shape_cast %0 : vector<1x256x128xf32> to vector<256x128xf32>
    %c0_2 = arith.constant 0 : index
    %c0_3 = arith.constant 0 : index
    %2 = vector.load %arg3[%c0_2, %c0_3] : memref<128x128xf32, #tpu.memory_space<vmem>>, vector<128x128xf32>
    %cst = arith.constant dense<0.000000e+00> : vector<128x256xf32>
    %3 = tpu.matmul %2, %1, %cst {dimension_numbers = #tpu.dot_dimension_numbers<[1], [1], [0], [0], [0, 0, 1, 0], [], []>} : vector<128x128xf32>, vector<256x128xf32>, vector<128x256xf32> -> vector<128x256xf32>
    %c0_4 = arith.constant 0 : index
    %c0_5 = arith.constant 0 : index
    %4 = vector.load %arg6[%c0_4, %c0_5] : memref<128x1xf32, #tpu.memory_space<vmem>>, vector<128x1xf32>
    %5 = vector.broadcast %4 : vector<128x1xf32> to vector<128x256xf32>
    %6 = arith.addf %3, %5 : vector<128x256xf32>
    %c0_6 = arith.constant 0 : index
    %c0_7 = arith.constant 0 : index
    %c0_8 = arith.constant 0 : index
    %7 = vector.load %arg9[%c0_6, %c0_7, %c0_8] : memref<1x128x256xf32, #tpu.memory_space<vmem>>, vector<1x128x256xf32>
    %8 = vector.shape_cast %7 : vector<1x128x256xf32> to vector<128x256xf32>
    %9 = vector.shape_cast %6 : vector<128x256xf32> to vector<1x128x256xf32>
    tpu.vector_store %arg9[%c0_6, %c0_7, %c0_8], %9 {strides = array<i32>} : memref<1x128x256xf32, #tpu.memory_space<vmem>>, vector<1x128x256xf32>,
    %c0_9 = arith.constant 0 : index
    %c0_10 = arith.constant 0 : index
    %10 = vector.load %arg5[%c0_9, %c0_10] : memref<128x128xf32, #tpu.memory_space<vmem>>, vector<128x128xf32>
    %cst_11 = arith.constant dense<0.000000e+00> : vector<128x256xf32>
    %11 = tpu.matmul %10, %1, %cst_11 {dimension_numbers = #tpu.dot_dimension_numbers<[1], [1], [0], [0], [0, 0, 1, 0], [], []>} : vector<128x128xf32>, vector<256x128xf32>, vector<128x256xf32> -> vector<128x256xf32>
    %c0_12 = arith.constant 0 : index
    %c0_13 = arith.constant 0 : index
    %12 = vector.load %arg8[%c0_12, %c0_13] : memref<128x1xf32, #tpu.memory_space<vmem>>, vector<128x1xf32>
    %13 = vector.broadcast %12 : vector<128x1xf32> to vector<128x256xf32>
    %14 = arith.addf %11, %13 : vector<128x256xf32>
    %c0_14 = arith.constant 0 : index
    %c0_15 = arith.constant 0 : index
    %c0_16 = arith.constant 0 : index
    %15 = vector.load %arg11[%c0_14, %c0_15, %c0_16] : memref<1x128x256xf32, #tpu.memory_space<vmem>>, vector<1x128x256xf32>
    %16 = vector.shape_cast %15 : vector<1x128x256xf32> to vector<128x256xf32>
    %17 = vector.shape_cast %14 : vector<128x256xf32> to vector<1x128x256xf32>
    tpu.vector_store %arg11[%c0_14, %c0_15, %c0_16], %17 {strides = array<i32>} : memref<1x128x256xf32, #tpu.memory_space<vmem>>, vector<1x128x256xf32>,
    %c0_17 = arith.constant 0 : index
    %c0_18 = arith.constant 0 : index
    %18 = vector.load %arg4[%c0_17, %c0_18] : memref<128x128xf32, #tpu.memory_space<vmem>>, vector<128x128xf32>
    %cst_19 = arith.constant dense<0.000000e+00> : vector<256x128xf32>
    %19 = tpu.matmul %1, %18, %cst_19 {dimension_numbers = #tpu.dot_dimension_numbers<[1], [0], [0], [1], [0, 0, 1, 1], [], []>} : vector<256x128xf32>, vector<128x128xf32>, vector<256x128xf32> -> vector<256x128xf32>
    %c0_20 = arith.constant 0 : index
    %c0_21 = arith.constant 0 : index
    %20 = vector.load %arg7[%c0_20, %c0_21] : memref<1x128xf32, #tpu.memory_space<vmem>>, vector<1x128xf32>
    %21 = vector.broadcast %20 : vector<1x128xf32> to vector<256x128xf32>
    %22 = arith.addf %19, %21 : vector<256x128xf32>
    %23 = vector.extract_strided_slice %22 {offsets = [0, 0], sizes = [256, 32], strides = [1, 1]} : vector<256x128xf32> to vector<256x32xf32>
    %c0_22 = arith.constant 0 : index
    %c0_23 = arith.constant 0 : index
    %c0_24 = arith.constant 0 : index
    %c0_25 = arith.constant 0 : index
    %24 = vector.load %arg10[%c0_22, %c0_23, %c0_24, %c0_25] : memref<1x4x256x32xf32, #tpu.memory_space<vmem>>, vector<1x1x256x32xf32>
    %25 = vector.shape_cast %24 : vector<1x1x256x32xf32> to vector<256x32xf32>
    %26 = vector.shape_cast %23 : vector<256x32xf32> to vector<1x1x256x32xf32>
    tpu.vector_store %arg10[%c0_22, %c0_23, %c0_24, %c0_25], %26 {strides = array<i32>} : memref<1x4x256x32xf32, #tpu.memory_space<vmem>>, vector<1x1x256x32xf32>,
    %27 = vector.extract_strided_slice %22 {offsets = [0, 32], sizes = [256, 32], strides = [1, 1]} : vector<256x128xf32> to vector<256x32xf32>
    %c0_26 = arith.constant 0 : index
    %c1 = arith.constant 1 : index
    %c0_27 = arith.constant 0 : index
    %c0_28 = arith.constant 0 : index
    %28 = vector.load %arg10[%c0_26, %c1, %c0_27, %c0_28] : memref<1x4x256x32xf32, #tpu.memory_space<vmem>>, vector<1x1x256x32xf32>
    %29 = vector.shape_cast %28 : vector<1x1x256x32xf32> to vector<256x32xf32>
    %30 = vector.shape_cast %27 : vector<256x32xf32> to vector<1x1x256x32xf32>
    tpu.vector_store %arg10[%c0_26, %c1, %c0_27, %c0_28], %30 {strides = array<i32>} : memref<1x4x256x32xf32, #tpu.memory_space<vmem>>, vector<1x1x256x32xf32>,
    %31 = vector.extract_strided_slice %22 {offsets = [0, 64], sizes = [256, 32], strides = [1, 1]} : vector<256x128xf32> to vector<256x32xf32>
    %c0_29 = arith.constant 0 : index
    %c2 = arith.constant 2 : index
    %c0_30 = arith.constant 0 : index
    %c0_31 = arith.constant 0 : index
    %32 = vector.load %arg10[%c0_29, %c2, %c0_30, %c0_31] : memref<1x4x256x32xf32, #tpu.memory_space<vmem>>, vector<1x1x256x32xf32>
    %33 = vector.shape_cast %32 : vector<1x1x256x32xf32> to vector<256x32xf32>
    %34 = vector.shape_cast %31 : vector<256x32xf32> to vector<1x1x256x32xf32>
    tpu.vector_store %arg10[%c0_29, %c2, %c0_30, %c0_31], %34 {strides = array<i32>} : memref<1x4x256x32xf32, #tpu.memory_space<vmem>>, vector<1x1x256x32xf32>,
    %35 = vector.extract_strided_slice %22 {offsets = [0, 96], sizes = [256, 32], strides = [1, 1]} : vector<256x128xf32> to vector<256x32xf32>
    %c0_32 = arith.constant 0 : index
    %c3 = arith.constant 3 : index
    %c0_33 = arith.constant 0 : index
    %c0_34 = arith.constant 0 : index
    %36 = vector.load %arg10[%c0_32, %c3, %c0_33, %c0_34] : memref<1x4x256x32xf32, #tpu.memory_space<vmem>>, vector<1x1x256x32xf32>
    %37 = vector.shape_cast %36 : vector<1x1x256x32xf32> to vector<256x32xf32>
    %38 = vector.shape_cast %35 : vector<256x32xf32> to vector<1x1x256x32xf32>
    tpu.vector_store %arg10[%c0_32, %c3, %c0_33, %c0_34], %38 {strides = array<i32>} : memref<1x4x256x32xf32, #tpu.memory_space<vmem>>, vector<1x1x256x32xf32>,
    return
  }
  func.func @transform_0(%arg0: i32, %arg1: i32) -> (i32, i32, i32) {
    %c0_i32 = arith.constant 0 : i32
    %c0_i32_0 = arith.constant 0 : i32
    return %arg0, %arg1, %c0_i32 : i32, i32, i32
  }
  func.func @transform_1(%arg0: i32, %arg1: i32) -> (i32, i32) {
    %c0_i32 = arith.constant 0 : i32
    %c0_i32_0 = arith.constant 0 : i32
    %c0_i32_1 = arith.constant 0 : i32
    return %c0_i32, %c0_i32_0 : i32, i32
  }
  func.func @transform_2(%arg0: i32, %arg1: i32) -> (i32, i32) {
    %c0_i32 = arith.constant 0 : i32
    %c0_i32_0 = arith.constant 0 : i32
    %c0_i32_1 = arith.constant 0 : i32
    return %c0_i32, %c0_i32_0 : i32, i32
  }
  func.func @transform_3(%arg0: i32, %arg1: i32) -> (i32, i32) {
    %c0_i32 = arith.constant 0 : i32
    %c0_i32_0 = arith.constant 0 : i32
    %c0_i32_1 = arith.constant 0 : i32
    return %c0_i32, %c0_i32_0 : i32, i32
  }
  func.func @transform_4(%arg0: i32, %arg1: i32) -> (i32, i32) {
    %c0_i32 = arith.constant 0 : i32
    %c0_i32_0 = arith.constant 0 : i32
    %c0_i32_1 = arith.constant 0 : i32
    return %c0_i32, %c0_i32_0 : i32, i32
  }
  func.func @transform_5(%arg0: i32, %arg1: i32) -> (i32, i32) {
    %c0_i32 = arith.constant 0 : i32
    %c0_i32_0 = arith.constant 0 : i32
    %c0_i32_1 = arith.constant 0 : i32
    return %c0_i32, %c0_i32_0 : i32, i32
  }
  func.func @transform_6(%arg0: i32, %arg1: i32) -> (i32, i32) {
    %c0_i32 = arith.constant 0 : i32
    %c0_i32_0 = arith.constant 0 : i32
    %c0_i32_1 = arith.constant 0 : i32
    return %c0_i32, %c0_i32_0 : i32, i32
  }
  func.func @transform_7(%arg0: i32, %arg1: i32) -> (i32, i32, i32) {
    %c0_i32 = arith.constant 0 : i32
    %c0_i32_0 = arith.constant 0 : i32
    return %arg0, %c0_i32, %arg1 : i32, i32, i32
  }
  func.func @transform_8(%arg0: i32, %arg1: i32) -> (i32, i32, i32, i32) {
    %c0_i32 = arith.constant 0 : i32
    %c0_i32_0 = arith.constant 0 : i32
    %c0_i32_1 = arith.constant 0 : i32
    return %arg0, %c0_i32, %arg1, %c0_i32_0 : i32, i32, i32, i32
  }
  func.func @transform_9(%arg0: i32, %arg1: i32) -> (i32, i32, i32) {
    %c0_i32 = arith.constant 0 : i32
    %c0_i32_0 = arith.constant 0 : i32
    return %arg0, %c0_i32, %arg1 : i32, i32, i32
  }
}

module attributes {stable_mosaic.version = 11 : i64} {
  func.func @_qkv_proj_kernel(%arg0: i32, %arg1: i32, %arg2: memref<1x256x128xf32, #tpu.memory_space<vmem>>, %arg3: memref<128x128xf32, #tpu.memory_space<vmem>>, %arg4: memref<128x128xf32, #tpu.memory_space<vmem>>, %arg5: memref<128x128xf32, #tpu.memory_space<vmem>>, %arg6: memref<128x1xf32, #tpu.memory_space<vmem>>, %arg7: memref<1x128xf32, #tpu.memory_space<vmem>>, %arg8: memref<128x1xf32, #tpu.memory_space<vmem>>, %arg9: memref<1x128x256xf32, #tpu.memory_space<vmem>>, %arg10: memref<1x4x256x32xf32, #tpu.memory_space<vmem>>, %arg11: memref<1x128x256xf32, #tpu.memory_space<vmem>>) attributes {dimension_semantics = [#tpu.dimension_semantics<parallel>, #tpu.dimension_semantics<parallel>], iteration_bounds = array<i64: 2, 1>, scalar_prefetch = 0 : i64, scratch_operands = 0 : i64, tpu.core_type = #tpu.core_type<tc>, window_params = [{transform_indices = @transform_0, window_bounds = array<i64: 1, 256, 128>}, {pipeline_mode = #tpu.pipeline_mode<synchronous>, transform_indices = @transform_1, window_bounds = array<i64: 128, 128>}, {pipeline_mode = #tpu.pipeline_mode<synchronous>, transform_indices = @transform_2, window_bounds = array<i64: 128, 128>}, {pipeline_mode = #tpu.pipeline_mode<synchronous>, transform_indices = @transform_3, window_bounds = array<i64: 128, 128>}, {pipeline_mode = #tpu.pipeline_mode<synchronous>, transform_indices = @transform_4, window_bounds = array<i64: 128, 1>}, {pipeline_mode = #tpu.pipeline_mode<synchronous>, transform_indices = @transform_5, window_bounds = array<i64: 1, 128>}, {pipeline_mode = #tpu.pipeline_mode<synchronous>, transform_indices = @transform_6, window_bounds = array<i64: 128, 1>}, {transform_indices = @transform_7, window_bounds = array<i64: 1, 128, 256>}, {transform_indices = @transform_8, window_bounds = array<i64: 1, 4, 256, 32>}, {transform_indices = @transform_9, window_bounds = array<i64: 1, 128, 256>}]} {
    %c0 = arith.constant 0 : index
    %c0_0 = arith.constant 0 : index
    %c0_1 = arith.constant 0 : index
    %0 = vector.load %arg2[%c0, %c0_0, %c0_1] : memref<1x256x128xf32, #tpu.memory_space<vmem>>, vector<1x256x128xf32>
    %1 = vector.shape_cast %0 : vector<1x256x128xf32> to vector<256x128xf32>
    %c0_2 = arith.constant 0 : index
    %c0_3 = arith.constant 0 : index
    %2 = vector.load %arg3[%c0_2, %c0_3] : memref<128x128xf32, #tpu.memory_space<vmem>>, vector<128x128xf32>
    %cst = arith.constant dense<0.000000e+00> : vector<128x256xf32>
    %3 = tpu.matmul %2, %1, %cst {dimension_numbers = #tpu.dot_dimension_numbers<[1], [1], [0], [0], [0, 0, 1, 0], [], []>} : vector<128x128xf32>, vector<256x128xf32>, vector<128x256xf32> -> vector<128x256xf32>
    %c0_4 = arith.constant 0 : index
    %c0_5 = arith.constant 0 : index
    %4 = vector.load %arg6[%c0_4, %c0_5] : memref<128x1xf32, #tpu.memory_space<vmem>>, vector<128x1xf32>
    %5 = vector.broadcast %4 : vector<128x1xf32> to vector<128x256xf32>
    %6 = arith.addf %3, %5 : vector<128x256xf32>
    %c0_6 = arith.constant 0 : index
    %c0_7 = arith.constant 0 : index
    %c0_8 = arith.constant 0 : index
    %7 = vector.load %arg9[%c0_6, %c0_7, %c0_8] : memref<1x128x256xf32, #tpu.memory_space<vmem>>, vector<1x128x256xf32>
    %8 = vector.shape_cast %7 : vector<1x128x256xf32> to vector<128x256xf32>
    %9 = vector.shape_cast %6 : vector<128x256xf32> to vector<1x128x256xf32>
    tpu.vector_store %arg9[%c0_6, %c0_7, %c0_8], %9 {strides = array<i32>} : memref<1x128x256xf32, #tpu.memory_space<vmem>>, vector<1x128x256xf32>,
    %c0_9 = arith.constant 0 : index
    %c0_10 = arith.constant 0 : index
    %10 = vector.load %arg5[%c0_9, %c0_10] : memref<128x128xf32, #tpu.memory_space<vmem>>, vector<128x128xf32>
    %cst_11 = arith.constant dense<0.000000e+00> : vector<128x256xf32>
    %11 = tpu.matmul %10, %1, %cst_11 {dimension_numbers = #tpu.dot_dimension_numbers<[1], [1], [0], [0], [0, 0, 1, 0], [], []>} : vector<128x128xf32>, vector<256x128xf32>, vector<128x256xf32> -> vector<128x256xf32>
    %c0_12 = arith.constant 0 : index
    %c0_13 = arith.constant 0 : index
    %12 = vector.load %arg8[%c0_12, %c0_13] : memref<128x1xf32, #tpu.memory_space<vmem>>, vector<128x1xf32>
    %13 = vector.broadcast %12 : vector<128x1xf32> to vector<128x256xf32>
    %14 = arith.addf %11, %13 : vector<128x256xf32>
    %c0_14 = arith.constant 0 : index
    %c0_15 = arith.constant 0 : index
    %c0_16 = arith.constant 0 : index
    %15 = vector.load %arg11[%c0_14, %c0_15, %c0_16] : memref<1x128x256xf32, #tpu.memory_space<vmem>>, vector<1x128x256xf32>
    %16 = vector.shape_cast %15 : vector<1x128x256xf32> to vector<128x256xf32>
    %17 = vector.shape_cast %14 : vector<128x256xf32> to vector<1x128x256xf32>
    tpu.vector_store %arg11[%c0_14, %c0_15, %c0_16], %17 {strides = array<i32>} : memref<1x128x256xf32, #tpu.memory_space<vmem>>, vector<1x128x256xf32>,
    %c0_17 = arith.constant 0 : index
    %c0_18 = arith.constant 0 : index
    %18 = vector.load %arg4[%c0_17, %c0_18] : memref<128x128xf32, #tpu.memory_space<vmem>>, vector<128x128xf32>
    %cst_19 = arith.constant dense<0.000000e+00> : vector<256x128xf32>
    %19 = tpu.matmul %1, %18, %cst_19 {dimension_numbers = #tpu.dot_dimension_numbers<[1], [0], [0], [1], [0, 0, 1, 1], [], []>} : vector<256x128xf32>, vector<128x128xf32>, vector<256x128xf32> -> vector<256x128xf32>
    %c0_20 = arith.constant 0 : index
    %c0_21 = arith.constant 0 : index
    %20 = vector.load %arg7[%c0_20, %c0_21] : memref<1x128xf32, #tpu.memory_space<vmem>>, vector<1x128xf32>
    %21 = vector.broadcast %20 : vector<1x128xf32> to vector<256x128xf32>
    %22 = arith.addf %19, %21 : vector<256x128xf32>
    %23 = vector.extract_strided_slice %22 {offsets = [0, 0], sizes = [256, 32], strides = [1, 1]} : vector<256x128xf32> to vector<256x32xf32>
    %c0_22 = arith.constant 0 : index
    %c0_23 = arith.constant 0 : index
    %c0_24 = arith.constant 0 : index
    %c0_25 = arith.constant 0 : index
    %24 = vector.load %arg10[%c0_22, %c0_23, %c0_24, %c0_25] : memref<1x4x256x32xf32, #tpu.memory_space<vmem>>, vector<1x1x256x32xf32>
    %25 = vector.shape_cast %24 : vector<1x1x256x32xf32> to vector<256x32xf32>
    %26 = vector.shape_cast %23 : vector<256x32xf32> to vector<1x1x256x32xf32>
    tpu.vector_store %arg10[%c0_22, %c0_23, %c0_24, %c0_25], %26 {strides = array<i32>} : memref<1x4x256x32xf32, #tpu.memory_space<vmem>>, vector<1x1x256x32xf32>,
    %27 = vector.extract_strided_slice %22 {offsets = [0, 32], sizes = [256, 32], strides = [1, 1]} : vector<256x128xf32> to vector<256x32xf32>
    %c0_26 = arith.constant 0 : index
    %c1 = arith.constant 1 : index
    %c0_27 = arith.constant 0 : index
    %c0_28 = arith.constant 0 : index
    %28 = vector.load %arg10[%c0_26, %c1, %c0_27, %c0_28] : memref<1x4x256x32xf32, #tpu.memory_space<vmem>>, vector<1x1x256x32xf32>
    %29 = vector.shape_cast %28 : vector<1x1x256x32xf32> to vector<256x32xf32>
    %30 = vector.shape_cast %27 : vector<256x32xf32> to vector<1x1x256x32xf32>
    tpu.vector_store %arg10[%c0_26, %c1, %c0_27, %c0_28], %30 {strides = array<i32>} : memref<1x4x256x32xf32, #tpu.memory_space<vmem>>, vector<1x1x256x32xf32>,
    %31 = vector.extract_strided_slice %22 {offsets = [0, 64], sizes = [256, 32], strides = [1, 1]} : vector<256x128xf32> to vector<256x32xf32>
    %c0_29 = arith.constant 0 : index
    %c2 = arith.constant 2 : index
    %c0_30 = arith.constant 0 : index
    %c0_31 = arith.constant 0 : index
    %32 = vector.load %arg10[%c0_29, %c2, %c0_30, %c0_31] : memref<1x4x256x32xf32, #tpu.memory_space<vmem>>, vector<1x1x256x32xf32>
    %33 = vector.shape_cast %32 : vector<1x1x256x32xf32> to vector<256x32xf32>
    %34 = vector.shape_cast %31 : vector<256x32xf32> to vector<1x1x256x32xf32>
    tpu.vector_store %arg10[%c0_29, %c2, %c0_30, %c0_31], %34 {strides = array<i32>} : memref<1x4x256x32xf32, #tpu.memory_space<vmem>>, vector<1x1x256x32xf32>,
    %35 = vector.extract_strided_slice %22 {offsets = [0, 96], sizes = [256, 32], strides = [1, 1]} : vector<256x128xf32> to vector<256x32xf32>
    %c0_32 = arith.constant 0 : index
    %c3 = arith.constant 3 : index
    %c0_33 = arith.constant 0 : index
    %c0_34 = arith.constant 0 : index
    %36 = vector.load %arg10[%c0_32, %c3, %c0_33, %c0_34] : memref<1x4x256x32xf32, #tpu.memory_space<vmem>>, vector<1x1x256x32xf32>
    %37 = vector.shape_cast %36 : vector<1x1x256x32xf32> to vector<256x32xf32>
    %38 = vector.shape_cast %35 : vector<256x32xf32> to vector<1x1x256x32xf32>
    tpu.vector_store %arg10[%c0_32, %c3, %c0_33, %c0_34], %38 {strides = array<i32>} : memref<1x4x256x32xf32, #tpu.memory_space<vmem>>, vector<1x1x256x32xf32>,
    return
  }
  func.func @transform_0(%arg0: i32, %arg1: i32) -> (i32, i32, i32) {
    %c0_i32 = arith.constant 0 : i32
    %c0_i32_0 = arith.constant 0 : i32
    return %arg0, %arg1, %c0_i32 : i32, i32, i32
  }
  func.func @transform_1(%arg0: i32, %arg1: i32) -> (i32, i32) {
    %c0_i32 = arith.constant 0 : i32
    %c0_i32_0 = arith.constant 0 : i32
    %c0_i32_1 = arith.constant 0 : i32
    return %c0_i32, %c0_i32_0 : i32, i32
  }
  func.func @transform_2(%arg0: i32, %arg1: i32) -> (i32, i32) {
    %c0_i32 = arith.constant 0 : i32
    %c0_i32_0 = arith.constant 0 : i32
    %c0_i32_1 = arith.constant 0 : i32
    return %c0_i32, %c0_i32_0 : i32, i32
  }
  func.func @transform_3(%arg0: i32, %arg1: i32) -> (i32, i32) {
    %c0_i32 = arith.constant 0 : i32
    %c0_i32_0 = arith.constant 0 : i32
    %c0_i32_1 = arith.constant 0 : i32
    return %c0_i32, %c0_i32_0 : i32, i32
  }
  func.func @transform_4(%arg0: i32, %arg1: i32) -> (i32, i32) {
    %c0_i32 = arith.constant 0 : i32
    %c0_i32_0 = arith.constant 0 : i32
    %c0_i32_1 = arith.constant 0 : i32
    return %c0_i32, %c0_i32_0 : i32, i32
  }
  func.func @transform_5(%arg0: i32, %arg1: i32) -> (i32, i32) {
    %c0_i32 = arith.constant 0 : i32
    %c0_i32_0 = arith.constant 0 : i32
    %c0_i32_1 = arith.constant 0 : i32
    return %c0_i32, %c0_i32_0 : i32, i32
  }
  func.func @transform_6(%arg0: i32, %arg1: i32) -> (i32, i32) {
    %c0_i32 = arith.constant 0 : i32
    %c0_i32_0 = arith.constant 0 : i32
    %c0_i32_1 = arith.constant 0 : i32
    return %c0_i32, %c0_i32_0 : i32, i32
  }
  func.func @transform_7(%arg0: i32, %arg1: i32) -> (i32, i32, i32) {
    %c0_i32 = arith.constant 0 : i32
    %c0_i32_0 = arith.constant 0 : i32
    return %arg0, %c0_i32, %arg1 : i32, i32, i32
  }
  func.func @transform_8(%arg0: i32, %arg1: i32) -> (i32, i32, i32, i32) {
    %c0_i32 = arith.constant 0 : i32
    %c0_i32_0 = arith.constant 0 : i32
    %c0_i32_1 = arith.constant 0 : i32
    return %arg0, %c0_i32, %arg1, %c0_i32_0 : i32, i32, i32, i32
  }
  func.func @transform_9(%arg0: i32, %arg1: i32) -> (i32, i32, i32) {
    %c0_i32 = arith.constant 0 : i32
    %c0_i32_0 = arith.constant 0 : i32
    return %arg0, %c0_i32, %arg1 : i32, i32, i32
  }
}

</mosaic_0001>

<llo_original>
// kernel: tpu_custom_call.1
$region0: #{tpu_custom_call.1}
  #allocation0 [shape = 'u32[]', space=smem, size = 0x4, offset = 0x4, fixed_abs, tag = 'smem constant byte address 0x4 - core index']
  #allocation1 [shape = 'u32[144,128]{1,0:T(1,128)}', space=vmem, size = 0x12000, scoped, tag = 'internal scratch']
  %s0 = inlined_call_operand.hbm [shape: f32[2,256,128], index: 0, kind: input, shape index: {}]
  %s1 = inlined_call_operand.vmem [shape: f32[128,128], index: 1, kind: input, shape index: {}]
  %s2 = inlined_call_operand.vmem [shape: f32[128,128], index: 2, kind: input, shape index: {}]
  %s3 = inlined_call_operand.hbm [shape: f32[128,128], index: 3, kind: input, shape index: {}]
  %s4 = inlined_call_operand.vmem [shape: f32[128,1], index: 4, kind: input, shape index: {}]
  %s5 = inlined_call_operand.vmem [shape: f32[1,128], index: 5, kind: input, shape index: {}]
  %s6 = inlined_call_operand.vmem [shape: f32[128,1], index: 6, kind: input, shape index: {}]
  %s7 = inlined_call_operand.hbm [shape: f32[2,128,256], index: 7, kind: output, shape index: {0}]
  %s8 = inlined_call_operand.vmem [shape: f32[2,4,256,32], index: 8, kind: output, shape index: {1}]
  %s9 = inlined_call_operand.hbm [shape: f32[2,128,256], index: 9, kind: output, shape index: {2}]
  %10 = xla_tuple %s7, %s8, %s9
  %s11 = sld [smem:[#allocation0]]
  $region85: #{tpu_custom_call.1} parent=0
    _
  %s13 = ssub.s32 1, %s11
  %s14 = scalar_select 0, %s13, %s11
  $region1: #{tpu_custom_call.1} parent=0
    #allocation2 [shape = 'u8[262144]{0}', space=vmem, size = 0x40000, scoped, tag = 'input window, operand 0']
    #allocation3 [shape = 's32[2]{0}', space=sflag, size = 0x8, scoped, tag = 'scoped memory for tpu_custom_call.1']
    #allocation4 [shape = 's32[2]{0}', space=sflag, size = 0x8, scoped, tag = 'scoped memory for tpu_custom_call.1']
    #allocation5 [shape = 'u8[65536]{0}', space=vmem, size = 0x10000, scoped, tag = 'input window, operand 3, single buffered']
    #allocation6 [shape = 's32[1]{0}', space=sflag, size = 0x4, scoped, tag = 'scoped memory for tpu_custom_call.1']
    #allocation7 [shape = 'u8[262144]{0}', space=vmem, size = 0x40000, scoped, tag = 'output window, operand 0']
    #allocation8 [shape = 'u8[262144]{0}', space=vmem, size = 0x40000, scoped, tag = 'output window, operand 2']
    #allocation9 [shape = 's32[2]{0}', space=sflag, size = 0x8, scoped, tag = 'scoped memory for tpu_custom_call.1']
    %15 = vsyncpa [#allocation3], 0
    %s16 = scalar_lea.sflag [#allocation3], 1
    %17 = vsyncpa %s16, 0
    %18 = vsyncpa [#allocation6], 0
    %19 = vsyncpa [#allocation4], 0
    %s20 = scalar_lea.sflag [#allocation4], 1
    %21 = vsyncpa %s20, 0
    %22 = vsyncpa [#allocation9], 0
    %s23 = scalar_lea.sflag [#allocation9], 1
    %24 = vsyncpa %s23, 0
    loop: start=0, step=1, limit=4
    $region2: #{tpu_custom_call.1} parent=1 // loop_pre_header
      _
    $region3: #{tpu_custom_call.1} parent=1 // loop_header
      %s26 = sphi 0, %s30
      %p27 = scmp.ge.s32.totalorder %s26, 4
      %s33 = sphi 0, %s45
      %s34 = sphi 0, %s41
      %s35 = sphi 0, %s33
      %s36 = sphi 0, %s34
      %s37 = sphi 0, %s35
      %s38 = sphi 0, %s36
      %s50 = sphi 0, %s52
      %s53 = sphi 0, %s50
      %s54 = sphi 0, %s53
      %s70 = sphi 0, %s54
      %s74 = sphi 0, %s74
      %s76 = sphi 0, %s74
      %s77 = sphi 0, %s76
      %s91 = sphi 0, %s77
      %s95 = sphi 0, %s95
      %s97 = sphi 0, %s95
      %s98 = sphi 0, %s97
      %s112 = sphi 0, %s98
      %s116 = sphi 0, %s116
      %s118 = sphi 0, %s116
      %s119 = sphi 0, %s118
      %s133 = sphi 0, %s119
      %s137 = sphi 0, %s137
      %s139 = sphi 0, %s137
      %s140 = sphi 0, %s139
      %s154 = sphi 0, %s140
      %s158 = sphi 0, %s158
      %s160 = sphi 0, %s158
      %s161 = sphi 0, %s160
      %s175 = sphi 0, %s161
      %s179 = sphi 0, %s179
      %s181 = sphi 0, %s179
      %s182 = sphi 0, %s181
      %s196 = sphi 0, %s182
      %s204 = sphi 0, %s206
      %s207 = sphi 0, %s204
      %s208 = sphi 0, %s207
      %s224 = sphi 0, %s208
      %s232 = sphi 0, %s234
      %s235 = sphi 0, %s232
      %s236 = sphi 0, %s235
      %s252 = sphi 0, %s236
      %s260 = sphi 0, %s262
      %s263 = sphi 0, %s260
      %s264 = sphi 0, %s263
      %s280 = sphi 0, %s264
    $region4: #{tpu_custom_call.1} parent=1 // loop_header_branch
      %29 = sbr.rel (%p27) target = $region8
    $region5: #{tpu_custom_call.1} parent=1 // loop_body
      %s31 = ssub.s32 %s26, 1
      %s32 = ssub.s32 %s26, 2
      %s39 = sadd.s32 1, %s34
      %p40 = scmp.ge.s32.totalorder %s39, 1
      %s41 = scalar_select %p40, 0, %s39
      %s42 = sadd.s32 1, %s33
      %s43 = scalar_select %p40, %s42, %s33
      %p44 = scmp.ge.s32.totalorder %s43, 2
      %s45 = scalar_select %p44, 0, %s43
      %s46 = ssub.s32 %s33, %s45
      %s47 = ssub.s32 %s34, %s41
      %s48 = sor.u32 %s46, %s47
      %p49 = scmp.eq.s32.totalorder %s48, 0
      %s51 = sadd.s32 %s50, 1
      %s52 = scalar_select %p49, %s50, %s51
      %p55 = pneg %p49
      %p56 = scmp.eq.s32.totalorder %s26, 1
      %p57 = por %p55, %p56
      %p58 = scmp.ne.s32.totalorder %s50, %s53
      %p59 = scmp.eq.s32.totalorder %s26, 0
      %p60 = por %p58, %p59
      %p61 = scmp.ne.s32.totalorder %s50, %s53
      %p62 = scmp.eq.s32.totalorder %s31, 1
      %p63 = por %p61, %p62
      %p64 = scmp.ne.s32.totalorder %s53, %s54
      %p65 = scmp.eq.s32.totalorder %s31, 0
      %p66 = por %p64, %p65
      %p67 = scmp.ne.s32.totalorder %s53, %s54
      %p68 = scmp.eq.s32.totalorder %s32, 1
      %p69 = por %p67, %p68
      %p71 = scmp.ne.s32.totalorder %s54, %s70
      %p72 = scmp.eq.s32.totalorder %s32, 0
      %p73 = por %p71, %p72
      %s75 = sadd.s32 %s74, 1
      %p78 = scmp.eq.s32.totalorder %s26, 1
      %p79 = scmp.ne.s32.totalorder %s74, %s76
      %p80 = scmp.eq.s32.totalorder %s26, 0
      %p81 = por %p79, %p80
      %p82 = scmp.ne.s32.totalorder %s74, %s76
      %p83 = scmp.eq.s32.totalorder %s31, 1
      %p84 = por %p82, %p83
      %p85 = scmp.ne.s32.totalorder %s76, %s77
      %p86 = scmp.eq.s32.totalorder %s31, 0
      %p87 = por %p85, %p86
      %p88 = scmp.ne.s32.totalorder %s76, %s77
      %p89 = scmp.eq.s32.totalorder %s32, 1
      %p90 = por %p88, %p89
      %p92 = scmp.ne.s32.totalorder %s77, %s91
      %p93 = scmp.eq.s32.totalorder %s32, 0
      %p94 = por %p92, %p93
      %s96 = sadd.s32 %s95, 1
      %p99 = scmp.eq.s32.totalorder %s26, 1
      %p100 = scmp.ne.s32.totalorder %s95, %s97
      %p101 = scmp.eq.s32.totalorder %s26, 0
      %p102 = por %p100, %p101
      %p103 = scmp.ne.s32.totalorder %s95, %s97
      %p104 = scmp.eq.s32.totalorder %s31, 1
      %p105 = por %p103, %p104
      %p106 = scmp.ne.s32.totalorder %s97, %s98
      %p107 = scmp.eq.s32.totalorder %s31, 0
      %p108 = por %p106, %p107
      %p109 = scmp.ne.s32.totalorder %s97, %s98
      %p110 = scmp.eq.s32.totalorder %s32, 1
      %p111 = por %p109, %p110
      %p113 = scmp.ne.s32.totalorder %s98, %s112
      %p114 = scmp.eq.s32.totalorder %s32, 0
      %p115 = por %p113, %p114
      %s117 = sadd.s32 %s116, 1
      %p120 = scmp.eq.s32.totalorder %s26, 1
      %p121 = scmp.ne.s32.totalorder %s116, %s118
      %p122 = scmp.eq.s32.totalorder %s26, 0
      %p123 = por %p121, %p122
      %p124 = scmp.ne.s32.totalorder %s116, %s118
      %p125 = scmp.eq.s32.totalorder %s31, 1
      %p126 = por %p124, %p125
      %p127 = scmp.ne.s32.totalorder %s118, %s119
      %p128 = scmp.eq.s32.totalorder %s31, 0
      %p129 = por %p127, %p128
      %p130 = scmp.ne.s32.totalorder %s118, %s119
      %p131 = scmp.eq.s32.totalorder %s32, 1
      %p132 = por %p130, %p131
      %p134 = scmp.ne.s32.totalorder %s119, %s133
      %p135 = scmp.eq.s32.totalorder %s32, 0
      %p136 = por %p134, %p135
      %s138 = sadd.s32 %s137, 1
      %p141 = scmp.eq.s32.totalorder %s26, 1
      %p142 = scmp.ne.s32.totalorder %s137, %s139
      %p143 = scmp.eq.s32.totalorder %s26, 0
      %p144 = por %p142, %p143
      %p145 = scmp.ne.s32.totalorder %s137, %s139
      %p146 = scmp.eq.s32.totalorder %s31, 1
      %p147 = por %p145, %p146
      %p148 = scmp.ne.s32.totalorder %s139, %s140
      %p149 = scmp.eq.s32.totalorder %s31, 0
      %p150 = por %p148, %p149
      %p151 = scmp.ne.s32.totalorder %s139, %s140
      %p152 = scmp.eq.s32.totalorder %s32, 1
      %p153 = por %p151, %p152
      %p155 = scmp.ne.s32.totalorder %s140, %s154
      %p156 = scmp.eq.s32.totalorder %s32, 0
      %p157 = por %p155, %p156
      %s159 = sadd.s32 %s158, 1
      %p162 = scmp.eq.s32.totalorder %s26, 1
      %p163 = scmp.ne.s32.totalorder %s158, %s160
      %p164 = scmp.eq.s32.totalorder %s26, 0
      %p165 = por %p163, %p164
      %p166 = scmp.ne.s32.totalorder %s158, %s160
      %p167 = scmp.eq.s32.totalorder %s31, 1
      %p168 = por %p166, %p167
      %p169 = scmp.ne.s32.totalorder %s160, %s161
      %p170 = scmp.eq.s32.totalorder %s31, 0
      %p171 = por %p169, %p170
      %p172 = scmp.ne.s32.totalorder %s160, %s161
      %p173 = scmp.eq.s32.totalorder %s32, 1
      %p174 = por %p172, %p173
      %p176 = scmp.ne.s32.totalorder %s161, %s175
      %p177 = scmp.eq.s32.totalorder %s32, 0
      %p178 = por %p176, %p177
      %s180 = sadd.s32 %s179, 1
      %p183 = scmp.eq.s32.totalorder %s26, 1
      %p184 = scmp.ne.s32.totalorder %s179, %s181
      %p185 = scmp.eq.s32.totalorder %s26, 0
      %p186 = por %p184, %p185
      %p187 = scmp.ne.s32.totalorder %s179, %s181
      %p188 = scmp.eq.s32.totalorder %s31, 1
      %p189 = por %p187, %p188
      %p190 = scmp.ne.s32.totalorder %s181, %s182
      %p191 = scmp.eq.s32.totalorder %s31, 0
      %p192 = por %p190, %p191
      %p193 = scmp.ne.s32.totalorder %s181, %s182
      %p194 = scmp.eq.s32.totalorder %s32, 1
      %p195 = por %p193, %p194
      %p197 = scmp.ne.s32.totalorder %s182, %s196
      %p198 = scmp.eq.s32.totalorder %s32, 0
      %p199 = por %p197, %p198
      %s200 = ssub.s32 %s33, %s45
      %s201 = ssub.s32 %s34, %s41
      %s202 = sor.u32 %s200, %s201
      %p203 = scmp.eq.s32.totalorder %s202, 0
      %s205 = sadd.s32 %s204, 1
      %s206 = scalar_select %p203, %s204, %s205
      %p209 = pneg %p203
      %p210 = scmp.eq.s32.totalorder %s26, 1
      %p211 = por %p209, %p210
      %p212 = scmp.ne.s32.totalorder %s204, %s207
      %p213 = scmp.eq.s32.totalorder %s26, 0
      %p214 = por %p212, %p213
      %p215 = scmp.ne.s32.totalorder %s204, %s207
      %p216 = scmp.eq.s32.totalorder %s31, 1
      %p217 = por %p215, %p216
      %p218 = scmp.ne.s32.totalorder %s207, %s208
      %p219 = scmp.eq.s32.totalorder %s31, 0
      %p220 = por %p218, %p219
      %p221 = scmp.ne.s32.totalorder %s207, %s208
      %p222 = scmp.eq.s32.totalorder %s32, 1
      %p223 = por %p221, %p222
      %p225 = scmp.ne.s32.totalorder %s208, %s224
      %p226 = scmp.eq.s32.totalorder %s32, 0
      %p227 = por %p225, %p226
      %s228 = ssub.s32 %s33, %s45
      %s229 = ssub.s32 %s34, %s41
      %s230 = sor.u32 %s228, %s229
      %p231 = scmp.eq.s32.totalorder %s230, 0
      %s233 = sadd.s32 %s232, 1
      %s234 = scalar_select %p231, %s232, %s233
      %p237 = pneg %p231
      %p238 = scmp.eq.s32.totalorder %s26, 1
      %p239 = por %p237, %p238
      %p240 = scmp.ne.s32.totalorder %s232, %s235
      %p241 = scmp.eq.s32.totalorder %s26, 0
      %p242 = por %p240, %p241
      %p243 = scmp.ne.s32.totalorder %s232, %s235
      %p244 = scmp.eq.s32.totalorder %s31, 1
      %p245 = por %p243, %p244
      %p246 = scmp.ne.s32.totalorder %s235, %s236
      %p247 = scmp.eq.s32.totalorder %s31, 0
      %p248 = por %p246, %p247
      %p249 = scmp.ne.s32.totalorder %s235, %s236
      %p250 = scmp.eq.s32.totalorder %s32, 1
      %p251 = por %p249, %p250
      %p253 = scmp.ne.s32.totalorder %s236, %s252
      %p254 = scmp.eq.s32.totalorder %s32, 0
      %p255 = por %p253, %p254
      %s256 = ssub.s32 %s33, %s45
      %s257 = ssub.s32 %s34, %s41
      %s258 = sor.u32 %s256, %s257
      %p259 = scmp.eq.s32.totalorder %s258, 0
      %s261 = sadd.s32 %s260, 1
      %s262 = scalar_select %p259, %s260, %s261
      %p265 = pneg %p259
      %p266 = scmp.eq.s32.totalorder %s26, 1
      %p267 = por %p265, %p266
      %p268 = scmp.ne.s32.totalorder %s260, %s263
      %p269 = scmp.eq.s32.totalorder %s26, 0
      %p270 = por %p268, %p269
      %p271 = scmp.ne.s32.totalorder %s260, %s263
      %p272 = scmp.eq.s32.totalorder %s31, 1
      %p273 = por %p271, %p272
      %p274 = scmp.ne.s32.totalorder %s263, %s264
      %p275 = scmp.eq.s32.totalorder %s31, 0
      %p276 = por %p274, %p275
      %p277 = scmp.ne.s32.totalorder %s263, %s264
      %p278 = scmp.eq.s32.totalorder %s32, 1
      %p279 = por %p277, %p278
      %p281 = scmp.ne.s32.totalorder %s264, %s280
      %p282 = scmp.eq.s32.totalorder %s32, 0
      %p283 = por %p281, %p282
      %p284 = scmp.le.s32.totalorder 1, %s26
      %p285 = scmp.lt.s32.totalorder %s26, 3
      %p286 = pnand %p284, %p285
      %p287 = pneg %p286
      // Predicated region
      $region9: #{tpu_custom_call.1} parent=5 // pred_check
        _
      $region10: #{tpu_custom_call.1} parent=5 // pred_check_branch
        %289 = sbr.rel (%p286) target = $region12
      $region11: #{tpu_custom_call.1} parent=5 // pred_region
        %s290 = ssub.s32 %s26, 1
        // Predicated region
        $region13: #{tpu_custom_call.1} parent=11 // pred_check
          %p291 = pneg %p87
        $region14: #{tpu_custom_call.1} parent=11 // pred_check_branch
          %293 = sbr.rel (%p291) target = $region16
        $region15: #{tpu_custom_call.1} parent=11 // pred_region
          _
        $region16: #{tpu_custom_call.1} parent=11 // pred_fallthru
          _
        // Predicated region
        $region17: #{tpu_custom_call.1} parent=11 // pred_check
          %p294 = pneg %p108
        $region18: #{tpu_custom_call.1} parent=11 // pred_check_branch
          %296 = sbr.rel (%p294) target = $region20
        $region19: #{tpu_custom_call.1} parent=11 // pred_region
          _
        $region20: #{tpu_custom_call.1} parent=11 // pred_fallthru
          _
        // Predicated region
        $region21: #{tpu_custom_call.1} parent=11 // pred_check
          %p297 = pneg %p129
        $region22: #{tpu_custom_call.1} parent=11 // pred_check_branch
          %299 = sbr.rel (%p297) target = $region24
        $region23: #{tpu_custom_call.1} parent=11 // pred_region
          %s301 = ssub.s32 2048, 2048
          %302 = vsyncadd [#allocation6], %s301
          %s303 = sshll.u32 [#allocation5], 4
          %s304 = int_to_ptr.vmem [resolvable:$true] %s303
          %309 = dma.hbm_to_vmem [thread:$0]  %s3, 2048, %s304, [#allocation6], 128, 128, 8
        $region24: #{tpu_custom_call.1} parent=11 // pred_fallthru
          _
        // Predicated region
        $region25: #{tpu_custom_call.1} parent=11 // pred_check
          %p310 = pneg %p150
        $region26: #{tpu_custom_call.1} parent=11 // pred_check_branch
          %312 = sbr.rel (%p310) target = $region28
        $region27: #{tpu_custom_call.1} parent=11 // pred_region
          _
        $region28: #{tpu_custom_call.1} parent=11 // pred_fallthru
          _
        // Predicated region
        $region29: #{tpu_custom_call.1} parent=11 // pred_check
          %p313 = pneg %p171
        $region30: #{tpu_custom_call.1} parent=11 // pred_check_branch
          %315 = sbr.rel (%p313) target = $region32
        $region31: #{tpu_custom_call.1} parent=11 // pred_region
          _
        $region32: #{tpu_custom_call.1} parent=11 // pred_fallthru
          _
        // Predicated region
        $region33: #{tpu_custom_call.1} parent=11 // pred_check
          %p316 = pneg %p192
        $region34: #{tpu_custom_call.1} parent=11 // pred_check_branch
          %318 = sbr.rel (%p316) target = $region36
        $region35: #{tpu_custom_call.1} parent=11 // pred_region
          _
        $region36: #{tpu_custom_call.1} parent=11 // pred_fallthru
          _
      $region12: #{tpu_custom_call.1} parent=5 // pred_fallthru
        _
      %p319 = scmp.lt.s32.totalorder %s26, 2
      // Predicated region
      $region37: #{tpu_custom_call.1} parent=5 // pred_check
        %p320 = pneg %p319
      $region38: #{tpu_custom_call.1} parent=5 // pred_check_branch
        %322 = sbr.rel (%p320) target = $region40
      $region39: #{tpu_custom_call.1} parent=5 // pred_region
        // Predicated region
        $region41: #{tpu_custom_call.1} parent=39 // pred_check
          %p323 = pneg %p60
        $region42: #{tpu_custom_call.1} parent=39 // pred_check_branch
          %325 = sbr.rel (%p323) target = $region44
        $region43: #{tpu_custom_call.1} parent=39 // pred_region
          %s326 = sand.u32 %s50, 1
          %s327 = scalar_lea.sflag [#allocation3], %s326
          %s328 = sand.u32 %s50, 1
          %s329 = smul.addr %s328, 256
          %s330 = scalar_lea.vmem [#allocation2], %s329
          %s331 = smul.u32 32, %s34
          %s333 = ssub.s32 4096, 4096
          %334 = vsyncadd %s327, %s333
          %s335 = smul.addr %s33, 32
          %s336 = sadd.s32 %s331, %s335
          %s337 = smul.addr %s336, 128
          %s338 = scalar_lea.hbm %s0, %s337
          %s339 = sshll.u32 %s330, 4
          %s340 = int_to_ptr.vmem [resolvable:$true] %s339
          %345 = dma.hbm_to_vmem [thread:$0]  %s338, 4096, %s340, %s327, 128, 128, 8
        $region44: #{tpu_custom_call.1} parent=39 // pred_fallthru
          _
      $region40: #{tpu_custom_call.1} parent=5 // pred_fallthru
        _
      %p346 = scmp.le.s32.totalorder 1, %s26
      %p347 = scmp.lt.s32.totalorder %s26, 3
      %p348 = pnand %p346, %p347
      %p349 = pneg %p348
      // Predicated region
      $region45: #{tpu_custom_call.1} parent=5 // pred_check
        _
      $region46: #{tpu_custom_call.1} parent=5 // pred_check_branch
        %351 = sbr.rel (%p348) target = $region48
      $region47: #{tpu_custom_call.1} parent=5 // pred_region
        %s352 = ssub.s32 %s26, 1
        %s353 = sand.u32 %s53, 1
        %s354 = scalar_lea.sflag [#allocation3], %s353
        %s355 = sand.u32 %s53, 1
        %s356 = smul.addr %s355, 256
        %s357 = scalar_lea.vmem [#allocation2], %s356
        // Predicated region
        $region49: #{tpu_custom_call.1} parent=47 // pred_check
          %p358 = pneg %p66
        $region50: #{tpu_custom_call.1} parent=47 // pred_check_branch
          %360 = sbr.rel (%p358) target = $region52
        $region51: #{tpu_custom_call.1} parent=47 // pred_region
          %361 = dma.done %s354, 4096
        $region52: #{tpu_custom_call.1} parent=47 // pred_fallthru
          _
        // Predicated region
        $region53: #{tpu_custom_call.1} parent=47 // pred_check
          %p362 = pneg %p129
        $region54: #{tpu_custom_call.1} parent=47 // pred_check_branch
          %364 = sbr.rel (%p362) target = $region56
        $region55: #{tpu_custom_call.1} parent=47 // pred_region
          %365 = dma.done [#allocation6], 2048
        $region56: #{tpu_custom_call.1} parent=47 // pred_fallthru
          _
        %s366 = sand.u32 %s53, 1
        %s367 = scalar_lea.sflag [#allocation3], %s366
        %s368 = sand.u32 %s53, 1
        %s369 = smul.addr %s368, 256
        %s370 = scalar_lea.vmem [#allocation2], %s369
        %p371 = pneg %p66
        %p372 = pneg %p63
        %p373 = pneg %p87
        %p374 = pneg %p84
        %p375 = pneg %p108
        %p376 = pneg %p105
        %p377 = pneg %p129
        %p378 = pneg %p126
        %p379 = pneg %p150
        %p380 = pneg %p147
        %p381 = pneg %p171
        %p382 = pneg %p168
        %p383 = pneg %p192
        %p384 = pneg %p189
        %p385 = pneg %p220
        %p386 = pneg %p217
        %s387 = sand.u32 %s207, 1
        %s388 = scalar_lea.sflag [#allocation4], %s387
        %s389 = sand.u32 %s207, 1
        %s390 = smul.addr %s389, 256
        %s391 = scalar_lea.vmem [#allocation7], %s390
        %p392 = pneg %p248
        %p393 = pneg %p245
        %s394 = smul.u32 32, %s36
        %p395 = scmp.lt.s32.totalorder %s35, 1
        %s396 = scalar_select %p395, %s35, 1
        %p397 = scmp.lt.s32.totalorder %s394, 31
        %s398 = scalar_select %p397, %s394, 31
        %s399 = smul.addr %s396, 128
        %s400 = sadd.s32 %s398, %s399
        %s401 = smul.addr %s400, 8
        %s402 = scalar_lea.vmem %s8, %s401
        %p403 = pneg %p276
        %p404 = pneg %p273
        %s405 = sand.u32 %s263, 1
        %s406 = scalar_lea.sflag [#allocation9], %s405
        %s407 = sand.u32 %s263, 1
        %s408 = smul.addr %s407, 256
        %s409 = scalar_lea.vmem [#allocation8], %s408
        %s410 = smul.u32 32, %s36
        %s411 = smul.u32 2, %s36
        %s412 = smul.u32 32, %s36
        %p413 = scmp.lt.s32.totalorder %s35, 1
        %s414 = scalar_select %p413, %s35, 1
        %p415 = scmp.lt.s32.totalorder %s412, 31
        %s416 = scalar_select %p415, %s412, 31
        %s417 = smul.addr %s414, 128
        %s418 = sadd.s32 %s416, %s417
        %s419 = smul.addr %s418, 8
        %s420 = scalar_lea.vmem %s8, %s419
        %s421 = smul.u32 32, %s36
        %s422 = smul.u32 2, %s36
        %v423 = vld [vmem:[%s357] sm:$0xff]
        %v424 = vld [vmem:[%s357 + $0x8] sm:$0xff]
        %v425 = vld [vmem:[%s357 + $0x10] sm:$0xff]
        %v426 = vld [vmem:[%s357 + $0x18] sm:$0xff]
        %v427 = vld [vmem:[%s357 + $0x20] sm:$0xff]
        %v428 = vld [vmem:[%s357 + $0x28] sm:$0xff]
        %v429 = vld [vmem:[%s357 + $0x30] sm:$0xff]
        %v430 = vld [vmem:[%s357 + $0x38] sm:$0xff]
        %v431 = vld [vmem:[%s357 + $0x40] sm:$0xff]
        %v432 = vld [vmem:[%s357 + $0x48] sm:$0xff]
        %v433 = vld [vmem:[%s357 + $0x50] sm:$0xff]
        %v434 = vld [vmem:[%s357 + $0x58] sm:$0xff]
        %v435 = vld [vmem:[%s357 + $0x60] sm:$0xff]
        %v436 = vld [vmem:[%s357 + $0x68] sm:$0xff]
        %v437 = vld [vmem:[%s357 + $0x70] sm:$0xff]
        %v438 = vld [vmem:[%s357 + $0x78] sm:$0xff]
        %v439 = vld [vmem:[%s357 + $0x80] sm:$0xff]
        %v440 = vld [vmem:[%s357 + $0x88] sm:$0xff]
        %v441 = vld [vmem:[%s357 + $0x90] sm:$0xff]
        %v442 = vld [vmem:[%s357 + $0x98] sm:$0xff]
        %v443 = vld [vmem:[%s357 + $0xa0] sm:$0xff]
        %v444 = vld [vmem:[%s357 + $0xa8] sm:$0xff]
        %v445 = vld [vmem:[%s357 + $0xb0] sm:$0xff]
        %v446 = vld [vmem:[%s357 + $0xb8] sm:$0xff]
        %v447 = vld [vmem:[%s357 + $0xc0] sm:$0xff]
        %v448 = vld [vmem:[%s357 + $0xc8] sm:$0xff]
        %v449 = vld [vmem:[%s357 + $0xd0] sm:$0xff]
        %v450 = vld [vmem:[%s357 + $0xd8] sm:$0xff]
        %v451 = vld [vmem:[%s357 + $0xe0] sm:$0xff]
        %v452 = vld [vmem:[%s357 + $0xe8] sm:$0xff]
        %v453 = vld [vmem:[%s357 + $0xf0] sm:$0xff]
        %v454 = vld [vmem:[%s357 + $0xf8] sm:$0xff]
        %v455 = vld [vmem:[%s1] sm:$0xff]
        %v456 = vld [vmem:[%s1 + $0x8] sm:$0xff]
        %v457 = vld [vmem:[%s1 + $0x10] sm:$0xff]
        %v458 = vld [vmem:[%s1 + $0x18] sm:$0xff]
        %v459 = vld [vmem:[%s1 + $0x20] sm:$0xff]
        %v460 = vld [vmem:[%s1 + $0x28] sm:$0xff]
        %v461 = vld [vmem:[%s1 + $0x30] sm:$0xff]
        %v462 = vld [vmem:[%s1 + $0x38] sm:$0xff]
        %v463 = vld [vmem:[%s1 + $0x40] sm:$0xff]
        %v464 = vld [vmem:[%s1 + $0x48] sm:$0xff]
        %v465 = vld [vmem:[%s1 + $0x50] sm:$0xff]
        %v466 = vld [vmem:[%s1 + $0x58] sm:$0xff]
        %v467 = vld [vmem:[%s1 + $0x60] sm:$0xff]
        %v468 = vld [vmem:[%s1 + $0x68] sm:$0xff]
        %v469 = vld [vmem:[%s1 + $0x70] sm:$0xff]
        %v470 = vld [vmem:[%s1 + $0x78] sm:$0xff]
        %v471 = vld [vmem:[%s4] sm:$0xff]
        %v472 = vld [vmem:[%s4 + $0x8] sm:$0xff]
        %v473 = vld [vmem:[%s4 + $0x10] sm:$0xff]
        %v474 = vld [vmem:[%s4 + $0x18] sm:$0xff]
        %v475 = vld [vmem:[%s4 + $0x20] sm:$0xff]
        %v476 = vld [vmem:[%s4 + $0x28] sm:$0xff]
        %v477 = vld [vmem:[%s4 + $0x30] sm:$0xff]
        %v478 = vld [vmem:[%s4 + $0x38] sm:$0xff]
        %v479 = vld [vmem:[%s4 + $0x40] sm:$0xff]
        %v480 = vld [vmem:[%s4 + $0x48] sm:$0xff]
        %v481 = vld [vmem:[%s4 + $0x50] sm:$0xff]
        %v482 = vld [vmem:[%s4 + $0x58] sm:$0xff]
        %v483 = vld [vmem:[%s4 + $0x60] sm:$0xff]
        %v484 = vld [vmem:[%s4 + $0x68] sm:$0xff]
        %v485 = vld [vmem:[%s4 + $0x70] sm:$0xff]
        %v486 = vld [vmem:[%s4 + $0x78] sm:$0xff]
        %488 = vset.pattern.permute.xlu0 0
        %489 = vperm.xlu0 %488, %v471
        %v490 = vpop.permute.xlu0 %489
        %493 = vset.pattern.permute.xlu0 0
        %494 = vperm.xlu0 %493, %v472
        %v495 = vpop.permute.xlu0 %494
        %498 = vset.pattern.permute.xlu0 0
        %499 = vperm.xlu0 %498, %v473
        %v500 = vpop.permute.xlu0 %499
        %503 = vset.pattern.permute.xlu0 0
        %504 = vperm.xlu0 %503, %v474
        %v505 = vpop.permute.xlu0 %504
        %508 = vset.pattern.permute.xlu0 0
        %509 = vperm.xlu0 %508, %v475
        %v510 = vpop.permute.xlu0 %509
        %513 = vset.pattern.permute.xlu0 0
        %514 = vperm.xlu0 %513, %v476
        %v515 = vpop.permute.xlu0 %514
        %518 = vset.pattern.permute.xlu0 0
        %519 = vperm.xlu0 %518, %v477
        %v520 = vpop.permute.xlu0 %519
        %523 = vset.pattern.permute.xlu0 0
        %524 = vperm.xlu0 %523, %v478
        %v525 = vpop.permute.xlu0 %524
        %528 = vset.pattern.permute.xlu0 0
        %529 = vperm.xlu0 %528, %v479
        %v530 = vpop.permute.xlu0 %529
        %533 = vset.pattern.permute.xlu0 0
        %534 = vperm.xlu0 %533, %v480
        %v535 = vpop.permute.xlu0 %534
        %538 = vset.pattern.permute.xlu0 0
        %539 = vperm.xlu0 %538, %v481
        %v540 = vpop.permute.xlu0 %539
        %543 = vset.pattern.permute.xlu0 0
        %544 = vperm.xlu0 %543, %v482
        %v545 = vpop.permute.xlu0 %544
        %548 = vset.pattern.permute.xlu0 0
        %549 = vperm.xlu0 %548, %v483
        %v550 = vpop.permute.xlu0 %549
        %553 = vset.pattern.permute.xlu0 0
        %554 = vperm.xlu0 %553, %v484
        %v555 = vpop.permute.xlu0 %554
        %558 = vset.pattern.permute.xlu0 0
        %559 = vperm.xlu0 %558, %v485
        %v560 = vpop.permute.xlu0 %559
        %563 = vset.pattern.permute.xlu0 0
        %564 = vperm.xlu0 %563, %v486
        %v565 = vpop.permute.xlu0 %564
        %567 = vmatprep.subr.mxu0 0.0
        %568 = vmatpush1.xpose.msra.mxu0 %v423
        %569 = vmatprep.subr.mxu0 0.0
        %570 = vmatpush1.xpose.msra.mxu0 %v424
        %571 = vmatprep.subr.mxu0 0.0
        %572 = vmatpush1.xpose.msra.mxu0 %v425
        %573 = vmatprep.subr.mxu0 0.0
        %574 = vmatpush1.xpose.msra.mxu0 %v426
        %575 = vmatprep.subr.mxu0 0.0
        %576 = vmatpush1.xpose.msra.mxu0 %v427
        %577 = vmatprep.subr.mxu0 0.0
        %578 = vmatpush1.xpose.msra.mxu0 %v428
        %579 = vmatprep.subr.mxu0 0.0
        %580 = vmatpush1.xpose.msra.mxu0 %v429
        %581 = vmatprep.subr.mxu0 0.0
        %582 = vmatpush1.xpose.msra.mxu0 %v430
        %583 = vmatprep.subr.mxu0 0.0
        %584 = vmatpush1.xpose.msra.mxu0 %v431
        %585 = vmatprep.subr.mxu0 0.0
        %586 = vmatpush1.xpose.msra.mxu0 %v432
        %587 = vmatprep.subr.mxu0 0.0
        %588 = vmatpush1.xpose.msra.mxu0 %v433
        %589 = vmatprep.subr.mxu0 0.0
        %590 = vmatpush1.xpose.msra.mxu0 %v434
        %591 = vmatprep.subr.mxu0 0.0
        %592 = vmatpush1.xpose.msra.mxu0 %v435
        %593 = vmatprep.subr.mxu0 0.0
        %594 = vmatpush1.xpose.msra.mxu0 %v436
        %595 = vmatprep.subr.mxu0 0.0
        %596 = vmatpush1.xpose.msra.mxu0 %v437
        %597 = vmatprep.subr.mxu0 0.0
        %598 = vmatpush1.xpose.msra.mxu0 %v438
        %599 = vmatprep.subr.mxu0 0.0
        %600 = vmatpush1.xpose.msra.mxu0 %v439
        %601 = vmatprep.subr.mxu0 0.0
        %602 = vmatpush1.xpose.msra.mxu0 %v440
        %603 = vmatprep.subr.mxu0 0.0
        %604 = vmatpush1.xpose.msra.mxu0 %v441
        %605 = vmatprep.subr.mxu0 0.0
        %606 = vmatpush1.xpose.msra.mxu0 %v442
        %607 = vmatprep.subr.mxu0 0.0
        %608 = vmatpush1.xpose.msra.mxu0 %v443
        %609 = vmatprep.subr.mxu0 0.0
        %610 = vmatpush1.xpose.msra.mxu0 %v444
        %611 = vmatprep.subr.mxu0 0.0
        %612 = vmatpush1.xpose.msra.mxu0 %v445
        %613 = vmatprep.subr.mxu0 0.0
        %614 = vmatpush1.xpose.msra.mxu0 %v446
        %615 = vmatprep.subr.mxu0 0.0
        %616 = vmatpush1.xpose.msra.mxu0 %v447
        %617 = vmatprep.subr.mxu0 0.0
        %618 = vmatpush1.xpose.msra.mxu0 %v448
        %619 = vmatprep.subr.mxu0 0.0
        %620 = vmatpush1.xpose.msra.mxu0 %v449
        %621 = vmatprep.subr.mxu0 0.0
        %622 = vmatpush1.xpose.msra.mxu0 %v450
        %623 = vmatprep.subr.mxu0 0.0
        %624 = vmatpush1.xpose.msra.mxu0 %v451
        %625 = vmatprep.subr.mxu0 0.0
        %626 = vmatpush1.xpose.msra.mxu0 %v452
        %627 = vmatprep.subr.mxu0 0.0
        %628 = vmatpush1.xpose.msra.mxu0 %v453
        %629 = vmatprep.subr.mxu0 0.0
        %630 = vmatpush1.xpose.msra.mxu0 %v454
        %631 = vmatprep.mubr.f32.mxu0 0.0
        %632 = vmatmul.mubr.f32.gmra.mrb[0].mxu0 %v455
        %v633 = vpop.f32.mrb[0].mxu0
        %v634 = vadd.f32 %v490, %v633
        %v635 = vpop.f32.mrb[0].mxu0
        %v636 = vadd.f32 %v490, %v635
        %637 = vmatprep.mubr.f32.mxu0 0.0
        %638 = vmatmul.mubr.f32.gmra.mrb[0].mxu0 %v456
        %v639 = vpop.f32.mrb[0].mxu0
        %v640 = vadd.f32 %v495, %v639
        %v641 = vpop.f32.mrb[0].mxu0
        %v642 = vadd.f32 %v495, %v641
        %643 = vmatprep.mubr.f32.mxu0 0.0
        %644 = vmatmul.mubr.f32.gmra.mrb[0].mxu0 %v457
        %v645 = vpop.f32.mrb[0].mxu0
        %v646 = vadd.f32 %v500, %v645
        %v647 = vpop.f32.mrb[0].mxu0
        %v648 = vadd.f32 %v500, %v647
        %649 = vmatprep.mubr.f32.mxu0 0.0
        %650 = vmatmul.mubr.f32.gmra.mrb[0].mxu0 %v458
        %v651 = vpop.f32.mrb[0].mxu0
        %v652 = vadd.f32 %v505, %v651
        %v653 = vpop.f32.mrb[0].mxu0
        %v654 = vadd.f32 %v505, %v653
        %655 = vmatprep.mubr.f32.mxu0 0.0
        %656 = vmatmul.mubr.f32.gmra.mrb[0].mxu0 %v459
        %v657 = vpop.f32.mrb[0].mxu0
        %v658 = vadd.f32 %v510, %v657
        %v659 = vpop.f32.mrb[0].mxu0
        %v660 = vadd.f32 %v510, %v659
        %661 = vmatprep.mubr.f32.mxu0 0.0
        %662 = vmatmul.mubr.f32.gmra.mrb[0].mxu0 %v460
        %v663 = vpop.f32.mrb[0].mxu0
        %v664 = vadd.f32 %v515, %v663
        %v665 = vpop.f32.mrb[0].mxu0
        %v666 = vadd.f32 %v515, %v665
        %667 = vmatprep.mubr.f32.mxu0 0.0
        %668 = vmatmul.mubr.f32.gmra.mrb[0].mxu0 %v461
        %v669 = vpop.f32.mrb[0].mxu0
        %v670 = vadd.f32 %v520, %v669
        %v671 = vpop.f32.mrb[0].mxu0
        %v672 = vadd.f32 %v520, %v671
        %673 = vmatprep.mubr.f32.mxu0 0.0
        %674 = vmatmul.mubr.f32.gmra.mrb[0].mxu0 %v462
        %v675 = vpop.f32.mrb[0].mxu0
        %v676 = vadd.f32 %v525, %v675
        %v677 = vpop.f32.mrb[0].mxu0
        %v678 = vadd.f32 %v525, %v677
        %679 = vmatprep.mubr.f32.mxu0 0.0
        %680 = vmatmul.mubr.f32.gmra.mrb[0].mxu0 %v463
        %v681 = vpop.f32.mrb[0].mxu0
        %v682 = vadd.f32 %v530, %v681
        %v683 = vpop.f32.mrb[0].mxu0
        %v684 = vadd.f32 %v530, %v683
        %685 = vmatprep.mubr.f32.mxu0 0.0
        %686 = vmatmul.mubr.f32.gmra.mrb[0].mxu0 %v464
        %v687 = vpop.f32.mrb[0].mxu0
        %v688 = vadd.f32 %v535, %v687
        %v689 = vpop.f32.mrb[0].mxu0
        %v690 = vadd.f32 %v535, %v689
        %691 = vmatprep.mubr.f32.mxu0 0.0
        %692 = vmatmul.mubr.f32.gmra.mrb[0].mxu0 %v465
        %v693 = vpop.f32.mrb[0].mxu0
        %v694 = vadd.f32 %v540, %v693
        %v695 = vpop.f32.mrb[0].mxu0
        %v696 = vadd.f32 %v540, %v695
        %697 = vmatprep.mubr.f32.mxu0 0.0
        %698 = vmatmul.mubr.f32.gmra.mrb[0].mxu0 %v466
        %v699 = vpop.f32.mrb[0].mxu0
        %v700 = vadd.f32 %v545, %v699
        %v701 = vpop.f32.mrb[0].mxu0
        %v702 = vadd.f32 %v545, %v701
        %703 = vmatprep.mubr.f32.mxu0 0.0
        %704 = vmatmul.mubr.f32.gmra.mrb[0].mxu0 %v467
        %v705 = vpop.f32.mrb[0].mxu0
        %v706 = vadd.f32 %v550, %v705
        %v707 = vpop.f32.mrb[0].mxu0
        %v708 = vadd.f32 %v550, %v707
        %709 = vmatprep.mubr.f32.mxu0 0.0
        %710 = vmatmul.mubr.f32.gmra.mrb[0].mxu0 %v468
        %v711 = vpop.f32.mrb[0].mxu0
        %v712 = vadd.f32 %v555, %v711
        %v713 = vpop.f32.mrb[0].mxu0
        %v714 = vadd.f32 %v555, %v713
        %715 = vmatprep.mubr.f32.mxu0 0.0
        %716 = vmatmul.mubr.f32.gmra.mrb[0].mxu0 %v469
        %v717 = vpop.f32.mrb[0].mxu0
        %v718 = vadd.f32 %v560, %v717
        %v719 = vpop.f32.mrb[0].mxu0
        %v720 = vadd.f32 %v560, %v719
        %721 = vmatprep.mubr.f32.mxu0 0.0
        %722 = vmatmul.mubr.f32.gmra.mrb[0].mxu0 %v470
        %v723 = vpop.f32.mrb[0].mxu0
        %v724 = vadd.f32 %v565, %v723
        %v725 = vpop.f32.mrb[0].mxu0
        %v726 = vadd.f32 %v565, %v725
        %727 = vdwg.mxu0
        %728 = vst [vmem:[%s391] sm:$0xff] %v634
        %729 = vst [vmem:[%s391 + $0x8] sm:$0xff] %v636
        %730 = vst [vmem:[%s391 + $0x10] sm:$0xff] %v640
        %731 = vst [vmem:[%s391 + $0x18] sm:$0xff] %v642
        %732 = vst [vmem:[%s391 + $0x20] sm:$0xff] %v646
        %733 = vst [vmem:[%s391 + $0x28] sm:$0xff] %v648
        %734 = vst [vmem:[%s391 + $0x30] sm:$0xff] %v652
        %735 = vst [vmem:[%s391 + $0x38] sm:$0xff] %v654
        %736 = vst [vmem:[%s391 + $0x40] sm:$0xff] %v658
        %737 = vst [vmem:[%s391 + $0x48] sm:$0xff] %v660
        %738 = vst [vmem:[%s391 + $0x50] sm:$0xff] %v664
        %739 = vst [vmem:[%s391 + $0x58] sm:$0xff] %v666
        %740 = vst [vmem:[%s391 + $0x60] sm:$0xff] %v670
        %741 = vst [vmem:[%s391 + $0x68] sm:$0xff] %v672
        %742 = vst [vmem:[%s391 + $0x70] sm:$0xff] %v676
        %743 = vst [vmem:[%s391 + $0x78] sm:$0xff] %v678
        %744 = vst [vmem:[%s391 + $0x80] sm:$0xff] %v682
        %745 = vst [vmem:[%s391 + $0x88] sm:$0xff] %v684
        %746 = vst [vmem:[%s391 + $0x90] sm:$0xff] %v688
        %747 = vst [vmem:[%s391 + $0x98] sm:$0xff] %v690
        %748 = vst [vmem:[%s391 + $0xa0] sm:$0xff] %v694
        %749 = vst [vmem:[%s391 + $0xa8] sm:$0xff] %v696
        %750 = vst [vmem:[%s391 + $0xb0] sm:$0xff] %v700
        %751 = vst [vmem:[%s391 + $0xb8] sm:$0xff] %v702
        %752 = vst [vmem:[%s391 + $0xc0] sm:$0xff] %v706
        %753 = vst [vmem:[%s391 + $0xc8] sm:$0xff] %v708
        %754 = vst [vmem:[%s391 + $0xd0] sm:$0xff] %v712
        %755 = vst [vmem:[%s391 + $0xd8] sm:$0xff] %v714
        %756 = vst [vmem:[%s391 + $0xe0] sm:$0xff] %v718
        %757 = vst [vmem:[%s391 + $0xe8] sm:$0xff] %v720
        %758 = vst [vmem:[%s391 + $0xf0] sm:$0xff] %v724
        %759 = vst [vmem:[%s391 + $0xf8] sm:$0xff] %v726
        %v760 = vld [vmem:[#allocation5] sm:$0xff]
        %v761 = vld [vmem:[#allocation5 + $0x8] sm:$0xff]
        %v762 = vld [vmem:[#allocation5 + $0x10] sm:$0xff]
        %v763 = vld [vmem:[#allocation5 + $0x18] sm:$0xff]
        %v764 = vld [vmem:[#allocation5 + $0x20] sm:$0xff]
        %v765 = vld [vmem:[#allocation5 + $0x28] sm:$0xff]
        %v766 = vld [vmem:[#allocation5 + $0x30] sm:$0xff]
        %v767 = vld [vmem:[#allocation5 + $0x38] sm:$0xff]
        %v768 = vld [vmem:[#allocation5 + $0x40] sm:$0xff]
        %v769 = vld [vmem:[#allocation5 + $0x48] sm:$0xff]
        %v770 = vld [vmem:[#allocation5 + $0x50] sm:$0xff]
        %v771 = vld [vmem:[#allocation5 + $0x58] sm:$0xff]
        %v772 = vld [vmem:[#allocation5 + $0x60] sm:$0xff]
        %v773 = vld [vmem:[#allocation5 + $0x68] sm:$0xff]
        %v774 = vld [vmem:[#allocation5 + $0x70] sm:$0xff]
        %v775 = vld [vmem:[#allocation5 + $0x78] sm:$0xff]
        %v776 = vld [vmem:[%s6] sm:$0xff]
        %v777 = vld [vmem:[%s6 + $0x8] sm:$0xff]
        %v778 = vld [vmem:[%s6 + $0x10] sm:$0xff]
        %v779 = vld [vmem:[%s6 + $0x18] sm:$0xff]
        %v780 = vld [vmem:[%s6 + $0x20] sm:$0xff]
        %v781 = vld [vmem:[%s6 + $0x28] sm:$0xff]
        %v782 = vld [vmem:[%s6 + $0x30] sm:$0xff]
        %v783 = vld [vmem:[%s6 + $0x38] sm:$0xff]
        %v784 = vld [vmem:[%s6 + $0x40] sm:$0xff]
        %v785 = vld [vmem:[%s6 + $0x48] sm:$0xff]
        %v786 = vld [vmem:[%s6 + $0x50] sm:$0xff]
        %v787 = vld [vmem:[%s6 + $0x58] sm:$0xff]
        %v788 = vld [vmem:[%s6 + $0x60] sm:$0xff]
        %v789 = vld [vmem:[%s6 + $0x68] sm:$0xff]
        %v790 = vld [vmem:[%s6 + $0x70] sm:$0xff]
        %v791 = vld [vmem:[%s6 + $0x78] sm:$0xff]
        %793 = vset.pattern.permute.xlu0 0
        %794 = vperm.xlu0 %793, %v776
        %v795 = vpop.permute.xlu0 %794
        %798 = vset.pattern.permute.xlu0 0
        %799 = vperm.xlu0 %798, %v777
        %v800 = vpop.permute.xlu0 %799
        %803 = vset.pattern.permute.xlu0 0
        %804 = vperm.xlu0 %803, %v778
        %v805 = vpop.permute.xlu0 %804
        %808 = vset.pattern.permute.xlu0 0
        %809 = vperm.xlu0 %808, %v779
        %v810 = vpop.permute.xlu0 %809
        %813 = vset.pattern.permute.xlu0 0
        %814 = vperm.xlu0 %813, %v780
        %v815 = vpop.permute.xlu0 %814
        %818 = vset.pattern.permute.xlu0 0
        %819 = vperm.xlu0 %818, %v781
        %v820 = vpop.permute.xlu0 %819
        %823 = vset.pattern.permute.xlu0 0
        %824 = vperm.xlu0 %823, %v782
        %v825 = vpop.permute.xlu0 %824
        %828 = vset.pattern.permute.xlu0 0
        %829 = vperm.xlu0 %828, %v783
        %v830 = vpop.permute.xlu0 %829
        %833 = vset.pattern.permute.xlu0 0
        %834 = vperm.xlu0 %833, %v784
        %v835 = vpop.permute.xlu0 %834
        %838 = vset.pattern.permute.xlu0 0
        %839 = vperm.xlu0 %838, %v785
        %v840 = vpop.permute.xlu0 %839
        %843 = vset.pattern.permute.xlu0 0
        %844 = vperm.xlu0 %843, %v786
        %v845 = vpop.permute.xlu0 %844
        %848 = vset.pattern.permute.xlu0 0
        %849 = vperm.xlu0 %848, %v787
        %v850 = vpop.permute.xlu0 %849
        %853 = vset.pattern.permute.xlu0 0
        %854 = vperm.xlu0 %853, %v788
        %v855 = vpop.permute.xlu0 %854
        %858 = vset.pattern.permute.xlu0 0
        %859 = vperm.xlu0 %858, %v789
        %v860 = vpop.permute.xlu0 %859
        %863 = vset.pattern.permute.xlu0 0
        %864 = vperm.xlu0 %863, %v790
        %v865 = vpop.permute.xlu0 %864
        %868 = vset.pattern.permute.xlu0 0
        %869 = vperm.xlu0 %868, %v791
        %v870 = vpop.permute.xlu0 %869
        %872 = vmatprep.subr.mxu0 0.0
        %873 = vmatpush1.xpose.msra.mxu0 %v423
        %874 = vmatprep.subr.mxu0 0.0
        %875 = vmatpush1.xpose.msra.mxu0 %v424
        %876 = vmatprep.subr.mxu0 0.0
        %877 = vmatpush1.xpose.msra.mxu0 %v425
        %878 = vmatprep.subr.mxu0 0.0
        %879 = vmatpush1.xpose.msra.mxu0 %v426
        %880 = vmatprep.subr.mxu0 0.0
        %881 = vmatpush1.xpose.msra.mxu0 %v427
        %882 = vmatprep.subr.mxu0 0.0
        %883 = vmatpush1.xpose.msra.mxu0 %v428
        %884 = vmatprep.subr.mxu0 0.0
        %885 = vmatpush1.xpose.msra.mxu0 %v429
        %886 = vmatprep.subr.mxu0 0.0
        %887 = vmatpush1.xpose.msra.mxu0 %v430
        %888 = vmatprep.subr.mxu0 0.0
        %889 = vmatpush1.xpose.msra.mxu0 %v431
        %890 = vmatprep.subr.mxu0 0.0
        %891 = vmatpush1.xpose.msra.mxu0 %v432
        %892 = vmatprep.subr.mxu0 0.0
        %893 = vmatpush1.xpose.msra.mxu0 %v433
        %894 = vmatprep.subr.mxu0 0.0
        %895 = vmatpush1.xpose.msra.mxu0 %v434
        %896 = vmatprep.subr.mxu0 0.0
        %897 = vmatpush1.xpose.msra.mxu0 %v435
        %898 = vmatprep.subr.mxu0 0.0
        %899 = vmatpush1.xpose.msra.mxu0 %v436
        %900 = vmatprep.subr.mxu0 0.0
        %901 = vmatpush1.xpose.msra.mxu0 %v437
        %902 = vmatprep.subr.mxu0 0.0
        %903 = vmatpush1.xpose.msra.mxu0 %v438
        %904 = vmatprep.subr.mxu0 0.0
        %905 = vmatpush1.xpose.msra.mxu0 %v439
        %906 = vmatprep.subr.mxu0 0.0
        %907 = vmatpush1.xpose.msra.mxu0 %v440
        %908 = vmatprep.subr.mxu0 0.0
        %909 = vmatpush1.xpose.msra.mxu0 %v441
        %910 = vmatprep.subr.mxu0 0.0
        %911 = vmatpush1.xpose.msra.mxu0 %v442
        %912 = vmatprep.subr.mxu0 0.0
        %913 = vmatpush1.xpose.msra.mxu0 %v443
        %914 = vmatprep.subr.mxu0 0.0
        %915 = vmatpush1.xpose.msra.mxu0 %v444
        %916 = vmatprep.subr.mxu0 0.0
        %917 = vmatpush1.xpose.msra.mxu0 %v445
        %918 = vmatprep.subr.mxu0 0.0
        %919 = vmatpush1.xpose.msra.mxu0 %v446
        %920 = vmatprep.subr.mxu0 0.0
        %921 = vmatpush1.xpose.msra.mxu0 %v447
        %922 = vmatprep.subr.mxu0 0.0
        %923 = vmatpush1.xpose.msra.mxu0 %v448
        %924 = vmatprep.subr.mxu0 0.0
        %925 = vmatpush1.xpose.msra.mxu0 %v449
        %926 = vmatprep.subr.mxu0 0.0
        %927 = vmatpush1.xpose.msra.mxu0 %v450
        %928 = vmatprep.subr.mxu0 0.0
        %929 = vmatpush1.xpose.msra.mxu0 %v451
        %930 = vmatprep.subr.mxu0 0.0
        %931 = vmatpush1.xpose.msra.mxu0 %v452
        %932 = vmatprep.subr.mxu0 0.0
        %933 = vmatpush1.xpose.msra.mxu0 %v453
        %934 = vmatprep.subr.mxu0 0.0
        %935 = vmatpush1.xpose.msra.mxu0 %v454
        %936 = vmatprep.mubr.f32.mxu0 0.0
        %937 = vmatmul.mubr.f32.gmra.mrb[0].mxu0 %v760
        %v938 = vpop.f32.mrb[0].mxu0
        %v939 = vadd.f32 %v795, %v938
        %v940 = vpop.f32.mrb[0].mxu0
        %v941 = vadd.f32 %v795, %v940
        %942 = vmatprep.mubr.f32.mxu0 0.0
        %943 = vmatmul.mubr.f32.gmra.mrb[0].mxu0 %v761
        %v944 = vpop.f32.mrb[0].mxu0
        %v945 = vadd.f32 %v800, %v944
        %v946 = vpop.f32.mrb[0].mxu0
        %v947 = vadd.f32 %v800, %v946
        %948 = vmatprep.mubr.f32.mxu0 0.0
        %949 = vmatmul.mubr.f32.gmra.mrb[0].mxu0 %v762
        %v950 = vpop.f32.mrb[0].mxu0
        %v951 = vadd.f32 %v805, %v950
        %v952 = vpop.f32.mrb[0].mxu0
        %v953 = vadd.f32 %v805, %v952
        %954 = vmatprep.mubr.f32.mxu0 0.0
        %955 = vmatmul.mubr.f32.gmra.mrb[0].mxu0 %v763
        %v956 = vpop.f32.mrb[0].mxu0
        %v957 = vadd.f32 %v810, %v956
        %v958 = vpop.f32.mrb[0].mxu0
        %v959 = vadd.f32 %v810, %v958
        %960 = vmatprep.mubr.f32.mxu0 0.0
        %961 = vmatmul.mubr.f32.gmra.mrb[0].mxu0 %v764
        %v962 = vpop.f32.mrb[0].mxu0
        %v963 = vadd.f32 %v815, %v962
        %v964 = vpop.f32.mrb[0].mxu0
        %v965 = vadd.f32 %v815, %v964
        %966 = vmatprep.mubr.f32.mxu0 0.0
        %967 = vmatmul.mubr.f32.gmra.mrb[0].mxu0 %v765
        %v968 = vpop.f32.mrb[0].mxu0
        %v969 = vadd.f32 %v820, %v968
        %v970 = vpop.f32.mrb[0].mxu0
        %v971 = vadd.f32 %v820, %v970
        %972 = vmatprep.mubr.f32.mxu0 0.0
        %973 = vmatmul.mubr.f32.gmra.mrb[0].mxu0 %v766
        %v974 = vpop.f32.mrb[0].mxu0
        %v975 = vadd.f32 %v825, %v974
        %v976 = vpop.f32.mrb[0].mxu0
        %v977 = vadd.f32 %v825, %v976
        %978 = vmatprep.mubr.f32.mxu0 0.0
        %979 = vmatmul.mubr.f32.gmra.mrb[0].mxu0 %v767
        %v980 = vpop.f32.mrb[0].mxu0
        %v981 = vadd.f32 %v830, %v980
        %v982 = vpop.f32.mrb[0].mxu0
        %v983 = vadd.f32 %v830, %v982
        %984 = vmatprep.mubr.f32.mxu0 0.0
        %985 = vmatmul.mubr.f32.gmra.mrb[0].mxu0 %v768
        %v986 = vpop.f32.mrb[0].mxu0
        %v987 = vadd.f32 %v835, %v986
        %v988 = vpop.f32.mrb[0].mxu0
        %v989 = vadd.f32 %v835, %v988
        %990 = vmatprep.mubr.f32.mxu0 0.0
        %991 = vmatmul.mubr.f32.gmra.mrb[0].mxu0 %v769
        %v992 = vpop.f32.mrb[0].mxu0
        %v993 = vadd.f32 %v840, %v992
        %v994 = vpop.f32.mrb[0].mxu0
        %v995 = vadd.f32 %v840, %v994
        %996 = vmatprep.mubr.f32.mxu0 0.0
        %997 = vmatmul.mubr.f32.gmra.mrb[0].mxu0 %v770
        %v998 = vpop.f32.mrb[0].mxu0
        %v999 = vadd.f32 %v845, %v998
        %v1000 = vpop.f32.mrb[0].mxu0
        %v1001 = vadd.f32 %v845, %v1000
        %1002 = vmatprep.mubr.f32.mxu0 0.0
        %1003 = vmatmul.mubr.f32.gmra.mrb[0].mxu0 %v771
        %v1004 = vpop.f32.mrb[0].mxu0
        %v1005 = vadd.f32 %v850, %v1004
        %v1006 = vpop.f32.mrb[0].mxu0
        %v1007 = vadd.f32 %v850, %v1006
        %1008 = vmatprep.mubr.f32.mxu0 0.0
        %1009 = vmatmul.mubr.f32.gmra.mrb[0].mxu0 %v772
        %v1010 = vpop.f32.mrb[0].mxu0
        %v1011 = vadd.f32 %v855, %v1010
        %v1012 = vpop.f32.mrb[0].mxu0
        %v1013 = vadd.f32 %v855, %v1012
        %1014 = vmatprep.mubr.f32.mxu0 0.0
        %1015 = vmatmul.mubr.f32.gmra.mrb[0].mxu0 %v773
        %v1016 = vpop.f32.mrb[0].mxu0
        %v1017 = vadd.f32 %v860, %v1016
        %v1018 = vpop.f32.mrb[0].mxu0
        %v1019 = vadd.f32 %v860, %v1018
        %1020 = vmatprep.mubr.f32.mxu0 0.0
        %1021 = vmatmul.mubr.f32.gmra.mrb[0].mxu0 %v774
        %v1022 = vpop.f32.mrb[0].mxu0
        %v1023 = vadd.f32 %v865, %v1022
        %v1024 = vpop.f32.mrb[0].mxu0
        %v1025 = vadd.f32 %v865, %v1024
        %1026 = vmatprep.mubr.f32.mxu0 0.0
        %1027 = vmatmul.mubr.f32.gmra.mrb[0].mxu0 %v775
        %v1028 = vpop.f32.mrb[0].mxu0
        %v1029 = vadd.f32 %v870, %v1028
        %v1030 = vpop.f32.mrb[0].mxu0
        %v1031 = vadd.f32 %v870, %v1030
        %1032 = vdwg.mxu0
        %1033 = vst [vmem:[%s409] sm:$0xff] %v939
        %1034 = vst [vmem:[%s409 + $0x8] sm:$0xff] %v941
        %1035 = vst [vmem:[%s409 + $0x10] sm:$0xff] %v945
        %1036 = vst [vmem:[%s409 + $0x18] sm:$0xff] %v947
        %1037 = vst [vmem:[%s409 + $0x20] sm:$0xff] %v951
        %1038 = vst [vmem:[%s409 + $0x28] sm:$0xff] %v953
        %1039 = vst [vmem:[%s409 + $0x30] sm:$0xff] %v957
        %1040 = vst [vmem:[%s409 + $0x38] sm:$0xff] %v959
        %1041 = vst [vmem:[%s409 + $0x40] sm:$0xff] %v963
        %1042 = vst [vmem:[%s409 + $0x48] sm:$0xff] %v965
        %1043 = vst [vmem:[%s409 + $0x50] sm:$0xff] %v969
        %1044 = vst [vmem:[%s409 + $0x58] sm:$0xff] %v971
        %1045 = vst [vmem:[%s409 + $0x60] sm:$0xff] %v975
        %1046 = vst [vmem:[%s409 + $0x68] sm:$0xff] %v977
        %1047 = vst [vmem:[%s409 + $0x70] sm:$0xff] %v981
        %1048 = vst [vmem:[%s409 + $0x78] sm:$0xff] %v983
        %1049 = vst [vmem:[%s409 + $0x80] sm:$0xff] %v987
        %1050 = vst [vmem:[%s409 + $0x88] sm:$0xff] %v989
        %1051 = vst [vmem:[%s409 + $0x90] sm:$0xff] %v993
        %1052 = vst [vmem:[%s409 + $0x98] sm:$0xff] %v995
        %1053 = vst [vmem:[%s409 + $0xa0] sm:$0xff] %v999
        %1054 = vst [vmem:[%s409 + $0xa8] sm:$0xff] %v1001
        %1055 = vst [vmem:[%s409 + $0xb0] sm:$0xff] %v1005
        %1056 = vst [vmem:[%s409 + $0xb8] sm:$0xff] %v1007
        %1057 = vst [vmem:[%s409 + $0xc0] sm:$0xff] %v1011
        %1058 = vst [vmem:[%s409 + $0xc8] sm:$0xff] %v1013
        %1059 = vst [vmem:[%s409 + $0xd0] sm:$0xff] %v1017
        %1060 = vst [vmem:[%s409 + $0xd8] sm:$0xff] %v1019
        %1061 = vst [vmem:[%s409 + $0xe0] sm:$0xff] %v1023
        %1062 = vst [vmem:[%s409 + $0xe8] sm:$0xff] %v1025
        %1063 = vst [vmem:[%s409 + $0xf0] sm:$0xff] %v1029
        %1064 = vst [vmem:[%s409 + $0xf8] sm:$0xff] %v1031
        %v1065 = vld [vmem:[%s2] sm:$0xff]
        %v1066 = vld [vmem:[%s2 + $0x8] sm:$0xff]
        %v1067 = vld [vmem:[%s2 + $0x10] sm:$0xff]
        %v1068 = vld [vmem:[%s2 + $0x18] sm:$0xff]
        %v1069 = vld [vmem:[%s2 + $0x20] sm:$0xff]
        %v1070 = vld [vmem:[%s2 + $0x28] sm:$0xff]
        %v1071 = vld [vmem:[%s2 + $0x30] sm:$0xff]
        %v1072 = vld [vmem:[%s2 + $0x38] sm:$0xff]
        %v1073 = vld [vmem:[%s2 + $0x40] sm:$0xff]
        %v1074 = vld [vmem:[%s2 + $0x48] sm:$0xff]
        %v1075 = vld [vmem:[%s2 + $0x50] sm:$0xff]
        %v1076 = vld [vmem:[%s2 + $0x58] sm:$0xff]
        %v1077 = vld [vmem:[%s2 + $0x60] sm:$0xff]
        %v1078 = vld [vmem:[%s2 + $0x68] sm:$0xff]
        %v1079 = vld [vmem:[%s2 + $0x70] sm:$0xff]
        %v1080 = vld [vmem:[%s2 + $0x78] sm:$0xff]
        %v1081 = vld [vmem:[%s5] sm:$0x1]
        %v1083 = vlaneseq
        %v1084 = vshrl.u32 %v1083, 7
        %v1085 = vsub.s32 0, %v1084
        %v1086 = vrot.slane %v1081, %v1085
        %1088 = vmatprep.subr.mxu0 0.0
        %1089 = vmatpush1.msra.mxu0 %v1065
        %1090 = vmatprep.subr.mxu0 0.0
        %1091 = vmatpush1.msra.mxu0 %v1066
        %1092 = vmatprep.subr.mxu0 0.0
        %1093 = vmatpush1.msra.mxu0 %v1067
        %1094 = vmatprep.subr.mxu0 0.0
        %1095 = vmatpush1.msra.mxu0 %v1068
        %1096 = vmatprep.subr.mxu0 0.0
        %1097 = vmatpush1.msra.mxu0 %v1069
        %1098 = vmatprep.subr.mxu0 0.0
        %1099 = vmatpush1.msra.mxu0 %v1070
        %1100 = vmatprep.subr.mxu0 0.0
        %1101 = vmatpush1.msra.mxu0 %v1071
        %1102 = vmatprep.subr.mxu0 0.0
        %1103 = vmatpush1.msra.mxu0 %v1072
        %1104 = vmatprep.subr.mxu0 0.0
        %1105 = vmatpush1.msra.mxu0 %v1073
        %1106 = vmatprep.subr.mxu0 0.0
        %1107 = vmatpush1.msra.mxu0 %v1074
        %1108 = vmatprep.subr.mxu0 0.0
        %1109 = vmatpush1.msra.mxu0 %v1075
        %1110 = vmatprep.subr.mxu0 0.0
        %1111 = vmatpush1.msra.mxu0 %v1076
        %1112 = vmatprep.subr.mxu0 0.0
        %1113 = vmatpush1.msra.mxu0 %v1077
        %1114 = vmatprep.subr.mxu0 0.0
        %1115 = vmatpush1.msra.mxu0 %v1078
        %1116 = vmatprep.subr.mxu0 0.0
        %1117 = vmatpush1.msra.mxu0 %v1079
        %1118 = vmatprep.subr.mxu0 0.0
        %1119 = vmatpush1.msra.mxu0 %v1080
        %1120 = vmatprep.subr.mxu0 0.0
        %1121 = vmatpush1.msra.mxu0 0.0
        %1122 = vmatprep.subr.mxu0 0.0
        %1123 = vmatpush1.msra.mxu0 0.0
        %1124 = vmatprep.subr.mxu0 0.0
        %1125 = vmatpush1.msra.mxu0 0.0
        %1126 = vmatprep.subr.mxu0 0.0
        %1127 = vmatpush1.msra.mxu0 0.0
        %1128 = vmatprep.subr.mxu0 0.0
        %1129 = vmatpush1.msra.mxu0 0.0
        %1130 = vmatprep.subr.mxu0 0.0
        %1131 = vmatpush1.msra.mxu0 0.0
        %1132 = vmatprep.subr.mxu0 0.0
        %1133 = vmatpush1.msra.mxu0 0.0
        %1134 = vmatprep.subr.mxu0 0.0
        %1135 = vmatpush1.msra.mxu0 0.0
        %1136 = vmatprep.subr.mxu0 0.0
        %1137 = vmatpush1.msra.mxu0 0.0
        %1138 = vmatprep.subr.mxu0 0.0
        %1139 = vmatpush1.msra.mxu0 0.0
        %1140 = vmatprep.subr.mxu0 0.0
        %1141 = vmatpush1.msra.mxu0 0.0
        %1142 = vmatprep.subr.mxu0 0.0
        %1143 = vmatpush1.msra.mxu0 0.0
        %1144 = vmatprep.subr.mxu0 0.0
        %1145 = vmatpush1.msra.mxu0 0.0
        %1146 = vmatprep.subr.mxu0 0.0
        %1147 = vmatpush1.msra.mxu0 0.0
        %1148 = vmatprep.subr.mxu0 0.0
        %1149 = vmatpush1.msra.mxu0 0.0
        %1150 = vmatprep.subr.mxu0 0.0
        %1151 = vmatpush1.msra.mxu0 0.0
        %1152 = vmatprep.mubr.f32.mxu0 0.0
        %1153 = vmatmul.mubr.f32.gmra.mrb[0].mxu0 %v423
        %v1154 = vpop.f32.mrb[0].mxu0
        %v1155 = vadd.f32 %v1086, %v1154
        %v1156 = vpop.f32.mrb[0].mxu0
        %1157 = vmatprep.mubr.f32.mxu0 0.0
        %1158 = vmatmul.mubr.f32.gmra.mrb[0].mxu0 %v424
        %v1159 = vpop.f32.mrb[0].mxu0
        %v1160 = vadd.f32 %v1086, %v1159
        %v1161 = vpop.f32.mrb[0].mxu0
        %1162 = vmatprep.mubr.f32.mxu0 0.0
        %1163 = vmatmul.mubr.f32.gmra.mrb[0].mxu0 %v425
        %v1164 = vpop.f32.mrb[0].mxu0
        %v1165 = vadd.f32 %v1086, %v1164
        %v1166 = vpop.f32.mrb[0].mxu0
        %1167 = vmatprep.mubr.f32.mxu0 0.0
        %1168 = vmatmul.mubr.f32.gmra.mrb[0].mxu0 %v426
        %v1169 = vpop.f32.mrb[0].mxu0
        %v1170 = vadd.f32 %v1086, %v1169
        %v1171 = vpop.f32.mrb[0].mxu0
        %1172 = vmatprep.mubr.f32.mxu0 0.0
        %1173 = vmatmul.mubr.f32.gmra.mrb[0].mxu0 %v427
        %v1174 = vpop.f32.mrb[0].mxu0
        %v1175 = vadd.f32 %v1086, %v1174
        %v1176 = vpop.f32.mrb[0].mxu0
        %1177 = vmatprep.mubr.f32.mxu0 0.0
        %1178 = vmatmul.mubr.f32.gmra.mrb[0].mxu0 %v428
        %v1179 = vpop.f32.mrb[0].mxu0
        %v1180 = vadd.f32 %v1086, %v1179
        %v1181 = vpop.f32.mrb[0].mxu0
        %1182 = vmatprep.mubr.f32.mxu0 0.0
        %1183 = vmatmul.mubr.f32.gmra.mrb[0].mxu0 %v429
        %v1184 = vpop.f32.mrb[0].mxu0
        %v1185 = vadd.f32 %v1086, %v1184
        %v1186 = vpop.f32.mrb[0].mxu0
        %1187 = vmatprep.mubr.f32.mxu0 0.0
        %1188 = vmatmul.mubr.f32.gmra.mrb[0].mxu0 %v430
        %v1189 = vpop.f32.mrb[0].mxu0
        %v1190 = vadd.f32 %v1086, %v1189
        %v1191 = vpop.f32.mrb[0].mxu0
        %1192 = vmatprep.mubr.f32.mxu0 0.0
        %1193 = vmatmul.mubr.f32.gmra.mrb[0].mxu0 %v431
        %v1194 = vpop.f32.mrb[0].mxu0
        %v1195 = vadd.f32 %v1086, %v1194
        %v1196 = vpop.f32.mrb[0].mxu0
        %1197 = vmatprep.mubr.f32.mxu0 0.0
        %1198 = vmatmul.mubr.f32.gmra.mrb[0].mxu0 %v432
        %v1199 = vpop.f32.mrb[0].mxu0
        %v1200 = vadd.f32 %v1086, %v1199
        %v1201 = vpop.f32.mrb[0].mxu0
        %1202 = vmatprep.mubr.f32.mxu0 0.0
        %1203 = vmatmul.mubr.f32.gmra.mrb[0].mxu0 %v433
        %v1204 = vpop.f32.mrb[0].mxu0
        %v1205 = vadd.f32 %v1086, %v1204
        %v1206 = vpop.f32.mrb[0].mxu0
        %1207 = vmatprep.mubr.f32.mxu0 0.0
        %1208 = vmatmul.mubr.f32.gmra.mrb[0].mxu0 %v434
        %v1209 = vpop.f32.mrb[0].mxu0
        %v1210 = vadd.f32 %v1086, %v1209
        %v1211 = vpop.f32.mrb[0].mxu0
        %1212 = vmatprep.mubr.f32.mxu0 0.0
        %1213 = vmatmul.mubr.f32.gmra.mrb[0].mxu0 %v435
        %v1214 = vpop.f32.mrb[0].mxu0
        %v1215 = vadd.f32 %v1086, %v1214
        %v1216 = vpop.f32.mrb[0].mxu0
        %1217 = vmatprep.mubr.f32.mxu0 0.0
        %1218 = vmatmul.mubr.f32.gmra.mrb[0].mxu0 %v436
        %v1219 = vpop.f32.mrb[0].mxu0
        %v1220 = vadd.f32 %v1086, %v1219
        %v1221 = vpop.f32.mrb[0].mxu0
        %1222 = vmatprep.mubr.f32.mxu0 0.0
        %1223 = vmatmul.mubr.f32.gmra.mrb[0].mxu0 %v437
        %v1224 = vpop.f32.mrb[0].mxu0
        %v1225 = vadd.f32 %v1086, %v1224
        %v1226 = vpop.f32.mrb[0].mxu0
        %1227 = vmatprep.mubr.f32.mxu0 0.0
        %1228 = vmatmul.mubr.f32.gmra.mrb[0].mxu0 %v438
        %v1229 = vpop.f32.mrb[0].mxu0
        %v1230 = vadd.f32 %v1086, %v1229
        %v1231 = vpop.f32.mrb[0].mxu0
        %1232 = vmatprep.mubr.f32.mxu0 0.0
        %1233 = vmatmul.mubr.f32.gmra.mrb[0].mxu0 %v439
        %v1234 = vpop.f32.mrb[0].mxu0
        %v1235 = vadd.f32 %v1086, %v1234
        %v1236 = vpop.f32.mrb[0].mxu0
        %1237 = vmatprep.mubr.f32.mxu0 0.0
        %1238 = vmatmul.mubr.f32.gmra.mrb[0].mxu0 %v440
        %v1239 = vpop.f32.mrb[0].mxu0
        %v1240 = vadd.f32 %v1086, %v1239
        %v1241 = vpop.f32.mrb[0].mxu0
        %1242 = vmatprep.mubr.f32.mxu0 0.0
        %1243 = vmatmul.mubr.f32.gmra.mrb[0].mxu0 %v441
        %v1244 = vpop.f32.mrb[0].mxu0
        %v1245 = vadd.f32 %v1086, %v1244
        %v1246 = vpop.f32.mrb[0].mxu0
        %1247 = vmatprep.mubr.f32.mxu0 0.0
        %1248 = vmatmul.mubr.f32.gmra.mrb[0].mxu0 %v442
        %v1249 = vpop.f32.mrb[0].mxu0
        %v1250 = vadd.f32 %v1086, %v1249
        %v1251 = vpop.f32.mrb[0].mxu0
        %1252 = vmatprep.mubr.f32.mxu0 0.0
        %1253 = vmatmul.mubr.f32.gmra.mrb[0].mxu0 %v443
        %v1254 = vpop.f32.mrb[0].mxu0
        %v1255 = vadd.f32 %v1086, %v1254
        %v1256 = vpop.f32.mrb[0].mxu0
        %1257 = vmatprep.mubr.f32.mxu0 0.0
        %1258 = vmatmul.mubr.f32.gmra.mrb[0].mxu0 %v444
        %v1259 = vpop.f32.mrb[0].mxu0
        %v1260 = vadd.f32 %v1086, %v1259
        %v1261 = vpop.f32.mrb[0].mxu0
        %1262 = vmatprep.mubr.f32.mxu0 0.0
        %1263 = vmatmul.mubr.f32.gmra.mrb[0].mxu0 %v445
        %v1264 = vpop.f32.mrb[0].mxu0
        %v1265 = vadd.f32 %v1086, %v1264
        %v1266 = vpop.f32.mrb[0].mxu0
        %1267 = vmatprep.mubr.f32.mxu0 0.0
        %1268 = vmatmul.mubr.f32.gmra.mrb[0].mxu0 %v446
        %v1269 = vpop.f32.mrb[0].mxu0
        %v1270 = vadd.f32 %v1086, %v1269
        %v1271 = vpop.f32.mrb[0].mxu0
        %1272 = vmatprep.mubr.f32.mxu0 0.0
        %1273 = vmatmul.mubr.f32.gmra.mrb[0].mxu0 %v447
        %v1274 = vpop.f32.mrb[0].mxu0
        %v1275 = vadd.f32 %v1086, %v1274
        %v1276 = vpop.f32.mrb[0].mxu0
        %1277 = vmatprep.mubr.f32.mxu0 0.0
        %1278 = vmatmul.mubr.f32.gmra.mrb[0].mxu0 %v448
        %v1279 = vpop.f32.mrb[0].mxu0
        %v1280 = vadd.f32 %v1086, %v1279
        %v1281 = vpop.f32.mrb[0].mxu0
        %1282 = vmatprep.mubr.f32.mxu0 0.0
        %1283 = vmatmul.mubr.f32.gmra.mrb[0].mxu0 %v449
        %v1284 = vpop.f32.mrb[0].mxu0
        %v1285 = vadd.f32 %v1086, %v1284
        %v1286 = vpop.f32.mrb[0].mxu0
        %1287 = vmatprep.mubr.f32.mxu0 0.0
        %1288 = vmatmul.mubr.f32.gmra.mrb[0].mxu0 %v450
        %v1289 = vpop.f32.mrb[0].mxu0
        %v1290 = vadd.f32 %v1086, %v1289
        %v1291 = vpop.f32.mrb[0].mxu0
        %1292 = vmatprep.mubr.f32.mxu0 0.0
        %1293 = vmatmul.mubr.f32.gmra.mrb[0].mxu0 %v451
        %v1294 = vpop.f32.mrb[0].mxu0
        %v1295 = vadd.f32 %v1086, %v1294
        %v1296 = vpop.f32.mrb[0].mxu0
        %1297 = vmatprep.mubr.f32.mxu0 0.0
        %1298 = vmatmul.mubr.f32.gmra.mrb[0].mxu0 %v452
        %v1299 = vpop.f32.mrb[0].mxu0
        %v1300 = vadd.f32 %v1086, %v1299
        %v1301 = vpop.f32.mrb[0].mxu0
        %1302 = vmatprep.mubr.f32.mxu0 0.0
        %1303 = vmatmul.mubr.f32.gmra.mrb[0].mxu0 %v453
        %v1304 = vpop.f32.mrb[0].mxu0
        %v1305 = vadd.f32 %v1086, %v1304
        %v1306 = vpop.f32.mrb[0].mxu0
        %1307 = vmatprep.mubr.f32.mxu0 0.0
        %1308 = vmatmul.mubr.f32.gmra.mrb[0].mxu0 %v454
        %v1309 = vpop.f32.mrb[0].mxu0
        %v1310 = vadd.f32 %v1086, %v1309
        %v1311 = vpop.f32.mrb[0].mxu0
        %1312 = vdwg.mxu0
        %vm1313 = vcmask 261120
        %1314 = vst.msk [vmem:[%s420] sm:$0xff] %vm1313, %v1155
        %1315 = vst.msk [vmem:[%s420 + $0x8] sm:$0xff] %vm1313, %v1160
        %1316 = vst.msk [vmem:[%s420 + $0x10] sm:$0xff] %vm1313, %v1165
        %1317 = vst.msk [vmem:[%s420 + $0x18] sm:$0xff] %vm1313, %v1170
        %1318 = vst.msk [vmem:[%s420 + $0x20] sm:$0xff] %vm1313, %v1175
        %1319 = vst.msk [vmem:[%s420 + $0x28] sm:$0xff] %vm1313, %v1180
        %1320 = vst.msk [vmem:[%s420 + $0x30] sm:$0xff] %vm1313, %v1185
        %1321 = vst.msk [vmem:[%s420 + $0x38] sm:$0xff] %vm1313, %v1190
        %1322 = vst.msk [vmem:[%s420 + $0x40] sm:$0xff] %vm1313, %v1195
        %1323 = vst.msk [vmem:[%s420 + $0x48] sm:$0xff] %vm1313, %v1200
        %1324 = vst.msk [vmem:[%s420 + $0x50] sm:$0xff] %vm1313, %v1205
        %1325 = vst.msk [vmem:[%s420 + $0x58] sm:$0xff] %vm1313, %v1210
        %1326 = vst.msk [vmem:[%s420 + $0x60] sm:$0xff] %vm1313, %v1215
        %1327 = vst.msk [vmem:[%s420 + $0x68] sm:$0xff] %vm1313, %v1220
        %1328 = vst.msk [vmem:[%s420 + $0x70] sm:$0xff] %vm1313, %v1225
        %1329 = vst.msk [vmem:[%s420 + $0x78] sm:$0xff] %vm1313, %v1230
        %1330 = vst.msk [vmem:[%s420 + $0x80] sm:$0xff] %vm1313, %v1235
        %1331 = vst.msk [vmem:[%s420 + $0x88] sm:$0xff] %vm1313, %v1240
        %1332 = vst.msk [vmem:[%s420 + $0x90] sm:$0xff] %vm1313, %v1245
        %1333 = vst.msk [vmem:[%s420 + $0x98] sm:$0xff] %vm1313, %v1250
        %1334 = vst.msk [vmem:[%s420 + $0xa0] sm:$0xff] %vm1313, %v1255
        %1335 = vst.msk [vmem:[%s420 + $0xa8] sm:$0xff] %vm1313, %v1260
        %1336 = vst.msk [vmem:[%s420 + $0xb0] sm:$0xff] %vm1313, %v1265
        %1337 = vst.msk [vmem:[%s420 + $0xb8] sm:$0xff] %vm1313, %v1270
        %1338 = vst.msk [vmem:[%s420 + $0xc0] sm:$0xff] %vm1313, %v1275
        %1339 = vst.msk [vmem:[%s420 + $0xc8] sm:$0xff] %vm1313, %v1280
        %1340 = vst.msk [vmem:[%s420 + $0xd0] sm:$0xff] %vm1313, %v1285
        %1341 = vst.msk [vmem:[%s420 + $0xd8] sm:$0xff] %vm1313, %v1290
        %1342 = vst.msk [vmem:[%s420 + $0xe0] sm:$0xff] %vm1313, %v1295
        %1343 = vst.msk [vmem:[%s420 + $0xe8] sm:$0xff] %vm1313, %v1300
        %1344 = vst.msk [vmem:[%s420 + $0xf0] sm:$0xff] %vm1313, %v1305
        %1345 = vst.msk [vmem:[%s420 + $0xf8] sm:$0xff] %vm1313, %v1310
        %1378 = vrot.lane.b32.xlu0 %v1155, 96
        %v1379 = vpop.permute.xlu0 %1378
        %1380 = vrot.lane.b32.xlu0 %v1160, 96
        %v1381 = vpop.permute.xlu0 %1380
        %1382 = vrot.lane.b32.xlu0 %v1165, 96
        %v1383 = vpop.permute.xlu0 %1382
        %1384 = vrot.lane.b32.xlu0 %v1170, 96
        %v1385 = vpop.permute.xlu0 %1384
        %1386 = vrot.lane.b32.xlu0 %v1175, 96
        %v1387 = vpop.permute.xlu0 %1386
        %1388 = vrot.lane.b32.xlu0 %v1180, 96
        %v1389 = vpop.permute.xlu0 %1388
        %1390 = vrot.lane.b32.xlu0 %v1185, 96
        %v1391 = vpop.permute.xlu0 %1390
        %1392 = vrot.lane.b32.xlu0 %v1190, 96
        %v1393 = vpop.permute.xlu0 %1392
        %1394 = vrot.lane.b32.xlu0 %v1195, 96
        %v1395 = vpop.permute.xlu0 %1394
        %1396 = vrot.lane.b32.xlu0 %v1200, 96
        %v1397 = vpop.permute.xlu0 %1396
        %1398 = vrot.lane.b32.xlu0 %v1205, 96
        %v1399 = vpop.permute.xlu0 %1398
        %1400 = vrot.lane.b32.xlu0 %v1210, 96
        %v1401 = vpop.permute.xlu0 %1400
        %1402 = vrot.lane.b32.xlu0 %v1215, 96
        %v1403 = vpop.permute.xlu0 %1402
        %1404 = vrot.lane.b32.xlu0 %v1220, 96
        %v1405 = vpop.permute.xlu0 %1404
        %1406 = vrot.lane.b32.xlu0 %v1225, 96
        %v1407 = vpop.permute.xlu0 %1406
        %1408 = vrot.lane.b32.xlu0 %v1230, 96
        %v1409 = vpop.permute.xlu0 %1408
        %1410 = vrot.lane.b32.xlu0 %v1235, 96
        %v1411 = vpop.permute.xlu0 %1410
        %1412 = vrot.lane.b32.xlu0 %v1240, 96
        %v1413 = vpop.permute.xlu0 %1412
        %1414 = vrot.lane.b32.xlu0 %v1245, 96
        %v1415 = vpop.permute.xlu0 %1414
        %1416 = vrot.lane.b32.xlu0 %v1250, 96
        %v1417 = vpop.permute.xlu0 %1416
        %1418 = vrot.lane.b32.xlu0 %v1255, 96
        %v1419 = vpop.permute.xlu0 %1418
        %1420 = vrot.lane.b32.xlu0 %v1260, 96
        %v1421 = vpop.permute.xlu0 %1420
        %1422 = vrot.lane.b32.xlu0 %v1265, 96
        %v1423 = vpop.permute.xlu0 %1422
        %1424 = vrot.lane.b32.xlu0 %v1270, 96
        %v1425 = vpop.permute.xlu0 %1424
        %1426 = vrot.lane.b32.xlu0 %v1275, 96
        %v1427 = vpop.permute.xlu0 %1426
        %1428 = vrot.lane.b32.xlu0 %v1280, 96
        %v1429 = vpop.permute.xlu0 %1428
        %1430 = vrot.lane.b32.xlu0 %v1285, 96
        %v1431 = vpop.permute.xlu0 %1430
        %1432 = vrot.lane.b32.xlu0 %v1290, 96
        %v1433 = vpop.permute.xlu0 %1432
        %1434 = vrot.lane.b32.xlu0 %v1295, 96
        %v1435 = vpop.permute.xlu0 %1434
        %1436 = vrot.lane.b32.xlu0 %v1300, 96
        %v1437 = vpop.permute.xlu0 %1436
        %1438 = vrot.lane.b32.xlu0 %v1305, 96
        %v1439 = vpop.permute.xlu0 %1438
        %1440 = vrot.lane.b32.xlu0 %v1310, 96
        %v1441 = vpop.permute.xlu0 %1440
        %s1474 = scalar_lea.vmem %s420, 256
        %1475 = vst.msk [vmem:[%s1474] sm:$0xff] %vm1313, %v1379
        %1476 = vst.msk [vmem:[%s1474 + $0x8] sm:$0xff] %vm1313, %v1381
        %1477 = vst.msk [vmem:[%s1474 + $0x10] sm:$0xff] %vm1313, %v1383
        %1478 = vst.msk [vmem:[%s1474 + $0x18] sm:$0xff] %vm1313, %v1385
        %1479 = vst.msk [vmem:[%s1474 + $0x20] sm:$0xff] %vm1313, %v1387
        %1480 = vst.msk [vmem:[%s1474 + $0x28] sm:$0xff] %vm1313, %v1389
        %1481 = vst.msk [vmem:[%s1474 + $0x30] sm:$0xff] %vm1313, %v1391
        %1482 = vst.msk [vmem:[%s1474 + $0x38] sm:$0xff] %vm1313, %v1393
        %1483 = vst.msk [vmem:[%s1474 + $0x40] sm:$0xff] %vm1313, %v1395
        %1484 = vst.msk [vmem:[%s1474 + $0x48] sm:$0xff] %vm1313, %v1397
        %1485 = vst.msk [vmem:[%s1474 + $0x50] sm:$0xff] %vm1313, %v1399
        %1486 = vst.msk [vmem:[%s1474 + $0x58] sm:$0xff] %vm1313, %v1401
        %1487 = vst.msk [vmem:[%s1474 + $0x60] sm:$0xff] %vm1313, %v1403
        %1488 = vst.msk [vmem:[%s1474 + $0x68] sm:$0xff] %vm1313, %v1405
        %1489 = vst.msk [vmem:[%s1474 + $0x70] sm:$0xff] %vm1313, %v1407
        %1490 = vst.msk [vmem:[%s1474 + $0x78] sm:$0xff] %vm1313, %v1409
        %1491 = vst.msk [vmem:[%s1474 + $0x80] sm:$0xff] %vm1313, %v1411
        %1492 = vst.msk [vmem:[%s1474 + $0x88] sm:$0xff] %vm1313, %v1413
        %1493 = vst.msk [vmem:[%s1474 + $0x90] sm:$0xff] %vm1313, %v1415
        %1494 = vst.msk [vmem:[%s1474 + $0x98] sm:$0xff] %vm1313, %v1417
        %1495 = vst.msk [vmem:[%s1474 + $0xa0] sm:$0xff] %vm1313, %v1419
        %1496 = vst.msk [vmem:[%s1474 + $0xa8] sm:$0xff] %vm1313, %v1421
        %1497 = vst.msk [vmem:[%s1474 + $0xb0] sm:$0xff] %vm1313, %v1423
        %1498 = vst.msk [vmem:[%s1474 + $0xb8] sm:$0xff] %vm1313, %v1425
        %1499 = vst.msk [vmem:[%s1474 + $0xc0] sm:$0xff] %vm1313, %v1427
        %1500 = vst.msk [vmem:[%s1474 + $0xc8] sm:$0xff] %vm1313, %v1429
        %1501 = vst.msk [vmem:[%s1474 + $0xd0] sm:$0xff] %vm1313, %v1431
        %1502 = vst.msk [vmem:[%s1474 + $0xd8] sm:$0xff] %vm1313, %v1433
        %1503 = vst.msk [vmem:[%s1474 + $0xe0] sm:$0xff] %vm1313, %v1435
        %1504 = vst.msk [vmem:[%s1474 + $0xe8] sm:$0xff] %vm1313, %v1437
        %1505 = vst.msk [vmem:[%s1474 + $0xf0] sm:$0xff] %vm1313, %v1439
        %1506 = vst.msk [vmem:[%s1474 + $0xf8] sm:$0xff] %vm1313, %v1441
        %1507 = vrot.lane.b32.xlu0 %v1155, 64
        %v1508 = vpop.permute.xlu0 %1507
        %1509 = vrot.lane.b32.xlu0 %v1160, 64
        %v1510 = vpop.permute.xlu0 %1509
        %1511 = vrot.lane.b32.xlu0 %v1165, 64
        %v1512 = vpop.permute.xlu0 %1511
        %1513 = vrot.lane.b32.xlu0 %v1170, 64
        %v1514 = vpop.permute.xlu0 %1513
        %1515 = vrot.lane.b32.xlu0 %v1175, 64
        %v1516 = vpop.permute.xlu0 %1515
        %1517 = vrot.lane.b32.xlu0 %v1180, 64
        %v1518 = vpop.permute.xlu0 %1517
        %1519 = vrot.lane.b32.xlu0 %v1185, 64
        %v1520 = vpop.permute.xlu0 %1519
        %1521 = vrot.lane.b32.xlu0 %v1190, 64
        %v1522 = vpop.permute.xlu0 %1521
        %1523 = vrot.lane.b32.xlu0 %v1195, 64
        %v1524 = vpop.permute.xlu0 %1523
        %1525 = vrot.lane.b32.xlu0 %v1200, 64
        %v1526 = vpop.permute.xlu0 %1525
        %1527 = vrot.lane.b32.xlu0 %v1205, 64
        %v1528 = vpop.permute.xlu0 %1527
        %1529 = vrot.lane.b32.xlu0 %v1210, 64
        %v1530 = vpop.permute.xlu0 %1529
        %1531 = vrot.lane.b32.xlu0 %v1215, 64
        %v1532 = vpop.permute.xlu0 %1531
        %1533 = vrot.lane.b32.xlu0 %v1220, 64
        %v1534 = vpop.permute.xlu0 %1533
        %1535 = vrot.lane.b32.xlu0 %v1225, 64
        %v1536 = vpop.permute.xlu0 %1535
        %1537 = vrot.lane.b32.xlu0 %v1230, 64
        %v1538 = vpop.permute.xlu0 %1537
        %1539 = vrot.lane.b32.xlu0 %v1235, 64
        %v1540 = vpop.permute.xlu0 %1539
        %1541 = vrot.lane.b32.xlu0 %v1240, 64
        %v1542 = vpop.permute.xlu0 %1541
        %1543 = vrot.lane.b32.xlu0 %v1245, 64
        %v1544 = vpop.permute.xlu0 %1543
        %1545 = vrot.lane.b32.xlu0 %v1250, 64
        %v1546 = vpop.permute.xlu0 %1545
        %1547 = vrot.lane.b32.xlu0 %v1255, 64
        %v1548 = vpop.permute.xlu0 %1547
        %1549 = vrot.lane.b32.xlu0 %v1260, 64
        %v1550 = vpop.permute.xlu0 %1549
        %1551 = vrot.lane.b32.xlu0 %v1265, 64
        %v1552 = vpop.permute.xlu0 %1551
        %1553 = vrot.lane.b32.xlu0 %v1270, 64
        %v1554 = vpop.permute.xlu0 %1553
        %1555 = vrot.lane.b32.xlu0 %v1275, 64
        %v1556 = vpop.permute.xlu0 %1555
        %1557 = vrot.lane.b32.xlu0 %v1280, 64
        %v1558 = vpop.permute.xlu0 %1557
        %1559 = vrot.lane.b32.xlu0 %v1285, 64
        %v1560 = vpop.permute.xlu0 %1559
        %1561 = vrot.lane.b32.xlu0 %v1290, 64
        %v1562 = vpop.permute.xlu0 %1561
        %1563 = vrot.lane.b32.xlu0 %v1295, 64
        %v1564 = vpop.permute.xlu0 %1563
        %1565 = vrot.lane.b32.xlu0 %v1300, 64
        %v1566 = vpop.permute.xlu0 %1565
        %1567 = vrot.lane.b32.xlu0 %v1305, 64
        %v1568 = vpop.permute.xlu0 %1567
        %1569 = vrot.lane.b32.xlu0 %v1310, 64
        %v1570 = vpop.permute.xlu0 %1569
        %s1603 = scalar_lea.vmem %s420, 512
        %1604 = vst.msk [vmem:[%s1603] sm:$0xff] %vm1313, %v1508
        %1605 = vst.msk [vmem:[%s1603 + $0x8] sm:$0xff] %vm1313, %v1510
        %1606 = vst.msk [vmem:[%s1603 + $0x10] sm:$0xff] %vm1313, %v1512
        %1607 = vst.msk [vmem:[%s1603 + $0x18] sm:$0xff] %vm1313, %v1514
        %1608 = vst.msk [vmem:[%s1603 + $0x20] sm:$0xff] %vm1313, %v1516
        %1609 = vst.msk [vmem:[%s1603 + $0x28] sm:$0xff] %vm1313, %v1518
        %1610 = vst.msk [vmem:[%s1603 + $0x30] sm:$0xff] %vm1313, %v1520
        %1611 = vst.msk [vmem:[%s1603 + $0x38] sm:$0xff] %vm1313, %v1522
        %1612 = vst.msk [vmem:[%s1603 + $0x40] sm:$0xff] %vm1313, %v1524
        %1613 = vst.msk [vmem:[%s1603 + $0x48] sm:$0xff] %vm1313, %v1526
        %1614 = vst.msk [vmem:[%s1603 + $0x50] sm:$0xff] %vm1313, %v1528
        %1615 = vst.msk [vmem:[%s1603 + $0x58] sm:$0xff] %vm1313, %v1530
        %1616 = vst.msk [vmem:[%s1603 + $0x60] sm:$0xff] %vm1313, %v1532
        %1617 = vst.msk [vmem:[%s1603 + $0x68] sm:$0xff] %vm1313, %v1534
        %1618 = vst.msk [vmem:[%s1603 + $0x70] sm:$0xff] %vm1313, %v1536
        %1619 = vst.msk [vmem:[%s1603 + $0x78] sm:$0xff] %vm1313, %v1538
        %1620 = vst.msk [vmem:[%s1603 + $0x80] sm:$0xff] %vm1313, %v1540
        %1621 = vst.msk [vmem:[%s1603 + $0x88] sm:$0xff] %vm1313, %v1542
        %1622 = vst.msk [vmem:[%s1603 + $0x90] sm:$0xff] %vm1313, %v1544
        %1623 = vst.msk [vmem:[%s1603 + $0x98] sm:$0xff] %vm1313, %v1546
        %1624 = vst.msk [vmem:[%s1603 + $0xa0] sm:$0xff] %vm1313, %v1548
        %1625 = vst.msk [vmem:[%s1603 + $0xa8] sm:$0xff] %vm1313, %v1550
        %1626 = vst.msk [vmem:[%s1603 + $0xb0] sm:$0xff] %vm1313, %v1552
        %1627 = vst.msk [vmem:[%s1603 + $0xb8] sm:$0xff] %vm1313, %v1554
        %1628 = vst.msk [vmem:[%s1603 + $0xc0] sm:$0xff] %vm1313, %v1556
        %1629 = vst.msk [vmem:[%s1603 + $0xc8] sm:$0xff] %vm1313, %v1558
        %1630 = vst.msk [vmem:[%s1603 + $0xd0] sm:$0xff] %vm1313, %v1560
        %1631 = vst.msk [vmem:[%s1603 + $0xd8] sm:$0xff] %vm1313, %v1562
        %1632 = vst.msk [vmem:[%s1603 + $0xe0] sm:$0xff] %vm1313, %v1564
        %1633 = vst.msk [vmem:[%s1603 + $0xe8] sm:$0xff] %vm1313, %v1566
        %1634 = vst.msk [vmem:[%s1603 + $0xf0] sm:$0xff] %vm1313, %v1568
        %1635 = vst.msk [vmem:[%s1603 + $0xf8] sm:$0xff] %vm1313, %v1570
        %1636 = vrot.lane.b32.xlu0 %v1155, 32
        %v1637 = vpop.permute.xlu0 %1636
        %1638 = vrot.lane.b32.xlu0 %v1160, 32
        %v1639 = vpop.permute.xlu0 %1638
        %1640 = vrot.lane.b32.xlu0 %v1165, 32
        %v1641 = vpop.permute.xlu0 %1640
        %1642 = vrot.lane.b32.xlu0 %v1170, 32
        %v1643 = vpop.permute.xlu0 %1642
        %1644 = vrot.lane.b32.xlu0 %v1175, 32
        %v1645 = vpop.permute.xlu0 %1644
        %1646 = vrot.lane.b32.xlu0 %v1180, 32
        %v1647 = vpop.permute.xlu0 %1646
        %1648 = vrot.lane.b32.xlu0 %v1185, 32
        %v1649 = vpop.permute.xlu0 %1648
        %1650 = vrot.lane.b32.xlu0 %v1190, 32
        %v1651 = vpop.permute.xlu0 %1650
        %1652 = vrot.lane.b32.xlu0 %v1195, 32
        %v1653 = vpop.permute.xlu0 %1652
        %1654 = vrot.lane.b32.xlu0 %v1200, 32
        %v1655 = vpop.permute.xlu0 %1654
        %1656 = vrot.lane.b32.xlu0 %v1205, 32
        %v1657 = vpop.permute.xlu0 %1656
        %1658 = vrot.lane.b32.xlu0 %v1210, 32
        %v1659 = vpop.permute.xlu0 %1658
        %1660 = vrot.lane.b32.xlu0 %v1215, 32
        %v1661 = vpop.permute.xlu0 %1660
        %1662 = vrot.lane.b32.xlu0 %v1220, 32
        %v1663 = vpop.permute.xlu0 %1662
        %1664 = vrot.lane.b32.xlu0 %v1225, 32
        %v1665 = vpop.permute.xlu0 %1664
        %1666 = vrot.lane.b32.xlu0 %v1230, 32
        %v1667 = vpop.permute.xlu0 %1666
        %1668 = vrot.lane.b32.xlu0 %v1235, 32
        %v1669 = vpop.permute.xlu0 %1668
        %1670 = vrot.lane.b32.xlu0 %v1240, 32
        %v1671 = vpop.permute.xlu0 %1670
        %1672 = vrot.lane.b32.xlu0 %v1245, 32
        %v1673 = vpop.permute.xlu0 %1672
        %1674 = vrot.lane.b32.xlu0 %v1250, 32
        %v1675 = vpop.permute.xlu0 %1674
        %1676 = vrot.lane.b32.xlu0 %v1255, 32
        %v1677 = vpop.permute.xlu0 %1676
        %1678 = vrot.lane.b32.xlu0 %v1260, 32
        %v1679 = vpop.permute.xlu0 %1678
        %1680 = vrot.lane.b32.xlu0 %v1265, 32
        %v1681 = vpop.permute.xlu0 %1680
        %1682 = vrot.lane.b32.xlu0 %v1270, 32
        %v1683 = vpop.permute.xlu0 %1682
        %1684 = vrot.lane.b32.xlu0 %v1275, 32
        %v1685 = vpop.permute.xlu0 %1684
        %1686 = vrot.lane.b32.xlu0 %v1280, 32
        %v1687 = vpop.permute.xlu0 %1686
        %1688 = vrot.lane.b32.xlu0 %v1285, 32
        %v1689 = vpop.permute.xlu0 %1688
        %1690 = vrot.lane.b32.xlu0 %v1290, 32
        %v1691 = vpop.permute.xlu0 %1690
        %1692 = vrot.lane.b32.xlu0 %v1295, 32
        %v1693 = vpop.permute.xlu0 %1692
        %1694 = vrot.lane.b32.xlu0 %v1300, 32
        %v1695 = vpop.permute.xlu0 %1694
        %1696 = vrot.lane.b32.xlu0 %v1305, 32
        %v1697 = vpop.permute.xlu0 %1696
        %1698 = vrot.lane.b32.xlu0 %v1310, 32
        %v1699 = vpop.permute.xlu0 %1698
        %s1732 = scalar_lea.vmem %s420, 768
        %1733 = vst.msk [vmem:[%s1732] sm:$0xff] %vm1313, %v1637
        %1734 = vst.msk [vmem:[%s1732 + $0x8] sm:$0xff] %vm1313, %v1639
        %1735 = vst.msk [vmem:[%s1732 + $0x10] sm:$0xff] %vm1313, %v1641
        %1736 = vst.msk [vmem:[%s1732 + $0x18] sm:$0xff] %vm1313, %v1643
        %1737 = vst.msk [vmem:[%s1732 + $0x20] sm:$0xff] %vm1313, %v1645
        %1738 = vst.msk [vmem:[%s1732 + $0x28] sm:$0xff] %vm1313, %v1647
        %1739 = vst.msk [vmem:[%s1732 + $0x30] sm:$0xff] %vm1313, %v1649
        %1740 = vst.msk [vmem:[%s1732 + $0x38] sm:$0xff] %vm1313, %v1651
        %1741 = vst.msk [vmem:[%s1732 + $0x40] sm:$0xff] %vm1313, %v1653
        %1742 = vst.msk [vmem:[%s1732 + $0x48] sm:$0xff] %vm1313, %v1655
        %1743 = vst.msk [vmem:[%s1732 + $0x50] sm:$0xff] %vm1313, %v1657
        %1744 = vst.msk [vmem:[%s1732 + $0x58] sm:$0xff] %vm1313, %v1659
        %1745 = vst.msk [vmem:[%s1732 + $0x60] sm:$0xff] %vm1313, %v1661
        %1746 = vst.msk [vmem:[%s1732 + $0x68] sm:$0xff] %vm1313, %v1663
        %1747 = vst.msk [vmem:[%s1732 + $0x70] sm:$0xff] %vm1313, %v1665
        %1748 = vst.msk [vmem:[%s1732 + $0x78] sm:$0xff] %vm1313, %v1667
        %1749 = vst.msk [vmem:[%s1732 + $0x80] sm:$0xff] %vm1313, %v1669
        %1750 = vst.msk [vmem:[%s1732 + $0x88] sm:$0xff] %vm1313, %v1671
        %1751 = vst.msk [vmem:[%s1732 + $0x90] sm:$0xff] %vm1313, %v1673
        %1752 = vst.msk [vmem:[%s1732 + $0x98] sm:$0xff] %vm1313, %v1675
        %1753 = vst.msk [vmem:[%s1732 + $0xa0] sm:$0xff] %vm1313, %v1677
        %1754 = vst.msk [vmem:[%s1732 + $0xa8] sm:$0xff] %vm1313, %v1679
        %1755 = vst.msk [vmem:[%s1732 + $0xb0] sm:$0xff] %vm1313, %v1681
        %1756 = vst.msk [vmem:[%s1732 + $0xb8] sm:$0xff] %vm1313, %v1683
        %1757 = vst.msk [vmem:[%s1732 + $0xc0] sm:$0xff] %vm1313, %v1685
        %1758 = vst.msk [vmem:[%s1732 + $0xc8] sm:$0xff] %vm1313, %v1687
        %1759 = vst.msk [vmem:[%s1732 + $0xd0] sm:$0xff] %vm1313, %v1689
        %1760 = vst.msk [vmem:[%s1732 + $0xd8] sm:$0xff] %vm1313, %v1691
        %1761 = vst.msk [vmem:[%s1732 + $0xe0] sm:$0xff] %vm1313, %v1693
        %1762 = vst.msk [vmem:[%s1732 + $0xe8] sm:$0xff] %vm1313, %v1695
        %1763 = vst.msk [vmem:[%s1732 + $0xf0] sm:$0xff] %vm1313, %v1697
        %1764 = vst.msk [vmem:[%s1732 + $0xf8] sm:$0xff] %vm1313, %v1699
        %s1765 = sand.u32 %s207, 1
        %s1766 = scalar_lea.sflag [#allocation4], %s1765
        %s1767 = sand.u32 %s207, 1
        %s1768 = smul.addr %s1767, 256
        %s1769 = scalar_lea.vmem [#allocation7], %s1768
        %s1770 = smul.u32 32, %s36
        %p1771 = scmp.lt.s32.totalorder %s35, 1
        %s1772 = scalar_select %p1771, %s35, 1
        %p1773 = scmp.lt.s32.totalorder %s1770, 31
        %s1774 = scalar_select %p1773, %s1770, 31
        %s1775 = smul.addr %s1772, 128
        %s1776 = sadd.s32 %s1774, %s1775
        %s1777 = smul.addr %s1776, 8
        %s1778 = scalar_lea.vmem %s8, %s1777
        %s1779 = sand.u32 %s263, 1
        %s1780 = scalar_lea.sflag [#allocation9], %s1779
        %s1781 = sand.u32 %s263, 1
        %s1782 = smul.addr %s1781, 256
        %s1783 = scalar_lea.vmem [#allocation8], %s1782
        // Predicated region
        $region57: #{tpu_custom_call.1} parent=47 // pred_check
          %p1784 = pneg %p217
        $region58: #{tpu_custom_call.1} parent=47 // pred_check_branch
          %1786 = sbr.rel (%p1784) target = $region60
        $region59: #{tpu_custom_call.1} parent=47 // pred_region
          %s1787 = smul.u32 2, %s36
          %s1789 = ssub.s32 4096, 4096
          %1790 = vsyncadd %s1766, %s1789
          %s1791 = smul.addr %s35, 32
          %s1792 = sadd.s32 %s1787, %s1791
          %s1793 = smul.addr %s1792, 128
          %s1794 = scalar_lea.hbm %s7, %s1793
          %s1795 = sshll.u32 %s1769, 4
          %s1796 = int_to_ptr.vmem [resolvable:$true] %s1795
          %1801 = dma.vmem_to_hbm [thread:$0]  %s1796, 4096, %s1794, %s1766, 256, 256, 16
        $region60: #{tpu_custom_call.1} parent=47 // pred_fallthru
          _
        // Predicated region
        $region61: #{tpu_custom_call.1} parent=47 // pred_check
          %p1802 = pneg %p245
        $region62: #{tpu_custom_call.1} parent=47 // pred_check_branch
          %1804 = sbr.rel (%p1802) target = $region64
        $region63: #{tpu_custom_call.1} parent=47 // pred_region
          %s1805 = smul.u32 32, %s36
        $region64: #{tpu_custom_call.1} parent=47 // pred_fallthru
          _
        // Predicated region
        $region65: #{tpu_custom_call.1} parent=47 // pred_check
          %p1806 = pneg %p273
        $region66: #{tpu_custom_call.1} parent=47 // pred_check_branch
          %1808 = sbr.rel (%p1806) target = $region68
        $region67: #{tpu_custom_call.1} parent=47 // pred_region
          %s1809 = smul.u32 2, %s36
          %s1811 = ssub.s32 4096, 4096
          %1812 = vsyncadd %s1780, %s1811
          %s1813 = smul.addr %s35, 32
          %s1814 = sadd.s32 %s1809, %s1813
          %s1815 = smul.addr %s1814, 128
          %s1816 = scalar_lea.hbm %s9, %s1815
          %s1817 = sshll.u32 %s1783, 4
          %s1818 = int_to_ptr.vmem [resolvable:$true] %s1817
          %1823 = dma.vmem_to_hbm [thread:$0]  %s1818, 4096, %s1816, %s1780, 256, 256, 16
        $region68: #{tpu_custom_call.1} parent=47 // pred_fallthru
          _
      $region48: #{tpu_custom_call.1} parent=5 // pred_fallthru
        _
      %p1824 = scmp.le.s32.totalorder 2, %s26
      // Predicated region
      $region69: #{tpu_custom_call.1} parent=5 // pred_check
        %p1825 = pneg %p1824
      $region70: #{tpu_custom_call.1} parent=5 // pred_check_branch
        %1827 = sbr.rel (%p1825) target = $region72
      $region71: #{tpu_custom_call.1} parent=5 // pred_region
        %s1828 = ssub.s32 %s26, 2
        // Predicated region
        $region73: #{tpu_custom_call.1} parent=71 // pred_check
          %p1829 = pneg %p223
        $region74: #{tpu_custom_call.1} parent=71 // pred_check_branch
          %1831 = sbr.rel (%p1829) target = $region76
        $region75: #{tpu_custom_call.1} parent=71 // pred_region
          %s1832 = sand.u32 %s208, 1
          %s1833 = scalar_lea.sflag [#allocation4], %s1832
          %s1834 = sand.u32 %s208, 1
          %s1835 = smul.addr %s1834, 256
          %s1836 = scalar_lea.vmem [#allocation7], %s1835
          %1837 = dma.done %s1833, 4096
        $region76: #{tpu_custom_call.1} parent=71 // pred_fallthru
          _
        // Predicated region
        $region77: #{tpu_custom_call.1} parent=71 // pred_check
          %p1838 = pneg %p251
        $region78: #{tpu_custom_call.1} parent=71 // pred_check_branch
          %1840 = sbr.rel (%p1838) target = $region80
        $region79: #{tpu_custom_call.1} parent=71 // pred_region
          %s1841 = smul.u32 32, %s38
          %p1842 = scmp.lt.s32.totalorder %s37, 1
          %s1843 = scalar_select %p1842, %s37, 1
          %p1844 = scmp.lt.s32.totalorder %s1841, 31
          %s1845 = scalar_select %p1844, %s1841, 31
          %s1846 = smul.addr %s1843, 128
          %s1847 = sadd.s32 %s1845, %s1846
          %s1848 = smul.addr %s1847, 8
          %s1849 = scalar_lea.vmem %s8, %s1848
        $region80: #{tpu_custom_call.1} parent=71 // pred_fallthru
          _
        // Predicated region
        $region81: #{tpu_custom_call.1} parent=71 // pred_check
          %p1850 = pneg %p279
        $region82: #{tpu_custom_call.1} parent=71 // pred_check_branch
          %1852 = sbr.rel (%p1850) target = $region84
        $region83: #{tpu_custom_call.1} parent=71 // pred_region
          %s1853 = sand.u32 %s264, 1
          %s1854 = scalar_lea.sflag [#allocation9], %s1853
          %s1855 = sand.u32 %s264, 1
          %s1856 = smul.addr %s1855, 256
          %s1857 = scalar_lea.vmem [#allocation8], %s1856
          %1858 = dma.done %s1854, 4096
        $region84: #{tpu_custom_call.1} parent=71 // pred_fallthru
          _
      $region72: #{tpu_custom_call.1} parent=5 // pred_fallthru
        _
    $region6: #{tpu_custom_call.1} parent=1 // loop_footer
      %s30 = sadd.s32 1, %s26
    $region7: #{tpu_custom_call.1} parent=1 // loop_footer_branch
      %25 = sbr.rel target = $region3
    $region8: #{tpu_custom_call.1} parent=1 // loop_exit
      _
    %1859 = vsyncpa [#allocation3], 1
    %s1860 = scalar_lea.sflag [#allocation3], 1
    %1861 = vsyncpa %s1860, 1
    %1862 = vsyncpa [#allocation6], 1
    %1863 = vsyncpa [#allocation4], 1
    %s1864 = scalar_lea.sflag [#allocation4], 1
    %1865 = vsyncpa %s1864, 1
    %1866 = vsyncpa [#allocation9], 1
    %s1867 = scalar_lea.sflag [#allocation9], 1
    %1868 = vsyncpa %s1867, 1

// kernel: tpu_custom_call.1
$region0: #{tpu_custom_call.1}
  #allocation0 [shape = 'u32[]', space=smem, size = 0x4, offset = 0x4, fixed_abs, tag = 'smem constant byte address 0x4 - core index']
  #allocation1 [shape = 'u32[144,128]{1,0:T(1,128)}', space=vmem, size = 0x12000, scoped, tag = 'internal scratch']
  %s0 = inlined_call_operand.hbm [shape: f32[2,256,128], index: 0, kind: input, shape index: {}]
  %s1 = inlined_call_operand.vmem [shape: f32[128,128], index: 1, kind: input, shape index: {}]
  %s2 = inlined_call_operand.vmem [shape: f32[128,128], index: 2, kind: input, shape index: {}]
  %s3 = inlined_call_operand.hbm [shape: f32[128,128], index: 3, kind: input, shape index: {}]
  %s4 = inlined_call_operand.vmem [shape: f32[128,1], index: 4, kind: input, shape index: {}]
  %s5 = inlined_call_operand.vmem [shape: f32[1,128], index: 5, kind: input, shape index: {}]
  %s6 = inlined_call_operand.vmem [shape: f32[128,1], index: 6, kind: input, shape index: {}]
  %s7 = inlined_call_operand.hbm [shape: f32[2,128,256], index: 7, kind: output, shape index: {0}]
  %s8 = inlined_call_operand.vmem [shape: f32[2,4,256,32], index: 8, kind: output, shape index: {1}]
  %s9 = inlined_call_operand.hbm [shape: f32[2,128,256], index: 9, kind: output, shape index: {2}]
  %10 = xla_tuple %s7, %s8, %s9
  %s11 = sld [smem:[#allocation0]]
  $region85: #{tpu_custom_call.1} parent=0
    _
  %s13 = ssub.s32 1, %s11
  %s14 = scalar_select 0, %s13, %s11
  $region1: #{tpu_custom_call.1} parent=0
    #allocation2 [shape = 'u8[262144]{0}', space=vmem, size = 0x40000, scoped, tag = 'input window, operand 0']
    #allocation3 [shape = 's32[2]{0}', space=sflag, size = 0x8, scoped, tag = 'scoped memory for tpu_custom_call.1']
    #allocation4 [shape = 's32[2]{0}', space=sflag, size = 0x8, scoped, tag = 'scoped memory for tpu_custom_call.1']
    #allocation5 [shape = 'u8[65536]{0}', space=vmem, size = 0x10000, scoped, tag = 'input window, operand 3, single buffered']
    #allocation6 [shape = 's32[1]{0}', space=sflag, size = 0x4, scoped, tag = 'scoped memory for tpu_custom_call.1']
    #allocation7 [shape = 'u8[262144]{0}', space=vmem, size = 0x40000, scoped, tag = 'output window, operand 0']
    #allocation8 [shape = 'u8[262144]{0}', space=vmem, size = 0x40000, scoped, tag = 'output window, operand 2']
    #allocation9 [shape = 's32[2]{0}', space=sflag, size = 0x8, scoped, tag = 'scoped memory for tpu_custom_call.1']
    %15 = vsyncpa [#allocation3], 0
    %s16 = scalar_lea.sflag [#allocation3], 1
    %17 = vsyncpa %s16, 0
    %18 = vsyncpa [#allocation6], 0
    %19 = vsyncpa [#allocation4], 0
    %s20 = scalar_lea.sflag [#allocation4], 1
    %21 = vsyncpa %s20, 0
    %22 = vsyncpa [#allocation9], 0
    %s23 = scalar_lea.sflag [#allocation9], 1
    %24 = vsyncpa %s23, 0
    loop: start=0, step=1, limit=4
    $region2: #{tpu_custom_call.1} parent=1 // loop_pre_header
      _
    $region3: #{tpu_custom_call.1} parent=1 // loop_header
      %s26 = sphi 0, %s30
      %p27 = scmp.ge.s32.totalorder %s26, 4
      %s33 = sphi 0, %s45
      %s34 = sphi 0, %s41
      %s35 = sphi 0, %s33
      %s36 = sphi 0, %s34
      %s37 = sphi 0, %s35
      %s38 = sphi 0, %s36
      %s50 = sphi 0, %s52
      %s53 = sphi 0, %s50
      %s54 = sphi 0, %s53
      %s70 = sphi 0, %s54
      %s74 = sphi 0, %s74
      %s76 = sphi 0, %s74
      %s77 = sphi 0, %s76
      %s91 = sphi 0, %s77
      %s95 = sphi 0, %s95
      %s97 = sphi 0, %s95
      %s98 = sphi 0, %s97
      %s112 = sphi 0, %s98
      %s116 = sphi 0, %s116
      %s118 = sphi 0, %s116
      %s119 = sphi 0, %s118
      %s133 = sphi 0, %s119
      %s137 = sphi 0, %s137
      %s139 = sphi 0, %s137
      %s140 = sphi 0, %s139
      %s154 = sphi 0, %s140
      %s158 = sphi 0, %s158
      %s160 = sphi 0, %s158
      %s161 = sphi 0, %s160
      %s175 = sphi 0, %s161
      %s179 = sphi 0, %s179
      %s181 = sphi 0, %s179
      %s182 = sphi 0, %s181
      %s196 = sphi 0, %s182
      %s204 = sphi 0, %s206
      %s207 = sphi 0, %s204
      %s208 = sphi 0, %s207
      %s224 = sphi 0, %s208
      %s232 = sphi 0, %s234
      %s235 = sphi 0, %s232
      %s236 = sphi 0, %s235
      %s252 = sphi 0, %s236
      %s260 = sphi 0, %s262
      %s263 = sphi 0, %s260
      %s264 = sphi 0, %s263
      %s280 = sphi 0, %s264
    $region4: #{tpu_custom_call.1} parent=1 // loop_header_branch
      %29 = sbr.rel (%p27) target = $region8
    $region5: #{tpu_custom_call.1} parent=1 // loop_body
      %s31 = ssub.s32 %s26, 1
      %s32 = ssub.s32 %s26, 2
      %s39 = sadd.s32 1, %s34
      %p40 = scmp.ge.s32.totalorder %s39, 1
      %s41 = scalar_select %p40, 0, %s39
      %s42 = sadd.s32 1, %s33
      %s43 = scalar_select %p40, %s42, %s33
      %p44 = scmp.ge.s32.totalorder %s43, 2
      %s45 = scalar_select %p44, 0, %s43
      %s46 = ssub.s32 %s33, %s45
      %s47 = ssub.s32 %s34, %s41
      %s48 = sor.u32 %s46, %s47
      %p49 = scmp.eq.s32.totalorder %s48, 0
      %s51 = sadd.s32 %s50, 1
      %s52 = scalar_select %p49, %s50, %s51
      %p55 = pneg %p49
      %p56 = scmp.eq.s32.totalorder %s26, 1
      %p57 = por %p55, %p56
      %p58 = scmp.ne.s32.totalorder %s50, %s53
      %p59 = scmp.eq.s32.totalorder %s26, 0
      %p60 = por %p58, %p59
      %p61 = scmp.ne.s32.totalorder %s50, %s53
      %p62 = scmp.eq.s32.totalorder %s31, 1
      %p63 = por %p61, %p62
      %p64 = scmp.ne.s32.totalorder %s53, %s54
      %p65 = scmp.eq.s32.totalorder %s31, 0
      %p66 = por %p64, %p65
      %p67 = scmp.ne.s32.totalorder %s53, %s54
      %p68 = scmp.eq.s32.totalorder %s32, 1
      %p69 = por %p67, %p68
      %p71 = scmp.ne.s32.totalorder %s54, %s70
      %p72 = scmp.eq.s32.totalorder %s32, 0
      %p73 = por %p71, %p72
      %s75 = sadd.s32 %s74, 1
      %p78 = scmp.eq.s32.totalorder %s26, 1
      %p79 = scmp.ne.s32.totalorder %s74, %s76
      %p80 = scmp.eq.s32.totalorder %s26, 0
      %p81 = por %p79, %p80
      %p82 = scmp.ne.s32.totalorder %s74, %s76
      %p83 = scmp.eq.s32.totalorder %s31, 1
      %p84 = por %p82, %p83
      %p85 = scmp.ne.s32.totalorder %s76, %s77
      %p86 = scmp.eq.s32.totalorder %s31, 0
      %p87 = por %p85, %p86
      %p88 = scmp.ne.s32.totalorder %s76, %s77
      %p89 = scmp.eq.s32.totalorder %s32, 1
      %p90 = por %p88, %p89
      %p92 = scmp.ne.s32.totalorder %s77, %s91
      %p93 = scmp.eq.s32.totalorder %s32, 0
      %p94 = por %p92, %p93
      %s96 = sadd.s32 %s95, 1
      %p99 = scmp.eq.s32.totalorder %s26, 1
      %p100 = scmp.ne.s32.totalorder %s95, %s97
      %p101 = scmp.eq.s32.totalorder %s26, 0
      %p102 = por %p100, %p101
      %p103 = scmp.ne.s32.totalorder %s95, %s97
      %p104 = scmp.eq.s32.totalorder %s31, 1
      %p105 = por %p103, %p104
      %p106 = scmp.ne.s32.totalorder %s97, %s98
      %p107 = scmp.eq.s32.totalorder %s31, 0
      %p108 = por %p106, %p107
      %p109 = scmp.ne.s32.totalorder %s97, %s98
      %p110 = scmp.eq.s32.totalorder %s32, 1
      %p111 = por %p109, %p110
      %p113 = scmp.ne.s32.totalorder %s98, %s112
      %p114 = scmp.eq.s32.totalorder %s32, 0
      %p115 = por %p113, %p114
      %s117 = sadd.s32 %s116, 1
      %p120 = scmp.eq.s32.totalorder %s26, 1
      %p121 = scmp.ne.s32.totalorder %s116, %s118
      %p122 = scmp.eq.s32.totalorder %s26, 0
      %p123 = por %p121, %p122
      %p124 = scmp.ne.s32.totalorder %s116, %s118
      %p125 = scmp.eq.s32.totalorder %s31, 1
      %p126 = por %p124, %p125
      %p127 = scmp.ne.s32.totalorder %s118, %s119
      %p128 = scmp.eq.s32.totalorder %s31, 0
      %p129 = por %p127, %p128
      %p130 = scmp.ne.s32.totalorder %s118, %s119
      %p131 = scmp.eq.s32.totalorder %s32, 1
      %p132 = por %p130, %p131
      %p134 = scmp.ne.s32.totalorder %s119, %s133
      %p135 = scmp.eq.s32.totalorder %s32, 0
      %p136 = por %p134, %p135
      %s138 = sadd.s32 %s137, 1
      %p141 = scmp.eq.s32.totalorder %s26, 1
      %p142 = scmp.ne.s32.totalorder %s137, %s139
      %p143 = scmp.eq.s32.totalorder %s26, 0
      %p144 = por %p142, %p143
      %p145 = scmp.ne.s32.totalorder %s137, %s139
      %p146 = scmp.eq.s32.totalorder %s31, 1
      %p147 = por %p145, %p146
      %p148 = scmp.ne.s32.totalorder %s139, %s140
      %p149 = scmp.eq.s32.totalorder %s31, 0
      %p150 = por %p148, %p149
      %p151 = scmp.ne.s32.totalorder %s139, %s140
      %p152 = scmp.eq.s32.totalorder %s32, 1
      %p153 = por %p151, %p152
      %p155 = scmp.ne.s32.totalorder %s140, %s154
      %p156 = scmp.eq.s32.totalorder %s32, 0
      %p157 = por %p155, %p156
      %s159 = sadd.s32 %s158, 1
      %p162 = scmp.eq.s32.totalorder %s26, 1
      %p163 = scmp.ne.s32.totalorder %s158, %s160
      %p164 = scmp.eq.s32.totalorder %s26, 0
      %p165 = por %p163, %p164
      %p166 = scmp.ne.s32.totalorder %s158, %s160
      %p167 = scmp.eq.s32.totalorder %s31, 1
      %p168 = por %p166, %p167
      %p169 = scmp.ne.s32.totalorder %s160, %s161
      %p170 = scmp.eq.s32.totalorder %s31, 0
      %p171 = por %p169, %p170
      %p172 = scmp.ne.s32.totalorder %s160, %s161
      %p173 = scmp.eq.s32.totalorder %s32, 1
      %p174 = por %p172, %p173
      %p176 = scmp.ne.s32.totalorder %s161, %s175
      %p177 = scmp.eq.s32.totalorder %s32, 0
      %p178 = por %p176, %p177
      %s180 = sadd.s32 %s179, 1
      %p183 = scmp.eq.s32.totalorder %s26, 1
      %p184 = scmp.ne.s32.totalorder %s179, %s181
      %p185 = scmp.eq.s32.totalorder %s26, 0
      %p186 = por %p184, %p185
      %p187 = scmp.ne.s32.totalorder %s179, %s181
      %p188 = scmp.eq.s32.totalorder %s31, 1
      %p189 = por %p187, %p188
      %p190 = scmp.ne.s32.totalorder %s181, %s182
      %p191 = scmp.eq.s32.totalorder %s31, 0
      %p192 = por %p190, %p191
      %p193 = scmp.ne.s32.totalorder %s181, %s182
      %p194 = scmp.eq.s32.totalorder %s32, 1
      %p195 = por %p193, %p194
      %p197 = scmp.ne.s32.totalorder %s182, %s196
      %p198 = scmp.eq.s32.totalorder %s32, 0
      %p199 = por %p197, %p198
      %s200 = ssub.s32 %s33, %s45
      %s201 = ssub.s32 %s34, %s41
      %s202 = sor.u32 %s200, %s201
      %p203 = scmp.eq.s32.totalorder %s202, 0
      %s205 = sadd.s32 %s204, 1
      %s206 = scalar_select %p203, %s204, %s205
      %p209 = pneg %p203
      %p210 = scmp.eq.s32.totalorder %s26, 1
      %p211 = por %p209, %p210
      %p212 = scmp.ne.s32.totalorder %s204, %s207
      %p213 = scmp.eq.s32.totalorder %s26, 0
      %p214 = por %p212, %p213
      %p215 = scmp.ne.s32.totalorder %s204, %s207
      %p216 = scmp.eq.s32.totalorder %s31, 1
      %p217 = por %p215, %p216
      %p218 = scmp.ne.s32.totalorder %s207, %s208
      %p219 = scmp.eq.s32.totalorder %s31, 0
      %p220 = por %p218, %p219
      %p221 = scmp.ne.s32.totalorder %s207, %s208
      %p222 = scmp.eq.s32.totalorder %s32, 1
      %p223 = por %p221, %p222
      %p225 = scmp.ne.s32.totalorder %s208, %s224
      %p226 = scmp.eq.s32.totalorder %s32, 0
      %p227 = por %p225, %p226
      %s228 = ssub.s32 %s33, %s45
      %s229 = ssub.s32 %s34, %s41
      %s230 = sor.u32 %s228, %s229
      %p231 = scmp.eq.s32.totalorder %s230, 0
      %s233 = sadd.s32 %s232, 1
      %s234 = scalar_select %p231, %s232, %s233
      %p237 = pneg %p231
      %p238 = scmp.eq.s32.totalorder %s26, 1
      %p239 = por %p237, %p238
      %p240 = scmp.ne.s32.totalorder %s232, %s235
      %p241 = scmp.eq.s32.totalorder %s26, 0
      %p242 = por %p240, %p241
      %p243 = scmp.ne.s32.totalorder %s232, %s235
      %p244 = scmp.eq.s32.totalorder %s31, 1
      %p245 = por %p243, %p244
      %p246 = scmp.ne.s32.totalorder %s235, %s236
      %p247 = scmp.eq.s32.totalorder %s31, 0
      %p248 = por %p246, %p247
      %p249 = scmp.ne.s32.totalorder %s235, %s236
      %p250 = scmp.eq.s32.totalorder %s32, 1
      %p251 = por %p249, %p250
      %p253 = scmp.ne.s32.totalorder %s236, %s252
      %p254 = scmp.eq.s32.totalorder %s32, 0
      %p255 = por %p253, %p254
      %s256 = ssub.s32 %s33, %s45
      %s257 = ssub.s32 %s34, %s41
      %s258 = sor.u32 %s256, %s257
      %p259 = scmp.eq.s32.totalorder %s258, 0
      %s261 = sadd.s32 %s260, 1
      %s262 = scalar_select %p259, %s260, %s261
      %p265 = pneg %p259
      %p266 = scmp.eq.s32.totalorder %s26, 1
      %p267 = por %p265, %p266
      %p268 = scmp.ne.s32.totalorder %s260, %s263
      %p269 = scmp.eq.s32.totalorder %s26, 0
      %p270 = por %p268, %p269
      %p271 = scmp.ne.s32.totalorder %s260, %s263
      %p272 = scmp.eq.s32.totalorder %s31, 1
      %p273 = por %p271, %p272
      %p274 = scmp.ne.s32.totalorder %s263, %s264
      %p275 = scmp.eq.s32.totalorder %s31, 0
      %p276 = por %p274, %p275
      %p277 = scmp.ne.s32.totalorder %s263, %s264
      %p278 = scmp.eq.s32.totalorder %s32, 1
      %p279 = por %p277, %p278
      %p281 = scmp.ne.s32.totalorder %s264, %s280
      %p282 = scmp.eq.s32.totalorder %s32, 0
      %p283 = por %p281, %p282
      %p284 = scmp.le.s32.totalorder 1, %s26
      %p285 = scmp.lt.s32.totalorder %s26, 3
      %p286 = pnand %p284, %p285
      %p287 = pneg %p286
      // Predicated region
      $region9: #{tpu_custom_call.1} parent=5 // pred_check
        _
      $region10: #{tpu_custom_call.1} parent=5 // pred_check_branch
        %289 = sbr.rel (%p286) target = $region12
      $region11: #{tpu_custom_call.1} parent=5 // pred_region
        %s290 = ssub.s32 %s26, 1
        // Predicated region
        $region13: #{tpu_custom_call.1} parent=11 // pred_check
          %p291 = pneg %p87
        $region14: #{tpu_custom_call.1} parent=11 // pred_check_branch
          %293 = sbr.rel (%p291) target = $region16
        $region15: #{tpu_custom_call.1} parent=11 // pred_region
          _
        $region16: #{tpu_custom_call.1} parent=11 // pred_fallthru
          _
        // Predicated region
        $region17: #{tpu_custom_call.1} parent=11 // pred_check
          %p294 = pneg %p108
        $region18: #{tpu_custom_call.1} parent=11 // pred_check_branch
          %296 = sbr.rel (%p294) target = $region20
        $region19: #{tpu_custom_call.1} parent=11 // pred_region
          _
        $region20: #{tpu_custom_call.1} parent=11 // pred_fallthru
          _
        // Predicated region
        $region21: #{tpu_custom_call.1} parent=11 // pred_check
          %p297 = pneg %p129
        $region22: #{tpu_custom_call.1} parent=11 // pred_check_branch
          %299 = sbr.rel (%p297) target = $region24
        $region23: #{tpu_custom_call.1} parent=11 // pred_region
          %s301 = ssub.s32 2048, 2048
          %302 = vsyncadd [#allocation6], %s301
          %s303 = sshll.u32 [#allocation5], 4
          %s304 = int_to_ptr.vmem [resolvable:$true] %s303
          %309 = dma.hbm_to_vmem [thread:$0]  %s3, 2048, %s304, [#allocation6], 128, 128, 8
        $region24: #{tpu_custom_call.1} parent=11 // pred_fallthru
          _
        // Predicated region
        $region25: #{tpu_custom_call.1} parent=11 // pred_check
          %p310 = pneg %p150
        $region26: #{tpu_custom_call.1} parent=11 // pred_check_branch
          %312 = sbr.rel (%p310) target = $region28
        $region27: #{tpu_custom_call.1} parent=11 // pred_region
          _
        $region28: #{tpu_custom_call.1} parent=11 // pred_fallthru
          _
        // Predicated region
        $region29: #{tpu_custom_call.1} parent=11 // pred_check
          %p313 = pneg %p171
        $region30: #{tpu_custom_call.1} parent=11 // pred_check_branch
          %315 = sbr.rel (%p313) target = $region32
        $region31: #{tpu_custom_call.1} parent=11 // pred_region
          _
        $region32: #{tpu_custom_call.1} parent=11 // pred_fallthru
          _
        // Predicated region
        $region33: #{tpu_custom_call.1} parent=11 // pred_check
          %p316 = pneg %p192
        $region34: #{tpu_custom_call.1} parent=11 // pred_check_branch
          %318 = sbr.rel (%p316) target = $region36
        $region35: #{tpu_custom_call.1} parent=11 // pred_region
          _
        $region36: #{tpu_custom_call.1} parent=11 // pred_fallthru
          _
      $region12: #{tpu_custom_call.1} parent=5 // pred_fallthru
        _
      %p319 = scmp.lt.s32.totalorder %s26, 2
      // Predicated region
      $region37: #{tpu_custom_call.1} parent=5 // pred_check
        %p320 = pneg %p319
      $region38: #{tpu_custom_call.1} parent=5 // pred_check_branch
        %322 = sbr.rel (%p320) target = $region40
      $region39: #{tpu_custom_call.1} parent=5 // pred_region
        // Predicated region
        $region41: #{tpu_custom_call.1} parent=39 // pred_check
          %p323 = pneg %p60
        $region42: #{tpu_custom_call.1} parent=39 // pred_check_branch
          %325 = sbr.rel (%p323) target = $region44
        $region43: #{tpu_custom_call.1} parent=39 // pred_region
          %s326 = sand.u32 %s50, 1
          %s327 = scalar_lea.sflag [#allocation3], %s326
          %s328 = sand.u32 %s50, 1
          %s329 = smul.addr %s328, 256
          %s330 = scalar_lea.vmem [#allocation2], %s329
          %s331 = smul.u32 32, %s34
          %s333 = ssub.s32 4096, 4096
          %334 = vsyncadd %s327, %s333
          %s335 = smul.addr %s33, 32
          %s336 = sadd.s32 %s331, %s335
          %s337 = smul.addr %s336, 128
          %s338 = scalar_lea.hbm %s0, %s337
          %s339 = sshll.u32 %s330, 4
          %s340 = int_to_ptr.vmem [resolvable:$true] %s339
          %345 = dma.hbm_to_vmem [thread:$0]  %s338, 4096, %s340, %s327, 128, 128, 8
        $region44: #{tpu_custom_call.1} parent=39 // pred_fallthru
          _
      $region40: #{tpu_custom_call.1} parent=5 // pred_fallthru
        _
      %p346 = scmp.le.s32.totalorder 1, %s26
      %p347 = scmp.lt.s32.totalorder %s26, 3
      %p348 = pnand %p346, %p347
      %p349 = pneg %p348
      // Predicated region
      $region45: #{tpu_custom_call.1} parent=5 // pred_check
        _
      $region46: #{tpu_custom_call.1} parent=5 // pred_check_branch
        %351 = sbr.rel (%p348) target = $region48
      $region47: #{tpu_custom_call.1} parent=5 // pred_region
        %s352 = ssub.s32 %s26, 1
        %s353 = sand.u32 %s53, 1
        %s354 = scalar_lea.sflag [#allocation3], %s353
        %s355 = sand.u32 %s53, 1
        %s356 = smul.addr %s355, 256
        %s357 = scalar_lea.vmem [#allocation2], %s356
        // Predicated region
        $region49: #{tpu_custom_call.1} parent=47 // pred_check
          %p358 = pneg %p66
        $region50: #{tpu_custom_call.1} parent=47 // pred_check_branch
          %360 = sbr.rel (%p358) target = $region52
        $region51: #{tpu_custom_call.1} parent=47 // pred_region
          %361 = dma.done %s354, 4096
        $region52: #{tpu_custom_call.1} parent=47 // pred_fallthru
          _
        // Predicated region
        $region53: #{tpu_custom_call.1} parent=47 // pred_check
          %p362 = pneg %p129
        $region54: #{tpu_custom_call.1} parent=47 // pred_check_branch
          %364 = sbr.rel (%p362) target = $region56
        $region55: #{tpu_custom_call.1} parent=47 // pred_region
          %365 = dma.done [#allocation6], 2048
        $region56: #{tpu_custom_call.1} parent=47 // pred_fallthru
          _
        %s366 = sand.u32 %s53, 1
        %s367 = scalar_lea.sflag [#allocation3], %s366
        %s368 = sand.u32 %s53, 1
        %s369 = smul.addr %s368, 256
        %s370 = scalar_lea.vmem [#allocation2], %s369
        %p371 = pneg %p66
        %p372 = pneg %p63
        %p373 = pneg %p87
        %p374 = pneg %p84
        %p375 = pneg %p108
        %p376 = pneg %p105
        %p377 = pneg %p129
        %p378 = pneg %p126
        %p379 = pneg %p150
        %p380 = pneg %p147
        %p381 = pneg %p171
        %p382 = pneg %p168
        %p383 = pneg %p192
        %p384 = pneg %p189
        %p385 = pneg %p220
        %p386 = pneg %p217
        %s387 = sand.u32 %s207, 1
        %s388 = scalar_lea.sflag [#allocation4], %s387
        %s389 = sand.u32 %s207, 1
        %s390 = smul.addr %s389, 256
        %s391 = scalar_lea.vmem [#allocation7], %s390
        %p392 = pneg %p248
        %p393 = pneg %p245
        %s394 = smul.u32 32, %s36
        %p395 = scmp.lt.s32.totalorder %s35, 1
        %s396 = scalar_select %p395, %s35, 1
        %p397 = scmp.lt.s32.totalorder %s394, 31
        %s398 = scalar_select %p397, %s394, 31
        %s399 = smul.addr %s396, 128
        %s400 = sadd.s32 %s398, %s399
        %s401 = smul.addr %s400, 8
        %s402 = scalar_lea.vmem %s8, %s401
        %p403 = pneg %p276
        %p404 = pneg %p273
        %s405 = sand.u32 %s263, 1
        %s406 = scalar_lea.sflag [#allocation9], %s405
        %s407 = sand.u32 %s263, 1
        %s408 = smul.addr %s407, 256
        %s409 = scalar_lea.vmem [#allocation8], %s408
        %s410 = smul.u32 32, %s36
        %s411 = smul.u32 2, %s36
        %s412 = smul.u32 32, %s36
        %p413 = scmp.lt.s32.totalorder %s35, 1
        %s414 = scalar_select %p413, %s35, 1
        %p415 = scmp.lt.s32.totalorder %s412, 31
        %s416 = scalar_select %p415, %s412, 31
        %s417 = smul.addr %s414, 128
        %s418 = sadd.s32 %s416, %s417
        %s419 = smul.addr %s418, 8
        %s420 = scalar_lea.vmem %s8, %s419
        %s421 = smul.u32 32, %s36
        %s422 = smul.u32 2, %s36
        %v423 = vld [vmem:[%s357] sm:$0xff]
        %v424 = vld [vmem:[%s357 + $0x8] sm:$0xff]
        %v425 = vld [vmem:[%s357 + $0x10] sm:$0xff]
        %v426 = vld [vmem:[%s357 + $0x18] sm:$0xff]
        %v427 = vld [vmem:[%s357 + $0x20] sm:$0xff]
        %v428 = vld [vmem:[%s357 + $0x28] sm:$0xff]
        %v429 = vld [vmem:[%s357 + $0x30] sm:$0xff]
        %v430 = vld [vmem:[%s357 + $0x38] sm:$0xff]
        %v431 = vld [vmem:[%s357 + $0x40] sm:$0xff]
        %v432 = vld [vmem:[%s357 + $0x48] sm:$0xff]
        %v433 = vld [vmem:[%s357 + $0x50] sm:$0xff]
        %v434 = vld [vmem:[%s357 + $0x58] sm:$0xff]
        %v435 = vld [vmem:[%s357 + $0x60] sm:$0xff]
        %v436 = vld [vmem:[%s357 + $0x68] sm:$0xff]
        %v437 = vld [vmem:[%s357 + $0x70] sm:$0xff]
        %v438 = vld [vmem:[%s357 + $0x78] sm:$0xff]
        %v439 = vld [vmem:[%s357 + $0x80] sm:$0xff]
        %v440 = vld [vmem:[%s357 + $0x88] sm:$0xff]
        %v441 = vld [vmem:[%s357 + $0x90] sm:$0xff]
        %v442 = vld [vmem:[%s357 + $0x98] sm:$0xff]
        %v443 = vld [vmem:[%s357 + $0xa0] sm:$0xff]
        %v444 = vld [vmem:[%s357 + $0xa8] sm:$0xff]
        %v445 = vld [vmem:[%s357 + $0xb0] sm:$0xff]
        %v446 = vld [vmem:[%s357 + $0xb8] sm:$0xff]
        %v447 = vld [vmem:[%s357 + $0xc0] sm:$0xff]
        %v448 = vld [vmem:[%s357 + $0xc8] sm:$0xff]
        %v449 = vld [vmem:[%s357 + $0xd0] sm:$0xff]
        %v450 = vld [vmem:[%s357 + $0xd8] sm:$0xff]
        %v451 = vld [vmem:[%s357 + $0xe0] sm:$0xff]
        %v452 = vld [vmem:[%s357 + $0xe8] sm:$0xff]
        %v453 = vld [vmem:[%s357 + $0xf0] sm:$0xff]
        %v454 = vld [vmem:[%s357 + $0xf8] sm:$0xff]
        %v455 = vld [vmem:[%s1] sm:$0xff]
        %v456 = vld [vmem:[%s1 + $0x8] sm:$0xff]
        %v457 = vld [vmem:[%s1 + $0x10] sm:$0xff]
        %v458 = vld [vmem:[%s1 + $0x18] sm:$0xff]
        %v459 = vld [vmem:[%s1 + $0x20] sm:$0xff]
        %v460 = vld [vmem:[%s1 + $0x28] sm:$0xff]
        %v461 = vld [vmem:[%s1 + $0x30] sm:$0xff]
        %v462 = vld [vmem:[%s1 + $0x38] sm:$0xff]
        %v463 = vld [vmem:[%s1 + $0x40] sm:$0xff]
        %v464 = vld [vmem:[%s1 + $0x48] sm:$0xff]
        %v465 = vld [vmem:[%s1 + $0x50] sm:$0xff]
        %v466 = vld [vmem:[%s1 + $0x58] sm:$0xff]
        %v467 = vld [vmem:[%s1 + $0x60] sm:$0xff]
        %v468 = vld [vmem:[%s1 + $0x68] sm:$0xff]
        %v469 = vld [vmem:[%s1 + $0x70] sm:$0xff]
        %v470 = vld [vmem:[%s1 + $0x78] sm:$0xff]
        %v471 = vld [vmem:[%s4] sm:$0xff]
        %v472 = vld [vmem:[%s4 + $0x8] sm:$0xff]
        %v473 = vld [vmem:[%s4 + $0x10] sm:$0xff]
        %v474 = vld [vmem:[%s4 + $0x18] sm:$0xff]
        %v475 = vld [vmem:[%s4 + $0x20] sm:$0xff]
        %v476 = vld [vmem:[%s4 + $0x28] sm:$0xff]
        %v477 = vld [vmem:[%s4 + $0x30] sm:$0xff]
        %v478 = vld [vmem:[%s4 + $0x38] sm:$0xff]
        %v479 = vld [vmem:[%s4 + $0x40] sm:$0xff]
        %v480 = vld [vmem:[%s4 + $0x48] sm:$0xff]
        %v481 = vld [vmem:[%s4 + $0x50] sm:$0xff]
        %v482 = vld [vmem:[%s4 + $0x58] sm:$0xff]
        %v483 = vld [vmem:[%s4 + $0x60] sm:$0xff]
        %v484 = vld [vmem:[%s4 + $0x68] sm:$0xff]
        %v485 = vld [vmem:[%s4 + $0x70] sm:$0xff]
        %v486 = vld [vmem:[%s4 + $0x78] sm:$0xff]
        %488 = vset.pattern.permute.xlu0 0
        %489 = vperm.xlu0 %488, %v471
        %v490 = vpop.permute.xlu0 %489
        %493 = vset.pattern.permute.xlu0 0
        %494 = vperm.xlu0 %493, %v472
        %v495 = vpop.permute.xlu0 %494
        %498 = vset.pattern.permute.xlu0 0
        %499 = vperm.xlu0 %498, %v473
        %v500 = vpop.permute.xlu0 %499
        %503 = vset.pattern.permute.xlu0 0
        %504 = vperm.xlu0 %503, %v474
        %v505 = vpop.permute.xlu0 %504
        %508 = vset.pattern.permute.xlu0 0
        %509 = vperm.xlu0 %508, %v475
        %v510 = vpop.permute.xlu0 %509
        %513 = vset.pattern.permute.xlu0 0
        %514 = vperm.xlu0 %513, %v476
        %v515 = vpop.permute.xlu0 %514
        %518 = vset.pattern.permute.xlu0 0
        %519 = vperm.xlu0 %518, %v477
        %v520 = vpop.permute.xlu0 %519
        %523 = vset.pattern.permute.xlu0 0
        %524 = vperm.xlu0 %523, %v478
        %v525 = vpop.permute.xlu0 %524
        %528 = vset.pattern.permute.xlu0 0
        %529 = vperm.xlu0 %528, %v479
        %v530 = vpop.permute.xlu0 %529
        %533 = vset.pattern.permute.xlu0 0
        %534 = vperm.xlu0 %533, %v480
        %v535 = vpop.permute.xlu0 %534
        %538 = vset.pattern.permute.xlu0 0
        %539 = vperm.xlu0 %538, %v481
        %v540 = vpop.permute.xlu0 %539
        %543 = vset.pattern.permute.xlu0 0
        %544 = vperm.xlu0 %543, %v482
        %v545 = vpop.permute.xlu0 %544
        %548 = vset.pattern.permute.xlu0 0
        %549 = vperm.xlu0 %548, %v483
        %v550 = vpop.permute.xlu0 %549
        %553 = vset.pattern.permute.xlu0 0
        %554 = vperm.xlu0 %553, %v484
        %v555 = vpop.permute.xlu0 %554
        %558 = vset.pattern.permute.xlu0 0
        %559 = vperm.xlu0 %558, %v485
        %v560 = vpop.permute.xlu0 %559
        %563 = vset.pattern.permute.xlu0 0
        %564 = vperm.xlu0 %563, %v486
        %v565 = vpop.permute.xlu0 %564
        %567 = vmatprep.subr.mxu0 0.0
        %568 = vmatpush1.xpose.msra.mxu0 %v423
        %569 = vmatprep.subr.mxu0 0.0
        %570 = vmatpush1.xpose.msra.mxu0 %v424
        %571 = vmatprep.subr.mxu0 0.0
        %572 = vmatpush1.xpose.msra.mxu0 %v425
        %573 = vmatprep.subr.mxu0 0.0
        %574 = vmatpush1.xpose.msra.mxu0 %v426
        %575 = vmatprep.subr.mxu0 0.0
        %576 = vmatpush1.xpose.msra.mxu0 %v427
        %577 = vmatprep.subr.mxu0 0.0
        %578 = vmatpush1.xpose.msra.mxu0 %v428
        %579 = vmatprep.subr.mxu0 0.0
        %580 = vmatpush1.xpose.msra.mxu0 %v429
        %581 = vmatprep.subr.mxu0 0.0
        %582 = vmatpush1.xpose.msra.mxu0 %v430
        %583 = vmatprep.subr.mxu0 0.0
        %584 = vmatpush1.xpose.msra.mxu0 %v431
        %585 = vmatprep.subr.mxu0 0.0
        %586 = vmatpush1.xpose.msra.mxu0 %v432
        %587 = vmatprep.subr.mxu0 0.0
        %588 = vmatpush1.xpose.msra.mxu0 %v433
        %589 = vmatprep.subr.mxu0 0.0
        %590 = vmatpush1.xpose.msra.mxu0 %v434
        %591 = vmatprep.subr.mxu0 0.0
        %592 = vmatpush1.xpose.msra.mxu0 %v435
        %593 = vmatprep.subr.mxu0 0.0
        %594 = vmatpush1.xpose.msra.mxu0 %v436
        %595 = vmatprep.subr.mxu0 0.0
        %596 = vmatpush1.xpose.msra.mxu0 %v437
        %597 = vmatprep.subr.mxu0 0.0
        %598 = vmatpush1.xpose.msra.mxu0 %v438
        %599 = vmatprep.subr.mxu0 0.0
        %600 = vmatpush1.xpose.msra.mxu0 %v439
        %601 = vmatprep.subr.mxu0 0.0
        %602 = vmatpush1.xpose.msra.mxu0 %v440
        %603 = vmatprep.subr.mxu0 0.0
        %604 = vmatpush1.xpose.msra.mxu0 %v441
        %605 = vmatprep.subr.mxu0 0.0
        %606 = vmatpush1.xpose.msra.mxu0 %v442
        %607 = vmatprep.subr.mxu0 0.0
        %608 = vmatpush1.xpose.msra.mxu0 %v443
        %609 = vmatprep.subr.mxu0 0.0
        %610 = vmatpush1.xpose.msra.mxu0 %v444
        %611 = vmatprep.subr.mxu0 0.0
        %612 = vmatpush1.xpose.msra.mxu0 %v445
        %613 = vmatprep.subr.mxu0 0.0
        %614 = vmatpush1.xpose.msra.mxu0 %v446
        %615 = vmatprep.subr.mxu0 0.0
        %616 = vmatpush1.xpose.msra.mxu0 %v447
        %617 = vmatprep.subr.mxu0 0.0
        %618 = vmatpush1.xpose.msra.mxu0 %v448
        %619 = vmatprep.subr.mxu0 0.0
        %620 = vmatpush1.xpose.msra.mxu0 %v449
        %621 = vmatprep.subr.mxu0 0.0
        %622 = vmatpush1.xpose.msra.mxu0 %v450
        %623 = vmatprep.subr.mxu0 0.0
        %624 = vmatpush1.xpose.msra.mxu0 %v451
        %625 = vmatprep.subr.mxu0 0.0
        %626 = vmatpush1.xpose.msra.mxu0 %v452
        %627 = vmatprep.subr.mxu0 0.0
        %628 = vmatpush1.xpose.msra.mxu0 %v453
        %629 = vmatprep.subr.mxu0 0.0
        %630 = vmatpush1.xpose.msra.mxu0 %v454
        %631 = vmatprep.mubr.f32.mxu0 0.0
        %632 = vmatmul.mubr.f32.gmra.mrb[0].mxu0 %v455
        %v633 = vpop.f32.mrb[0].mxu0
        %v634 = vadd.f32 %v490, %v633
        %v635 = vpop.f32.mrb[0].mxu0
        %v636 = vadd.f32 %v490, %v635
        %637 = vmatprep.mubr.f32.mxu0 0.0
        %638 = vmatmul.mubr.f32.gmra.mrb[0].mxu0 %v456
        %v639 = vpop.f32.mrb[0].mxu0
        %v640 = vadd.f32 %v495, %v639
        %v641 = vpop.f32.mrb[0].mxu0
        %v642 = vadd.f32 %v495, %v641
        %643 = vmatprep.mubr.f32.mxu0 0.0
        %644 = vmatmul.mubr.f32.gmra.mrb[0].mxu0 %v457
        %v645 = vpop.f32.mrb[0].mxu0
        %v646 = vadd.f32 %v500, %v645
        %v647 = vpop.f32.mrb[0].mxu0
        %v648 = vadd.f32 %v500, %v647
        %649 = vmatprep.mubr.f32.mxu0 0.0
        %650 = vmatmul.mubr.f32.gmra.mrb[0].mxu0 %v458
        %v651 = vpop.f32.mrb[0].mxu0
        %v652 = vadd.f32 %v505, %v651
        %v653 = vpop.f32.mrb[0].mxu0
        %v654 = vadd.f32 %v505, %v653
        %655 = vmatprep.mubr.f32.mxu0 0.0
        %656 = vmatmul.mubr.f32.gmra.mrb[0].mxu0 %v459
        %v657 = vpop.f32.mrb[0].mxu0
        %v658 = vadd.f32 %v510, %v657
        %v659 = vpop.f32.mrb[0].mxu0
        %v660 = vadd.f32 %v510, %v659
        %661 = vmatprep.mubr.f32.mxu0 0.0
        %662 = vmatmul.mubr.f32.gmra.mrb[0].mxu0 %v460
        %v663 = vpop.f32.mrb[0].mxu0
        %v664 = vadd.f32 %v515, %v663
        %v665 = vpop.f32.mrb[0].mxu0
        %v666 = vadd.f32 %v515, %v665
        %667 = vmatprep.mubr.f32.mxu0 0.0
        %668 = vmatmul.mubr.f32.gmra.mrb[0].mxu0 %v461
        %v669 = vpop.f32.mrb[0].mxu0
        %v670 = vadd.f32 %v520, %v669
        %v671 = vpop.f32.mrb[0].mxu0
        %v672 = vadd.f32 %v520, %v671
        %673 = vmatprep.mubr.f32.mxu0 0.0
        %674 = vmatmul.mubr.f32.gmra.mrb[0].mxu0 %v462
        %v675 = vpop.f32.mrb[0].mxu0
        %v676 = vadd.f32 %v525, %v675
        %v677 = vpop.f32.mrb[0].mxu0
        %v678 = vadd.f32 %v525, %v677
        %679 = vmatprep.mubr.f32.mxu0 0.0
        %680 = vmatmul.mubr.f32.gmra.mrb[0].mxu0 %v463
        %v681 = vpop.f32.mrb[0].mxu0
        %v682 = vadd.f32 %v530, %v681
        %v683 = vpop.f32.mrb[0].mxu0
        %v684 = vadd.f32 %v530, %v683
        %685 = vmatprep.mubr.f32.mxu0 0.0
        %686 = vmatmul.mubr.f32.gmra.mrb[0].mxu0 %v464
        %v687 = vpop.f32.mrb[0].mxu0
        %v688 = vadd.f32 %v535, %v687
        %v689 = vpop.f32.mrb[0].mxu0
        %v690 = vadd.f32 %v535, %v689
        %691 = vmatprep.mubr.f32.mxu0 0.0
        %692 = vmatmul.mubr.f32.gmra.mrb[0].mxu0 %v465
        %v693 = vpop.f32.mrb[0].mxu0
        %v694 = vadd.f32 %v540, %v693
        %v695 = vpop.f32.mrb[0].mxu0
        %v696 = vadd.f32 %v540, %v695
        %697 = vmatprep.mubr.f32.mxu0 0.0
        %698 = vmatmul.mubr.f32.gmra.mrb[0].mxu0 %v466
        %v699 = vpop.f32.mrb[0].mxu0
        %v700 = vadd.f32 %v545, %v699
        %v701 = vpop.f32.mrb[0].mxu0
        %v702 = vadd.f32 %v545, %v701
        %703 = vmatprep.mubr.f32.mxu0 0.0
        %704 = vmatmul.mubr.f32.gmra.mrb[0].mxu0 %v467
        %v705 = vpop.f32.mrb[0].mxu0
        %v706 = vadd.f32 %v550, %v705
        %v707 = vpop.f32.mrb[0].mxu0
        %v708 = vadd.f32 %v550, %v707
        %709 = vmatprep.mubr.f32.mxu0 0.0
        %710 = vmatmul.mubr.f32.gmra.mrb[0].mxu0 %v468
        %v711 = vpop.f32.mrb[0].mxu0
        %v712 = vadd.f32 %v555, %v711
        %v713 = vpop.f32.mrb[0].mxu0
        %v714 = vadd.f32 %v555, %v713
        %715 = vmatprep.mubr.f32.mxu0 0.0
        %716 = vmatmul.mubr.f32.gmra.mrb[0].mxu0 %v469
        %v717 = vpop.f32.mrb[0].mxu0
        %v718 = vadd.f32 %v560, %v717
        %v719 = vpop.f32.mrb[0].mxu0
        %v720 = vadd.f32 %v560, %v719
        %721 = vmatprep.mubr.f32.mxu0 0.0
        %722 = vmatmul.mubr.f32.gmra.mrb[0].mxu0 %v470
        %v723 = vpop.f32.mrb[0].mxu0
        %v724 = vadd.f32 %v565, %v723
        %v725 = vpop.f32.mrb[0].mxu0
        %v726 = vadd.f32 %v565, %v725
        %727 = vdwg.mxu0
        %728 = vst [vmem:[%s391] sm:$0xff] %v634
        %729 = vst [vmem:[%s391 + $0x8] sm:$0xff] %v636
        %730 = vst [vmem:[%s391 + $0x10] sm:$0xff] %v640
        %731 = vst [vmem:[%s391 + $0x18] sm:$0xff] %v642
        %732 = vst [vmem:[%s391 + $0x20] sm:$0xff] %v646
        %733 = vst [vmem:[%s391 + $0x28] sm:$0xff] %v648
        %734 = vst [vmem:[%s391 + $0x30] sm:$0xff] %v652
        %735 = vst [vmem:[%s391 + $0x38] sm:$0xff] %v654
        %736 = vst [vmem:[%s391 + $0x40] sm:$0xff] %v658
        %737 = vst [vmem:[%s391 + $0x48] sm:$0xff] %v660
        %738 = vst [vmem:[%s391 + $0x50] sm:$0xff] %v664
        %739 = vst [vmem:[%s391 + $0x58] sm:$0xff] %v666
        %740 = vst [vmem:[%s391 + $0x60] sm:$0xff] %v670
        %741 = vst [vmem:[%s391 + $0x68] sm:$0xff] %v672
        %742 = vst [vmem:[%s391 + $0x70] sm:$0xff] %v676
        %743 = vst [vmem:[%s391 + $0x78] sm:$0xff] %v678
        %744 = vst [vmem:[%s391 + $0x80] sm:$0xff] %v682
        %745 = vst [vmem:[%s391 + $0x88] sm:$0xff] %v684
        %746 = vst [vmem:[%s391 + $0x90] sm:$0xff] %v688
        %747 = vst [vmem:[%s391 + $0x98] sm:$0xff] %v690
        %748 = vst [vmem:[%s391 + $0xa0] sm:$0xff] %v694
        %749 = vst [vmem:[%s391 + $0xa8] sm:$0xff] %v696
        %750 = vst [vmem:[%s391 + $0xb0] sm:$0xff] %v700
        %751 = vst [vmem:[%s391 + $0xb8] sm:$0xff] %v702
        %752 = vst [vmem:[%s391 + $0xc0] sm:$0xff] %v706
        %753 = vst [vmem:[%s391 + $0xc8] sm:$0xff] %v708
        %754 = vst [vmem:[%s391 + $0xd0] sm:$0xff] %v712
        %755 = vst [vmem:[%s391 + $0xd8] sm:$0xff] %v714
        %756 = vst [vmem:[%s391 + $0xe0] sm:$0xff] %v718
        %757 = vst [vmem:[%s391 + $0xe8] sm:$0xff] %v720
        %758 = vst [vmem:[%s391 + $0xf0] sm:$0xff] %v724
        %759 = vst [vmem:[%s391 + $0xf8] sm:$0xff] %v726
        %v760 = vld [vmem:[#allocation5] sm:$0xff]
        %v761 = vld [vmem:[#allocation5 + $0x8] sm:$0xff]
        %v762 = vld [vmem:[#allocation5 + $0x10] sm:$0xff]
        %v763 = vld [vmem:[#allocation5 + $0x18] sm:$0xff]
        %v764 = vld [vmem:[#allocation5 + $0x20] sm:$0xff]
        %v765 = vld [vmem:[#allocation5 + $0x28] sm:$0xff]
        %v766 = vld [vmem:[#allocation5 + $0x30] sm:$0xff]
        %v767 = vld [vmem:[#allocation5 + $0x38] sm:$0xff]
        %v768 = vld [vmem:[#allocation5 + $0x40] sm:$0xff]
        %v769 = vld [vmem:[#allocation5 + $0x48] sm:$0xff]
        %v770 = vld [vmem:[#allocation5 + $0x50] sm:$0xff]
        %v771 = vld [vmem:[#allocation5 + $0x58] sm:$0xff]
        %v772 = vld [vmem:[#allocation5 + $0x60] sm:$0xff]
        %v773 = vld [vmem:[#allocation5 + $0x68] sm:$0xff]
        %v774 = vld [vmem:[#allocation5 + $0x70] sm:$0xff]
        %v775 = vld [vmem:[#allocation5 + $0x78] sm:$0xff]
        %v776 = vld [vmem:[%s6] sm:$0xff]
        %v777 = vld [vmem:[%s6 + $0x8] sm:$0xff]
        %v778 = vld [vmem:[%s6 + $0x10] sm:$0xff]
        %v779 = vld [vmem:[%s6 + $0x18] sm:$0xff]
        %v780 = vld [vmem:[%s6 + $0x20] sm:$0xff]
        %v781 = vld [vmem:[%s6 + $0x28] sm:$0xff]
        %v782 = vld [vmem:[%s6 + $0x30] sm:$0xff]
        %v783 = vld [vmem:[%s6 + $0x38] sm:$0xff]
        %v784 = vld [vmem:[%s6 + $0x40] sm:$0xff]
        %v785 = vld [vmem:[%s6 + $0x48] sm:$0xff]
        %v786 = vld [vmem:[%s6 + $0x50] sm:$0xff]
        %v787 = vld [vmem:[%s6 + $0x58] sm:$0xff]
        %v788 = vld [vmem:[%s6 + $0x60] sm:$0xff]
        %v789 = vld [vmem:[%s6 + $0x68] sm:$0xff]
        %v790 = vld [vmem:[%s6 + $0x70] sm:$0xff]
        %v791 = vld [vmem:[%s6 + $0x78] sm:$0xff]
        %793 = vset.pattern.permute.xlu0 0
        %794 = vperm.xlu0 %793, %v776
        %v795 = vpop.permute.xlu0 %794
        %798 = vset.pattern.permute.xlu0 0
        %799 = vperm.xlu0 %798, %v777
        %v800 = vpop.permute.xlu0 %799
        %803 = vset.pattern.permute.xlu0 0
        %804 = vperm.xlu0 %803, %v778
        %v805 = vpop.permute.xlu0 %804
        %808 = vset.pattern.permute.xlu0 0
        %809 = vperm.xlu0 %808, %v779
        %v810 = vpop.permute.xlu0 %809
        %813 = vset.pattern.permute.xlu0 0
        %814 = vperm.xlu0 %813, %v780
        %v815 = vpop.permute.xlu0 %814
        %818 = vset.pattern.permute.xlu0 0
        %819 = vperm.xlu0 %818, %v781
        %v820 = vpop.permute.xlu0 %819
        %823 = vset.pattern.permute.xlu0 0
        %824 = vperm.xlu0 %823, %v782
        %v825 = vpop.permute.xlu0 %824
        %828 = vset.pattern.permute.xlu0 0
        %829 = vperm.xlu0 %828, %v783
        %v830 = vpop.permute.xlu0 %829
        %833 = vset.pattern.permute.xlu0 0
        %834 = vperm.xlu0 %833, %v784
        %v835 = vpop.permute.xlu0 %834
        %838 = vset.pattern.permute.xlu0 0
        %839 = vperm.xlu0 %838, %v785
        %v840 = vpop.permute.xlu0 %839
        %843 = vset.pattern.permute.xlu0 0
        %844 = vperm.xlu0 %843, %v786
        %v845 = vpop.permute.xlu0 %844
        %848 = vset.pattern.permute.xlu0 0
        %849 = vperm.xlu0 %848, %v787
        %v850 = vpop.permute.xlu0 %849
        %853 = vset.pattern.permute.xlu0 0
        %854 = vperm.xlu0 %853, %v788
        %v855 = vpop.permute.xlu0 %854
        %858 = vset.pattern.permute.xlu0 0
        %859 = vperm.xlu0 %858, %v789
        %v860 = vpop.permute.xlu0 %859
        %863 = vset.pattern.permute.xlu0 0
        %864 = vperm.xlu0 %863, %v790
        %v865 = vpop.permute.xlu0 %864
        %868 = vset.pattern.permute.xlu0 0
        %869 = vperm.xlu0 %868, %v791
        %v870 = vpop.permute.xlu0 %869
        %872 = vmatprep.subr.mxu0 0.0
        %873 = vmatpush1.xpose.msra.mxu0 %v423
        %874 = vmatprep.subr.mxu0 0.0
        %875 = vmatpush1.xpose.msra.mxu0 %v424
        %876 = vmatprep.subr.mxu0 0.0
        %877 = vmatpush1.xpose.msra.mxu0 %v425
        %878 = vmatprep.subr.mxu0 0.0
        %879 = vmatpush1.xpose.msra.mxu0 %v426
        %880 = vmatprep.subr.mxu0 0.0
        %881 = vmatpush1.xpose.msra.mxu0 %v427
        %882 = vmatprep.subr.mxu0 0.0
        %883 = vmatpush1.xpose.msra.mxu0 %v428
        %884 = vmatprep.subr.mxu0 0.0
        %885 = vmatpush1.xpose.msra.mxu0 %v429
        %886 = vmatprep.subr.mxu0 0.0
        %887 = vmatpush1.xpose.msra.mxu0 %v430
        %888 = vmatprep.subr.mxu0 0.0
        %889 = vmatpush1.xpose.msra.mxu0 %v431
        %890 = vmatprep.subr.mxu0 0.0
        %891 = vmatpush1.xpose.msra.mxu0 %v432
        %892 = vmatprep.subr.mxu0 0.0
        %893 = vmatpush1.xpose.msra.mxu0 %v433
        %894 = vmatprep.subr.mxu0 0.0
        %895 = vmatpush1.xpose.msra.mxu0 %v434
        %896 = vmatprep.subr.mxu0 0.0
        %897 = vmatpush1.xpose.msra.mxu0 %v435
        %898 = vmatprep.subr.mxu0 0.0
        %899 = vmatpush1.xpose.msra.mxu0 %v436
        %900 = vmatprep.subr.mxu0 0.0
        %901 = vmatpush1.xpose.msra.mxu0 %v437
        %902 = vmatprep.subr.mxu0 0.0
        %903 = vmatpush1.xpose.msra.mxu0 %v438
        %904 = vmatprep.subr.mxu0 0.0
        %905 = vmatpush1.xpose.msra.mxu0 %v439
        %906 = vmatprep.subr.mxu0 0.0
        %907 = vmatpush1.xpose.msra.mxu0 %v440
        %908 = vmatprep.subr.mxu0 0.0
        %909 = vmatpush1.xpose.msra.mxu0 %v441
        %910 = vmatprep.subr.mxu0 0.0
        %911 = vmatpush1.xpose.msra.mxu0 %v442
        %912 = vmatprep.subr.mxu0 0.0
        %913 = vmatpush1.xpose.msra.mxu0 %v443
        %914 = vmatprep.subr.mxu0 0.0
        %915 = vmatpush1.xpose.msra.mxu0 %v444
        %916 = vmatprep.subr.mxu0 0.0
        %917 = vmatpush1.xpose.msra.mxu0 %v445
        %918 = vmatprep.subr.mxu0 0.0
        %919 = vmatpush1.xpose.msra.mxu0 %v446
        %920 = vmatprep.subr.mxu0 0.0
        %921 = vmatpush1.xpose.msra.mxu0 %v447
        %922 = vmatprep.subr.mxu0 0.0
        %923 = vmatpush1.xpose.msra.mxu0 %v448
        %924 = vmatprep.subr.mxu0 0.0
        %925 = vmatpush1.xpose.msra.mxu0 %v449
        %926 = vmatprep.subr.mxu0 0.0
        %927 = vmatpush1.xpose.msra.mxu0 %v450
        %928 = vmatprep.subr.mxu0 0.0
        %929 = vmatpush1.xpose.msra.mxu0 %v451
        %930 = vmatprep.subr.mxu0 0.0
        %931 = vmatpush1.xpose.msra.mxu0 %v452
        %932 = vmatprep.subr.mxu0 0.0
        %933 = vmatpush1.xpose.msra.mxu0 %v453
        %934 = vmatprep.subr.mxu0 0.0
        %935 = vmatpush1.xpose.msra.mxu0 %v454
        %936 = vmatprep.mubr.f32.mxu0 0.0
        %937 = vmatmul.mubr.f32.gmra.mrb[0].mxu0 %v760
        %v938 = vpop.f32.mrb[0].mxu0
        %v939 = vadd.f32 %v795, %v938
        %v940 = vpop.f32.mrb[0].mxu0
        %v941 = vadd.f32 %v795, %v940
        %942 = vmatprep.mubr.f32.mxu0 0.0
        %943 = vmatmul.mubr.f32.gmra.mrb[0].mxu0 %v761
        %v944 = vpop.f32.mrb[0].mxu0
        %v945 = vadd.f32 %v800, %v944
        %v946 = vpop.f32.mrb[0].mxu0
        %v947 = vadd.f32 %v800, %v946
        %948 = vmatprep.mubr.f32.mxu0 0.0
        %949 = vmatmul.mubr.f32.gmra.mrb[0].mxu0 %v762
        %v950 = vpop.f32.mrb[0].mxu0
        %v951 = vadd.f32 %v805, %v950
        %v952 = vpop.f32.mrb[0].mxu0
        %v953 = vadd.f32 %v805, %v952
        %954 = vmatprep.mubr.f32.mxu0 0.0
        %955 = vmatmul.mubr.f32.gmra.mrb[0].mxu0 %v763
        %v956 = vpop.f32.mrb[0].mxu0
        %v957 = vadd.f32 %v810, %v956
        %v958 = vpop.f32.mrb[0].mxu0
        %v959 = vadd.f32 %v810, %v958
        %960 = vmatprep.mubr.f32.mxu0 0.0
        %961 = vmatmul.mubr.f32.gmra.mrb[0].mxu0 %v764
        %v962 = vpop.f32.mrb[0].mxu0
        %v963 = vadd.f32 %v815, %v962
        %v964 = vpop.f32.mrb[0].mxu0
        %v965 = vadd.f32 %v815, %v964
        %966 = vmatprep.mubr.f32.mxu0 0.0
        %967 = vmatmul.mubr.f32.gmra.mrb[0].mxu0 %v765
        %v968 = vpop.f32.mrb[0].mxu0
        %v969 = vadd.f32 %v820, %v968
        %v970 = vpop.f32.mrb[0].mxu0
        %v971 = vadd.f32 %v820, %v970
        %972 = vmatprep.mubr.f32.mxu0 0.0
        %973 = vmatmul.mubr.f32.gmra.mrb[0].mxu0 %v766
        %v974 = vpop.f32.mrb[0].mxu0
        %v975 = vadd.f32 %v825, %v974
        %v976 = vpop.f32.mrb[0].mxu0
        %v977 = vadd.f32 %v825, %v976
        %978 = vmatprep.mubr.f32.mxu0 0.0
        %979 = vmatmul.mubr.f32.gmra.mrb[0].mxu0 %v767
        %v980 = vpop.f32.mrb[0].mxu0
        %v981 = vadd.f32 %v830, %v980
        %v982 = vpop.f32.mrb[0].mxu0
        %v983 = vadd.f32 %v830, %v982
        %984 = vmatprep.mubr.f32.mxu0 0.0
        %985 = vmatmul.mubr.f32.gmra.mrb[0].mxu0 %v768
        %v986 = vpop.f32.mrb[0].mxu0
        %v987 = vadd.f32 %v835, %v986
        %v988 = vpop.f32.mrb[0].mxu0
        %v989 = vadd.f32 %v835, %v988
        %990 = vmatprep.mubr.f32.mxu0 0.0
        %991 = vmatmul.mubr.f32.gmra.mrb[0].mxu0 %v769
        %v992 = vpop.f32.mrb[0].mxu0
        %v993 = vadd.f32 %v840, %v992
        %v994 = vpop.f32.mrb[0].mxu0
        %v995 = vadd.f32 %v840, %v994
        %996 = vmatprep.mubr.f32.mxu0 0.0
        %997 = vmatmul.mubr.f32.gmra.mrb[0].mxu0 %v770
        %v998 = vpop.f32.mrb[0].mxu0
        %v999 = vadd.f32 %v845, %v998
        %v1000 = vpop.f32.mrb[0].mxu0
        %v1001 = vadd.f32 %v845, %v1000
        %1002 = vmatprep.mubr.f32.mxu0 0.0
        %1003 = vmatmul.mubr.f32.gmra.mrb[0].mxu0 %v771
        %v1004 = vpop.f32.mrb[0].mxu0
        %v1005 = vadd.f32 %v850, %v1004
        %v1006 = vpop.f32.mrb[0].mxu0
        %v1007 = vadd.f32 %v850, %v1006
        %1008 = vmatprep.mubr.f32.mxu0 0.0
        %1009 = vmatmul.mubr.f32.gmra.mrb[0].mxu0 %v772
        %v1010 = vpop.f32.mrb[0].mxu0
        %v1011 = vadd.f32 %v855, %v1010
        %v1012 = vpop.f32.mrb[0].mxu0
        %v1013 = vadd.f32 %v855, %v1012
        %1014 = vmatprep.mubr.f32.mxu0 0.0
        %1015 = vmatmul.mubr.f32.gmra.mrb[0].mxu0 %v773
        %v1016 = vpop.f32.mrb[0].mxu0
        %v1017 = vadd.f32 %v860, %v1016
        %v1018 = vpop.f32.mrb[0].mxu0
        %v1019 = vadd.f32 %v860, %v1018
        %1020 = vmatprep.mubr.f32.mxu0 0.0
        %1021 = vmatmul.mubr.f32.gmra.mrb[0].mxu0 %v774
        %v1022 = vpop.f32.mrb[0].mxu0
        %v1023 = vadd.f32 %v865, %v1022
        %v1024 = vpop.f32.mrb[0].mxu0
        %v1025 = vadd.f32 %v865, %v1024
        %1026 = vmatprep.mubr.f32.mxu0 0.0
        %1027 = vmatmul.mubr.f32.gmra.mrb[0].mxu0 %v775
        %v1028 = vpop.f32.mrb[0].mxu0
        %v1029 = vadd.f32 %v870, %v1028
        %v1030 = vpop.f32.mrb[0].mxu0
        %v1031 = vadd.f32 %v870, %v1030
        %1032 = vdwg.mxu0
        %1033 = vst [vmem:[%s409] sm:$0xff] %v939
        %1034 = vst [vmem:[%s409 + $0x8] sm:$0xff] %v941
        %1035 = vst [vmem:[%s409 + $0x10] sm:$0xff] %v945
        %1036 = vst [vmem:[%s409 + $0x18] sm:$0xff] %v947
        %1037 = vst [vmem:[%s409 + $0x20] sm:$0xff] %v951
        %1038 = vst [vmem:[%s409 + $0x28] sm:$0xff] %v953
        %1039 = vst [vmem:[%s409 + $0x30] sm:$0xff] %v957
        %1040 = vst [vmem:[%s409 + $0x38] sm:$0xff] %v959
        %1041 = vst [vmem:[%s409 + $0x40] sm:$0xff] %v963
        %1042 = vst [vmem:[%s409 + $0x48] sm:$0xff] %v965
        %1043 = vst [vmem:[%s409 + $0x50] sm:$0xff] %v969
        %1044 = vst [vmem:[%s409 + $0x58] sm:$0xff] %v971
        %1045 = vst [vmem:[%s409 + $0x60] sm:$0xff] %v975
        %1046 = vst [vmem:[%s409 + $0x68] sm:$0xff] %v977
        %1047 = vst [vmem:[%s409 + $0x70] sm:$0xff] %v981
        %1048 = vst [vmem:[%s409 + $0x78] sm:$0xff] %v983
        %1049 = vst [vmem:[%s409 + $0x80] sm:$0xff] %v987
        %1050 = vst [vmem:[%s409 + $0x88] sm:$0xff] %v989
        %1051 = vst [vmem:[%s409 + $0x90] sm:$0xff] %v993
        %1052 = vst [vmem:[%s409 + $0x98] sm:$0xff] %v995
        %1053 = vst [vmem:[%s409 + $0xa0] sm:$0xff] %v999
        %1054 = vst [vmem:[%s409 + $0xa8] sm:$0xff] %v1001
        %1055 = vst [vmem:[%s409 + $0xb0] sm:$0xff] %v1005
        %1056 = vst [vmem:[%s409 + $0xb8] sm:$0xff] %v1007
        %1057 = vst [vmem:[%s409 + $0xc0] sm:$0xff] %v1011
        %1058 = vst [vmem:[%s409 + $0xc8] sm:$0xff] %v1013
        %1059 = vst [vmem:[%s409 + $0xd0] sm:$0xff] %v1017
        %1060 = vst [vmem:[%s409 + $0xd8] sm:$0xff] %v1019
        %1061 = vst [vmem:[%s409 + $0xe0] sm:$0xff] %v1023
        %1062 = vst [vmem:[%s409 + $0xe8] sm:$0xff] %v1025
        %1063 = vst [vmem:[%s409 + $0xf0] sm:$0xff] %v1029
        %1064 = vst [vmem:[%s409 + $0xf8] sm:$0xff] %v1031
        %v1065 = vld [vmem:[%s2] sm:$0xff]
        %v1066 = vld [vmem:[%s2 + $0x8] sm:$0xff]
        %v1067 = vld [vmem:[%s2 + $0x10] sm:$0xff]
        %v1068 = vld [vmem:[%s2 + $0x18] sm:$0xff]
        %v1069 = vld [vmem:[%s2 + $0x20] sm:$0xff]
        %v1070 = vld [vmem:[%s2 + $0x28] sm:$0xff]
        %v1071 = vld [vmem:[%s2 + $0x30] sm:$0xff]
        %v1072 = vld [vmem:[%s2 + $0x38] sm:$0xff]
        %v1073 = vld [vmem:[%s2 + $0x40] sm:$0xff]
        %v1074 = vld [vmem:[%s2 + $0x48] sm:$0xff]
        %v1075 = vld [vmem:[%s2 + $0x50] sm:$0xff]
        %v1076 = vld [vmem:[%s2 + $0x58] sm:$0xff]
        %v1077 = vld [vmem:[%s2 + $0x60] sm:$0xff]
        %v1078 = vld [vmem:[%s2 + $0x68] sm:$0xff]
        %v1079 = vld [vmem:[%s2 + $0x70] sm:$0xff]
        %v1080 = vld [vmem:[%s2 + $0x78] sm:$0xff]
        %v1081 = vld [vmem:[%s5] sm:$0x1]
        %v1083 = vlaneseq
        %v1084 = vshrl.u32 %v1083, 7
        %v1085 = vsub.s32 0, %v1084
        %v1086 = vrot.slane %v1081, %v1085
        %1088 = vmatprep.subr.mxu0 0.0
        %1089 = vmatpush1.msra.mxu0 %v1065
        %1090 = vmatprep.subr.mxu0 0.0
        %1091 = vmatpush1.msra.mxu0 %v1066
        %1092 = vmatprep.subr.mxu0 0.0
        %1093 = vmatpush1.msra.mxu0 %v1067
        %1094 = vmatprep.subr.mxu0 0.0
        %1095 = vmatpush1.msra.mxu0 %v1068
        %1096 = vmatprep.subr.mxu0 0.0
        %1097 = vmatpush1.msra.mxu0 %v1069
        %1098 = vmatprep.subr.mxu0 0.0
        %1099 = vmatpush1.msra.mxu0 %v1070
        %1100 = vmatprep.subr.mxu0 0.0
        %1101 = vmatpush1.msra.mxu0 %v1071
        %1102 = vmatprep.subr.mxu0 0.0
        %1103 = vmatpush1.msra.mxu0 %v1072
        %1104 = vmatprep.subr.mxu0 0.0
        %1105 = vmatpush1.msra.mxu0 %v1073
        %1106 = vmatprep.subr.mxu0 0.0
        %1107 = vmatpush1.msra.mxu0 %v1074
        %1108 = vmatprep.subr.mxu0 0.0
        %1109 = vmatpush1.msra.mxu0 %v1075
        %1110 = vmatprep.subr.mxu0 0.0
        %1111 = vmatpush1.msra.mxu0 %v1076
        %1112 = vmatprep.subr.mxu0 0.0
        %1113 = vmatpush1.msra.mxu0 %v1077
        %1114 = vmatprep.subr.mxu0 0.0
        %1115 = vmatpush1.msra.mxu0 %v1078
        %1116 = vmatprep.subr.mxu0 0.0
        %1117 = vmatpush1.msra.mxu0 %v1079
        %1118 = vmatprep.subr.mxu0 0.0
        %1119 = vmatpush1.msra.mxu0 %v1080
        %1120 = vmatprep.subr.mxu0 0.0
        %1121 = vmatpush1.msra.mxu0 0.0
        %1122 = vmatprep.subr.mxu0 0.0
        %1123 = vmatpush1.msra.mxu0 0.0
        %1124 = vmatprep.subr.mxu0 0.0
        %1125 = vmatpush1.msra.mxu0 0.0
        %1126 = vmatprep.subr.mxu0 0.0
        %1127 = vmatpush1.msra.mxu0 0.0
        %1128 = vmatprep.subr.mxu0 0.0
        %1129 = vmatpush1.msra.mxu0 0.0
        %1130 = vmatprep.subr.mxu0 0.0
        %1131 = vmatpush1.msra.mxu0 0.0
        %1132 = vmatprep.subr.mxu0 0.0
        %1133 = vmatpush1.msra.mxu0 0.0
        %1134 = vmatprep.subr.mxu0 0.0
        %1135 = vmatpush1.msra.mxu0 0.0
        %1136 = vmatprep.subr.mxu0 0.0
        %1137 = vmatpush1.msra.mxu0 0.0
        %1138 = vmatprep.subr.mxu0 0.0
        %1139 = vmatpush1.msra.mxu0 0.0
        %1140 = vmatprep.subr.mxu0 0.0
        %1141 = vmatpush1.msra.mxu0 0.0
        %1142 = vmatprep.subr.mxu0 0.0
        %1143 = vmatpush1.msra.mxu0 0.0
        %1144 = vmatprep.subr.mxu0 0.0
        %1145 = vmatpush1.msra.mxu0 0.0
        %1146 = vmatprep.subr.mxu0 0.0
        %1147 = vmatpush1.msra.mxu0 0.0
        %1148 = vmatprep.subr.mxu0 0.0
        %1149 = vmatpush1.msra.mxu0 0.0
        %1150 = vmatprep.subr.mxu0 0.0
        %1151 = vmatpush1.msra.mxu0 0.0
        %1152 = vmatprep.mubr.f32.mxu0 0.0
        %1153 = vmatmul.mubr.f32.gmra.mrb[0].mxu0 %v423
        %v1154 = vpop.f32.mrb[0].mxu0
        %v1155 = vadd.f32 %v1086, %v1154
        %v1156 = vpop.f32.mrb[0].mxu0
        %1157 = vmatprep.mubr.f32.mxu0 0.0
        %1158 = vmatmul.mubr.f32.gmra.mrb[0].mxu0 %v424
        %v1159 = vpop.f32.mrb[0].mxu0
        %v1160 = vadd.f32 %v1086, %v1159
        %v1161 = vpop.f32.mrb[0].mxu0
        %1162 = vmatprep.mubr.f32.mxu0 0.0
        %1163 = vmatmul.mubr.f32.gmra.mrb[0].mxu0 %v425
        %v1164 = vpop.f32.mrb[0].mxu0
        %v1165 = vadd.f32 %v1086, %v1164
        %v1166 = vpop.f32.mrb[0].mxu0
        %1167 = vmatprep.mubr.f32.mxu0 0.0
        %1168 = vmatmul.mubr.f32.gmra.mrb[0].mxu0 %v426
        %v1169 = vpop.f32.mrb[0].mxu0
        %v1170 = vadd.f32 %v1086, %v1169
        %v1171 = vpop.f32.mrb[0].mxu0
        %1172 = vmatprep.mubr.f32.mxu0 0.0
        %1173 = vmatmul.mubr.f32.gmra.mrb[0].mxu0 %v427
        %v1174 = vpop.f32.mrb[0].mxu0
        %v1175 = vadd.f32 %v1086, %v1174
        %v1176 = vpop.f32.mrb[0].mxu0
        %1177 = vmatprep.mubr.f32.mxu0 0.0
        %1178 = vmatmul.mubr.f32.gmra.mrb[0].mxu0 %v428
        %v1179 = vpop.f32.mrb[0].mxu0
        %v1180 = vadd.f32 %v1086, %v1179
        %v1181 = vpop.f32.mrb[0].mxu0
        %1182 = vmatprep.mubr.f32.mxu0 0.0
        %1183 = vmatmul.mubr.f32.gmra.mrb[0].mxu0 %v429
        %v1184 = vpop.f32.mrb[0].mxu0
        %v1185 = vadd.f32 %v1086, %v1184
        %v1186 = vpop.f32.mrb[0].mxu0
        %1187 = vmatprep.mubr.f32.mxu0 0.0
        %1188 = vmatmul.mubr.f32.gmra.mrb[0].mxu0 %v430
        %v1189 = vpop.f32.mrb[0].mxu0
        %v1190 = vadd.f32 %v1086, %v1189
        %v1191 = vpop.f32.mrb[0].mxu0
        %1192 = vmatprep.mubr.f32.mxu0 0.0
        %1193 = vmatmul.mubr.f32.gmra.mrb[0].mxu0 %v431
        %v1194 = vpop.f32.mrb[0].mxu0
        %v1195 = vadd.f32 %v1086, %v1194
        %v1196 = vpop.f32.mrb[0].mxu0
        %1197 = vmatprep.mubr.f32.mxu0 0.0
        %1198 = vmatmul.mubr.f32.gmra.mrb[0].mxu0 %v432
        %v1199 = vpop.f32.mrb[0].mxu0
        %v1200 = vadd.f32 %v1086, %v1199
        %v1201 = vpop.f32.mrb[0].mxu0
        %1202 = vmatprep.mubr.f32.mxu0 0.0
        %1203 = vmatmul.mubr.f32.gmra.mrb[0].mxu0 %v433
        %v1204 = vpop.f32.mrb[0].mxu0
        %v1205 = vadd.f32 %v1086, %v1204
        %v1206 = vpop.f32.mrb[0].mxu0
        %1207 = vmatprep.mubr.f32.mxu0 0.0
        %1208 = vmatmul.mubr.f32.gmra.mrb[0].mxu0 %v434
        %v1209 = vpop.f32.mrb[0].mxu0
        %v1210 = vadd.f32 %v1086, %v1209
        %v1211 = vpop.f32.mrb[0].mxu0
        %1212 = vmatprep.mubr.f32.mxu0 0.0
        %1213 = vmatmul.mubr.f32.gmra.mrb[0].mxu0 %v435
        %v1214 = vpop.f32.mrb[0].mxu0
        %v1215 = vadd.f32 %v1086, %v1214
        %v1216 = vpop.f32.mrb[0].mxu0
        %1217 = vmatprep.mubr.f32.mxu0 0.0
        %1218 = vmatmul.mubr.f32.gmra.mrb[0].mxu0 %v436
        %v1219 = vpop.f32.mrb[0].mxu0
        %v1220 = vadd.f32 %v1086, %v1219
        %v1221 = vpop.f32.mrb[0].mxu0
        %1222 = vmatprep.mubr.f32.mxu0 0.0
        %1223 = vmatmul.mubr.f32.gmra.mrb[0].mxu0 %v437
        %v1224 = vpop.f32.mrb[0].mxu0
        %v1225 = vadd.f32 %v1086, %v1224
        %v1226 = vpop.f32.mrb[0].mxu0
        %1227 = vmatprep.mubr.f32.mxu0 0.0
        %1228 = vmatmul.mubr.f32.gmra.mrb[0].mxu0 %v438
        %v1229 = vpop.f32.mrb[0].mxu0
        %v1230 = vadd.f32 %v1086, %v1229
        %v1231 = vpop.f32.mrb[0].mxu0
        %1232 = vmatprep.mubr.f32.mxu0 0.0
        %1233 = vmatmul.mubr.f32.gmra.mrb[0].mxu0 %v439
        %v1234 = vpop.f32.mrb[0].mxu0
        %v1235 = vadd.f32 %v1086, %v1234
        %v1236 = vpop.f32.mrb[0].mxu0
        %1237 = vmatprep.mubr.f32.mxu0 0.0
        %1238 = vmatmul.mubr.f32.gmra.mrb[0].mxu0 %v440
        %v1239 = vpop.f32.mrb[0].mxu0
        %v1240 = vadd.f32 %v1086, %v1239
        %v1241 = vpop.f32.mrb[0].mxu0
        %1242 = vmatprep.mubr.f32.mxu0 0.0
        %1243 = vmatmul.mubr.f32.gmra.mrb[0].mxu0 %v441
        %v1244 = vpop.f32.mrb[0].mxu0
        %v1245 = vadd.f32 %v1086, %v1244
        %v1246 = vpop.f32.mrb[0].mxu0
        %1247 = vmatprep.mubr.f32.mxu0 0.0
        %1248 = vmatmul.mubr.f32.gmra.mrb[0].mxu0 %v442
        %v1249 = vpop.f32.mrb[0].mxu0
        %v1250 = vadd.f32 %v1086, %v1249
        %v1251 = vpop.f32.mrb[0].mxu0
        %1252 = vmatprep.mubr.f32.mxu0 0.0
        %1253 = vmatmul.mubr.f32.gmra.mrb[0].mxu0 %v443
        %v1254 = vpop.f32.mrb[0].mxu0
        %v1255 = vadd.f32 %v1086, %v1254
        %v1256 = vpop.f32.mrb[0].mxu0
        %1257 = vmatprep.mubr.f32.mxu0 0.0
        %1258 = vmatmul.mubr.f32.gmra.mrb[0].mxu0 %v444
        %v1259 = vpop.f32.mrb[0].mxu0
        %v1260 = vadd.f32 %v1086, %v1259
        %v1261 = vpop.f32.mrb[0].mxu0
        %1262 = vmatprep.mubr.f32.mxu0 0.0
        %1263 = vmatmul.mubr.f32.gmra.mrb[0].mxu0 %v445
        %v1264 = vpop.f32.mrb[0].mxu0
        %v1265 = vadd.f32 %v1086, %v1264
        %v1266 = vpop.f32.mrb[0].mxu0
        %1267 = vmatprep.mubr.f32.mxu0 0.0
        %1268 = vmatmul.mubr.f32.gmra.mrb[0].mxu0 %v446
        %v1269 = vpop.f32.mrb[0].mxu0
        %v1270 = vadd.f32 %v1086, %v1269
        %v1271 = vpop.f32.mrb[0].mxu0
        %1272 = vmatprep.mubr.f32.mxu0 0.0
        %1273 = vmatmul.mubr.f32.gmra.mrb[0].mxu0 %v447
        %v1274 = vpop.f32.mrb[0].mxu0
        %v1275 = vadd.f32 %v1086, %v1274
        %v1276 = vpop.f32.mrb[0].mxu0
        %1277 = vmatprep.mubr.f32.mxu0 0.0
        %1278 = vmatmul.mubr.f32.gmra.mrb[0].mxu0 %v448
        %v1279 = vpop.f32.mrb[0].mxu0
        %v1280 = vadd.f32 %v1086, %v1279
        %v1281 = vpop.f32.mrb[0].mxu0
        %1282 = vmatprep.mubr.f32.mxu0 0.0
        %1283 = vmatmul.mubr.f32.gmra.mrb[0].mxu0 %v449
        %v1284 = vpop.f32.mrb[0].mxu0
        %v1285 = vadd.f32 %v1086, %v1284
        %v1286 = vpop.f32.mrb[0].mxu0
        %1287 = vmatprep.mubr.f32.mxu0 0.0
        %1288 = vmatmul.mubr.f32.gmra.mrb[0].mxu0 %v450
        %v1289 = vpop.f32.mrb[0].mxu0
        %v1290 = vadd.f32 %v1086, %v1289
        %v1291 = vpop.f32.mrb[0].mxu0
        %1292 = vmatprep.mubr.f32.mxu0 0.0
        %1293 = vmatmul.mubr.f32.gmra.mrb[0].mxu0 %v451
        %v1294 = vpop.f32.mrb[0].mxu0
        %v1295 = vadd.f32 %v1086, %v1294
        %v1296 = vpop.f32.mrb[0].mxu0
        %1297 = vmatprep.mubr.f32.mxu0 0.0
        %1298 = vmatmul.mubr.f32.gmra.mrb[0].mxu0 %v452
        %v1299 = vpop.f32.mrb[0].mxu0
        %v1300 = vadd.f32 %v1086, %v1299
        %v1301 = vpop.f32.mrb[0].mxu0
        %1302 = vmatprep.mubr.f32.mxu0 0.0
        %1303 = vmatmul.mubr.f32.gmra.mrb[0].mxu0 %v453
        %v1304 = vpop.f32.mrb[0].mxu0
        %v1305 = vadd.f32 %v1086, %v1304
        %v1306 = vpop.f32.mrb[0].mxu0
        %1307 = vmatprep.mubr.f32.mxu0 0.0
        %1308 = vmatmul.mubr.f32.gmra.mrb[0].mxu0 %v454
        %v1309 = vpop.f32.mrb[0].mxu0
        %v1310 = vadd.f32 %v1086, %v1309
        %v1311 = vpop.f32.mrb[0].mxu0
        %1312 = vdwg.mxu0
        %vm1313 = vcmask 261120
        %1314 = vst.msk [vmem:[%s420] sm:$0xff] %vm1313, %v1155
        %1315 = vst.msk [vmem:[%s420 + $0x8] sm:$0xff] %vm1313, %v1160
        %1316 = vst.msk [vmem:[%s420 + $0x10] sm:$0xff] %vm1313, %v1165
        %1317 = vst.msk [vmem:[%s420 + $0x18] sm:$0xff] %vm1313, %v1170
        %1318 = vst.msk [vmem:[%s420 + $0x20] sm:$0xff] %vm1313, %v1175
        %1319 = vst.msk [vmem:[%s420 + $0x28] sm:$0xff] %vm1313, %v1180
        %1320 = vst.msk [vmem:[%s420 + $0x30] sm:$0xff] %vm1313, %v1185
        %1321 = vst.msk [vmem:[%s420 + $0x38] sm:$0xff] %vm1313, %v1190
        %1322 = vst.msk [vmem:[%s420 + $0x40] sm:$0xff] %vm1313, %v1195
        %1323 = vst.msk [vmem:[%s420 + $0x48] sm:$0xff] %vm1313, %v1200
        %1324 = vst.msk [vmem:[%s420 + $0x50] sm:$0xff] %vm1313, %v1205
        %1325 = vst.msk [vmem:[%s420 + $0x58] sm:$0xff] %vm1313, %v1210
        %1326 = vst.msk [vmem:[%s420 + $0x60] sm:$0xff] %vm1313, %v1215
        %1327 = vst.msk [vmem:[%s420 + $0x68] sm:$0xff] %vm1313, %v1220
        %1328 = vst.msk [vmem:[%s420 + $0x70] sm:$0xff] %vm1313, %v1225
        %1329 = vst.msk [vmem:[%s420 + $0x78] sm:$0xff] %vm1313, %v1230
        %1330 = vst.msk [vmem:[%s420 + $0x80] sm:$0xff] %vm1313, %v1235
        %1331 = vst.msk [vmem:[%s420 + $0x88] sm:$0xff] %vm1313, %v1240
        %1332 = vst.msk [vmem:[%s420 + $0x90] sm:$0xff] %vm1313, %v1245
        %1333 = vst.msk [vmem:[%s420 + $0x98] sm:$0xff] %vm1313, %v1250
        %1334 = vst.msk [vmem:[%s420 + $0xa0] sm:$0xff] %vm1313, %v1255
        %1335 = vst.msk [vmem:[%s420 + $0xa8] sm:$0xff] %vm1313, %v1260
        %1336 = vst.msk [vmem:[%s420 + $0xb0] sm:$0xff] %vm1313, %v1265
        %1337 = vst.msk [vmem:[%s420 + $0xb8] sm:$0xff] %vm1313, %v1270
        %1338 = vst.msk [vmem:[%s420 + $0xc0] sm:$0xff] %vm1313, %v1275
        %1339 = vst.msk [vmem:[%s420 + $0xc8] sm:$0xff] %vm1313, %v1280
        %1340 = vst.msk [vmem:[%s420 + $0xd0] sm:$0xff] %vm1313, %v1285
        %1341 = vst.msk [vmem:[%s420 + $0xd8] sm:$0xff] %vm1313, %v1290
        %1342 = vst.msk [vmem:[%s420 + $0xe0] sm:$0xff] %vm1313, %v1295
        %1343 = vst.msk [vmem:[%s420 + $0xe8] sm:$0xff] %vm1313, %v1300
        %1344 = vst.msk [vmem:[%s420 + $0xf0] sm:$0xff] %vm1313, %v1305
        %1345 = vst.msk [vmem:[%s420 + $0xf8] sm:$0xff] %vm1313, %v1310
        %1378 = vrot.lane.b32.xlu0 %v1155, 96
        %v1379 = vpop.permute.xlu0 %1378
        %1380 = vrot.lane.b32.xlu0 %v1160, 96
        %v1381 = vpop.permute.xlu0 %1380
        %1382 = vrot.lane.b32.xlu0 %v1165, 96
        %v1383 = vpop.permute.xlu0 %1382
        %1384 = vrot.lane.b32.xlu0 %v1170, 96
        %v1385 = vpop.permute.xlu0 %1384
        %1386 = vrot.lane.b32.xlu0 %v1175, 96
        %v1387 = vpop.permute.xlu0 %1386
        %1388 = vrot.lane.b32.xlu0 %v1180, 96
        %v1389 = vpop.permute.xlu0 %1388
        %1390 = vrot.lane.b32.xlu0 %v1185, 96
        %v1391 = vpop.permute.xlu0 %1390
        %1392 = vrot.lane.b32.xlu0 %v1190, 96
        %v1393 = vpop.permute.xlu0 %1392
        %1394 = vrot.lane.b32.xlu0 %v1195, 96
        %v1395 = vpop.permute.xlu0 %1394
        %1396 = vrot.lane.b32.xlu0 %v1200, 96
        %v1397 = vpop.permute.xlu0 %1396
        %1398 = vrot.lane.b32.xlu0 %v1205, 96
        %v1399 = vpop.permute.xlu0 %1398
        %1400 = vrot.lane.b32.xlu0 %v1210, 96
        %v1401 = vpop.permute.xlu0 %1400
        %1402 = vrot.lane.b32.xlu0 %v1215, 96
        %v1403 = vpop.permute.xlu0 %1402
        %1404 = vrot.lane.b32.xlu0 %v1220, 96
        %v1405 = vpop.permute.xlu0 %1404
        %1406 = vrot.lane.b32.xlu0 %v1225, 96
        %v1407 = vpop.permute.xlu0 %1406
        %1408 = vrot.lane.b32.xlu0 %v1230, 96
        %v1409 = vpop.permute.xlu0 %1408
        %1410 = vrot.lane.b32.xlu0 %v1235, 96
        %v1411 = vpop.permute.xlu0 %1410
        %1412 = vrot.lane.b32.xlu0 %v1240, 96
        %v1413 = vpop.permute.xlu0 %1412
        %1414 = vrot.lane.b32.xlu0 %v1245, 96
        %v1415 = vpop.permute.xlu0 %1414
        %1416 = vrot.lane.b32.xlu0 %v1250, 96
        %v1417 = vpop.permute.xlu0 %1416
        %1418 = vrot.lane.b32.xlu0 %v1255, 96
        %v1419 = vpop.permute.xlu0 %1418
        %1420 = vrot.lane.b32.xlu0 %v1260, 96
        %v1421 = vpop.permute.xlu0 %1420
        %1422 = vrot.lane.b32.xlu0 %v1265, 96
        %v1423 = vpop.permute.xlu0 %1422
        %1424 = vrot.lane.b32.xlu0 %v1270, 96
        %v1425 = vpop.permute.xlu0 %1424
        %1426 = vrot.lane.b32.xlu0 %v1275, 96
        %v1427 = vpop.permute.xlu0 %1426
        %1428 = vrot.lane.b32.xlu0 %v1280, 96
        %v1429 = vpop.permute.xlu0 %1428
        %1430 = vrot.lane.b32.xlu0 %v1285, 96
        %v1431 = vpop.permute.xlu0 %1430
        %1432 = vrot.lane.b32.xlu0 %v1290, 96
        %v1433 = vpop.permute.xlu0 %1432
        %1434 = vrot.lane.b32.xlu0 %v1295, 96
        %v1435 = vpop.permute.xlu0 %1434
        %1436 = vrot.lane.b32.xlu0 %v1300, 96
        %v1437 = vpop.permute.xlu0 %1436
        %1438 = vrot.lane.b32.xlu0 %v1305, 96
        %v1439 = vpop.permute.xlu0 %1438
        %1440 = vrot.lane.b32.xlu0 %v1310, 96
        %v1441 = vpop.permute.xlu0 %1440
        %s1474 = scalar_lea.vmem %s420, 256
        %1475 = vst.msk [vmem:[%s1474] sm:$0xff] %vm1313, %v1379
        %1476 = vst.msk [vmem:[%s1474 + $0x8] sm:$0xff] %vm1313, %v1381
        %1477 = vst.msk [vmem:[%s1474 + $0x10] sm:$0xff] %vm1313, %v1383
        %1478 = vst.msk [vmem:[%s1474 + $0x18] sm:$0xff] %vm1313, %v1385
        %1479 = vst.msk [vmem:[%s1474 + $0x20] sm:$0xff] %vm1313, %v1387
        %1480 = vst.msk [vmem:[%s1474 + $0x28] sm:$0xff] %vm1313, %v1389
        %1481 = vst.msk [vmem:[%s1474 + $0x30] sm:$0xff] %vm1313, %v1391
        %1482 = vst.msk [vmem:[%s1474 + $0x38] sm:$0xff] %vm1313, %v1393
        %1483 = vst.msk [vmem:[%s1474 + $0x40] sm:$0xff] %vm1313, %v1395
        %1484 = vst.msk [vmem:[%s1474 + $0x48] sm:$0xff] %vm1313, %v1397
        %1485 = vst.msk [vmem:[%s1474 + $0x50] sm:$0xff] %vm1313, %v1399
        %1486 = vst.msk [vmem:[%s1474 + $0x58] sm:$0xff] %vm1313, %v1401
        %1487 = vst.msk [vmem:[%s1474 + $0x60] sm:$0xff] %vm1313, %v1403
        %1488 = vst.msk [vmem:[%s1474 + $0x68] sm:$0xff] %vm1313, %v1405
        %1489 = vst.msk [vmem:[%s1474 + $0x70] sm:$0xff] %vm1313, %v1407
        %1490 = vst.msk [vmem:[%s1474 + $0x78] sm:$0xff] %vm1313, %v1409
        %1491 = vst.msk [vmem:[%s1474 + $0x80] sm:$0xff] %vm1313, %v1411
        %1492 = vst.msk [vmem:[%s1474 + $0x88] sm:$0xff] %vm1313, %v1413
        %1493 = vst.msk [vmem:[%s1474 + $0x90] sm:$0xff] %vm1313, %v1415
        %1494 = vst.msk [vmem:[%s1474 + $0x98] sm:$0xff] %vm1313, %v1417
        %1495 = vst.msk [vmem:[%s1474 + $0xa0] sm:$0xff] %vm1313, %v1419
        %1496 = vst.msk [vmem:[%s1474 + $0xa8] sm:$0xff] %vm1313, %v1421
        %1497 = vst.msk [vmem:[%s1474 + $0xb0] sm:$0xff] %vm1313, %v1423
        %1498 = vst.msk [vmem:[%s1474 + $0xb8] sm:$0xff] %vm1313, %v1425
        %1499 = vst.msk [vmem:[%s1474 + $0xc0] sm:$0xff] %vm1313, %v1427
        %1500 = vst.msk [vmem:[%s1474 + $0xc8] sm:$0xff] %vm1313, %v1429
        %1501 = vst.msk [vmem:[%s1474 + $0xd0] sm:$0xff] %vm1313, %v1431
        %1502 = vst.msk [vmem:[%s1474 + $0xd8] sm:$0xff] %vm1313, %v1433
        %1503 = vst.msk [vmem:[%s1474 + $0xe0] sm:$0xff] %vm1313, %v1435
        %1504 = vst.msk [vmem:[%s1474 + $0xe8] sm:$0xff] %vm1313, %v1437
        %1505 = vst.msk [vmem:[%s1474 + $0xf0] sm:$0xff] %vm1313, %v1439
        %1506 = vst.msk [vmem:[%s1474 + $0xf8] sm:$0xff] %vm1313, %v1441
        %1507 = vrot.lane.b32.xlu0 %v1155, 64
        %v1508 = vpop.permute.xlu0 %1507
        %1509 = vrot.lane.b32.xlu0 %v1160, 64
        %v1510 = vpop.permute.xlu0 %1509
        %1511 = vrot.lane.b32.xlu0 %v1165, 64
        %v1512 = vpop.permute.xlu0 %1511
        %1513 = vrot.lane.b32.xlu0 %v1170, 64
        %v1514 = vpop.permute.xlu0 %1513
        %1515 = vrot.lane.b32.xlu0 %v1175, 64
        %v1516 = vpop.permute.xlu0 %1515
        %1517 = vrot.lane.b32.xlu0 %v1180, 64
        %v1518 = vpop.permute.xlu0 %1517
        %1519 = vrot.lane.b32.xlu0 %v1185, 64
        %v1520 = vpop.permute.xlu0 %1519
        %1521 = vrot.lane.b32.xlu0 %v1190, 64
        %v1522 = vpop.permute.xlu0 %1521
        %1523 = vrot.lane.b32.xlu0 %v1195, 64
        %v1524 = vpop.permute.xlu0 %1523
        %1525 = vrot.lane.b32.xlu0 %v1200, 64
        %v1526 = vpop.permute.xlu0 %1525
        %1527 = vrot.lane.b32.xlu0 %v1205, 64
        %v1528 = vpop.permute.xlu0 %1527
        %1529 = vrot.lane.b32.xlu0 %v1210, 64
        %v1530 = vpop.permute.xlu0 %1529
        %1531 = vrot.lane.b32.xlu0 %v1215, 64
        %v1532 = vpop.permute.xlu0 %1531
        %1533 = vrot.lane.b32.xlu0 %v1220, 64
        %v1534 = vpop.permute.xlu0 %1533
        %1535 = vrot.lane.b32.xlu0 %v1225, 64
        %v1536 = vpop.permute.xlu0 %1535
        %1537 = vrot.lane.b32.xlu0 %v1230, 64
        %v1538 = vpop.permute.xlu0 %1537
        %1539 = vrot.lane.b32.xlu0 %v1235, 64
        %v1540 = vpop.permute.xlu0 %1539
        %1541 = vrot.lane.b32.xlu0 %v1240, 64
        %v1542 = vpop.permute.xlu0 %1541
        %1543 = vrot.lane.b32.xlu0 %v1245, 64
        %v1544 = vpop.permute.xlu0 %1543
        %1545 = vrot.lane.b32.xlu0 %v1250, 64
        %v1546 = vpop.permute.xlu0 %1545
        %1547 = vrot.lane.b32.xlu0 %v1255, 64
        %v1548 = vpop.permute.xlu0 %1547
        %1549 = vrot.lane.b32.xlu0 %v1260, 64
        %v1550 = vpop.permute.xlu0 %1549
        %1551 = vrot.lane.b32.xlu0 %v1265, 64
        %v1552 = vpop.permute.xlu0 %1551
        %1553 = vrot.lane.b32.xlu0 %v1270, 64
        %v1554 = vpop.permute.xlu0 %1553
        %1555 = vrot.lane.b32.xlu0 %v1275, 64
        %v1556 = vpop.permute.xlu0 %1555
        %1557 = vrot.lane.b32.xlu0 %v1280, 64
        %v1558 = vpop.permute.xlu0 %1557
        %1559 = vrot.lane.b32.xlu0 %v1285, 64
        %v1560 = vpop.permute.xlu0 %1559
        %1561 = vrot.lane.b32.xlu0 %v1290, 64
        %v1562 = vpop.permute.xlu0 %1561
        %1563 = vrot.lane.b32.xlu0 %v1295, 64
        %v1564 = vpop.permute.xlu0 %1563
        %1565 = vrot.lane.b32.xlu0 %v1300, 64
        %v1566 = vpop.permute.xlu0 %1565
        %1567 = vrot.lane.b32.xlu0 %v1305, 64
        %v1568 = vpop.permute.xlu0 %1567
        %1569 = vrot.lane.b32.xlu0 %v1310, 64
        %v1570 = vpop.permute.xlu0 %1569
        %s1603 = scalar_lea.vmem %s420, 512
        %1604 = vst.msk [vmem:[%s1603] sm:$0xff] %vm1313, %v1508
        %1605 = vst.msk [vmem:[%s1603 + $0x8] sm:$0xff] %vm1313, %v1510
        %1606 = vst.msk [vmem:[%s1603 + $0x10] sm:$0xff] %vm1313, %v1512
        %1607 = vst.msk [vmem:[%s1603 + $0x18] sm:$0xff] %vm1313, %v1514
        %1608 = vst.msk [vmem:[%s1603 + $0x20] sm:$0xff] %vm1313, %v1516
        %1609 = vst.msk [vmem:[%s1603 + $0x28] sm:$0xff] %vm1313, %v1518
        %1610 = vst.msk [vmem:[%s1603 + $0x30] sm:$0xff] %vm1313, %v1520
        %1611 = vst.msk [vmem:[%s1603 + $0x38] sm:$0xff] %vm1313, %v1522
        %1612 = vst.msk [vmem:[%s1603 + $0x40] sm:$0xff] %vm1313, %v1524
        %1613 = vst.msk [vmem:[%s1603 + $0x48] sm:$0xff] %vm1313, %v1526
        %1614 = vst.msk [vmem:[%s1603 + $0x50] sm:$0xff] %vm1313, %v1528
        %1615 = vst.msk [vmem:[%s1603 + $0x58] sm:$0xff] %vm1313, %v1530
        %1616 = vst.msk [vmem:[%s1603 + $0x60] sm:$0xff] %vm1313, %v1532
        %1617 = vst.msk [vmem:[%s1603 + $0x68] sm:$0xff] %vm1313, %v1534
        %1618 = vst.msk [vmem:[%s1603 + $0x70] sm:$0xff] %vm1313, %v1536
        %1619 = vst.msk [vmem:[%s1603 + $0x78] sm:$0xff] %vm1313, %v1538
        %1620 = vst.msk [vmem:[%s1603 + $0x80] sm:$0xff] %vm1313, %v1540
        %1621 = vst.msk [vmem:[%s1603 + $0x88] sm:$0xff] %vm1313, %v1542
        %1622 = vst.msk [vmem:[%s1603 + $0x90] sm:$0xff] %vm1313, %v1544
        %1623 = vst.msk [vmem:[%s1603 + $0x98] sm:$0xff] %vm1313, %v1546
        %1624 = vst.msk [vmem:[%s1603 + $0xa0] sm:$0xff] %vm1313, %v1548
        %1625 = vst.msk [vmem:[%s1603 + $0xa8] sm:$0xff] %vm1313, %v1550
        %1626 = vst.msk [vmem:[%s1603 + $0xb0] sm:$0xff] %vm1313, %v1552
        %1627 = vst.msk [vmem:[%s1603 + $0xb8] sm:$0xff] %vm1313, %v1554
        %1628 = vst.msk [vmem:[%s1603 + $0xc0] sm:$0xff] %vm1313, %v1556
        %1629 = vst.msk [vmem:[%s1603 + $0xc8] sm:$0xff] %vm1313, %v1558
        %1630 = vst.msk [vmem:[%s1603 + $0xd0] sm:$0xff] %vm1313, %v1560
        %1631 = vst.msk [vmem:[%s1603 + $0xd8] sm:$0xff] %vm1313, %v1562
        %1632 = vst.msk [vmem:[%s1603 + $0xe0] sm:$0xff] %vm1313, %v1564
        %1633 = vst.msk [vmem:[%s1603 + $0xe8] sm:$0xff] %vm1313, %v1566
        %1634 = vst.msk [vmem:[%s1603 + $0xf0] sm:$0xff] %vm1313, %v1568
        %1635 = vst.msk [vmem:[%s1603 + $0xf8] sm:$0xff] %vm1313, %v1570
        %1636 = vrot.lane.b32.xlu0 %v1155, 32
        %v1637 = vpop.permute.xlu0 %1636
        %1638 = vrot.lane.b32.xlu0 %v1160, 32
        %v1639 = vpop.permute.xlu0 %1638
        %1640 = vrot.lane.b32.xlu0 %v1165, 32
        %v1641 = vpop.permute.xlu0 %1640
        %1642 = vrot.lane.b32.xlu0 %v1170, 32
        %v1643 = vpop.permute.xlu0 %1642
        %1644 = vrot.lane.b32.xlu0 %v1175, 32
        %v1645 = vpop.permute.xlu0 %1644
        %1646 = vrot.lane.b32.xlu0 %v1180, 32
        %v1647 = vpop.permute.xlu0 %1646
        %1648 = vrot.lane.b32.xlu0 %v1185, 32
        %v1649 = vpop.permute.xlu0 %1648
        %1650 = vrot.lane.b32.xlu0 %v1190, 32
        %v1651 = vpop.permute.xlu0 %1650
        %1652 = vrot.lane.b32.xlu0 %v1195, 32
        %v1653 = vpop.permute.xlu0 %1652
        %1654 = vrot.lane.b32.xlu0 %v1200, 32
        %v1655 = vpop.permute.xlu0 %1654
        %1656 = vrot.lane.b32.xlu0 %v1205, 32
        %v1657 = vpop.permute.xlu0 %1656
        %1658 = vrot.lane.b32.xlu0 %v1210, 32
        %v1659 = vpop.permute.xlu0 %1658
        %1660 = vrot.lane.b32.xlu0 %v1215, 32
        %v1661 = vpop.permute.xlu0 %1660
        %1662 = vrot.lane.b32.xlu0 %v1220, 32
        %v1663 = vpop.permute.xlu0 %1662
        %1664 = vrot.lane.b32.xlu0 %v1225, 32
        %v1665 = vpop.permute.xlu0 %1664
        %1666 = vrot.lane.b32.xlu0 %v1230, 32
        %v1667 = vpop.permute.xlu0 %1666
        %1668 = vrot.lane.b32.xlu0 %v1235, 32
        %v1669 = vpop.permute.xlu0 %1668
        %1670 = vrot.lane.b32.xlu0 %v1240, 32
        %v1671 = vpop.permute.xlu0 %1670
        %1672 = vrot.lane.b32.xlu0 %v1245, 32
        %v1673 = vpop.permute.xlu0 %1672
        %1674 = vrot.lane.b32.xlu0 %v1250, 32
        %v1675 = vpop.permute.xlu0 %1674
        %1676 = vrot.lane.b32.xlu0 %v1255, 32
        %v1677 = vpop.permute.xlu0 %1676
        %1678 = vrot.lane.b32.xlu0 %v1260, 32
        %v1679 = vpop.permute.xlu0 %1678
        %1680 = vrot.lane.b32.xlu0 %v1265, 32
        %v1681 = vpop.permute.xlu0 %1680
        %1682 = vrot.lane.b32.xlu0 %v1270, 32
        %v1683 = vpop.permute.xlu0 %1682
        %1684 = vrot.lane.b32.xlu0 %v1275, 32
        %v1685 = vpop.permute.xlu0 %1684
        %1686 = vrot.lane.b32.xlu0 %v1280, 32
        %v1687 = vpop.permute.xlu0 %1686
        %1688 = vrot.lane.b32.xlu0 %v1285, 32
        %v1689 = vpop.permute.xlu0 %1688
        %1690 = vrot.lane.b32.xlu0 %v1290, 32
        %v1691 = vpop.permute.xlu0 %1690
        %1692 = vrot.lane.b32.xlu0 %v1295, 32
        %v1693 = vpop.permute.xlu0 %1692
        %1694 = vrot.lane.b32.xlu0 %v1300, 32
        %v1695 = vpop.permute.xlu0 %1694
        %1696 = vrot.lane.b32.xlu0 %v1305, 32
        %v1697 = vpop.permute.xlu0 %1696
        %1698 = vrot.lane.b32.xlu0 %v1310, 32
        %v1699 = vpop.permute.xlu0 %1698
        %s1732 = scalar_lea.vmem %s420, 768
        %1733 = vst.msk [vmem:[%s1732] sm:$0xff] %vm1313, %v1637
        %1734 = vst.msk [vmem:[%s1732 + $0x8] sm:$0xff] %vm1313, %v1639
        %1735 = vst.msk [vmem:[%s1732 + $0x10] sm:$0xff] %vm1313, %v1641
        %1736 = vst.msk [vmem:[%s1732 + $0x18] sm:$0xff] %vm1313, %v1643
        %1737 = vst.msk [vmem:[%s1732 + $0x20] sm:$0xff] %vm1313, %v1645
        %1738 = vst.msk [vmem:[%s1732 + $0x28] sm:$0xff] %vm1313, %v1647
        %1739 = vst.msk [vmem:[%s1732 + $0x30] sm:$0xff] %vm1313, %v1649
        %1740 = vst.msk [vmem:[%s1732 + $0x38] sm:$0xff] %vm1313, %v1651
        %1741 = vst.msk [vmem:[%s1732 + $0x40] sm:$0xff] %vm1313, %v1653
        %1742 = vst.msk [vmem:[%s1732 + $0x48] sm:$0xff] %vm1313, %v1655
        %1743 = vst.msk [vmem:[%s1732 + $0x50] sm:$0xff] %vm1313, %v1657
        %1744 = vst.msk [vmem:[%s1732 + $0x58] sm:$0xff] %vm1313, %v1659
        %1745 = vst.msk [vmem:[%s1732 + $0x60] sm:$0xff] %vm1313, %v1661
        %1746 = vst.msk [vmem:[%s1732 + $0x68] sm:$0xff] %vm1313, %v1663
        %1747 = vst.msk [vmem:[%s1732 + $0x70] sm:$0xff] %vm1313, %v1665
        %1748 = vst.msk [vmem:[%s1732 + $0x78] sm:$0xff] %vm1313, %v1667
        %1749 = vst.msk [vmem:[%s1732 + $0x80] sm:$0xff] %vm1313, %v1669
        %1750 = vst.msk [vmem:[%s1732 + $0x88] sm:$0xff] %vm1313, %v1671
        %1751 = vst.msk [vmem:[%s1732 + $0x90] sm:$0xff] %vm1313, %v1673
        %1752 = vst.msk [vmem:[%s1732 + $0x98] sm:$0xff] %vm1313, %v1675
        %1753 = vst.msk [vmem:[%s1732 + $0xa0] sm:$0xff] %vm1313, %v1677
        %1754 = vst.msk [vmem:[%s1732 + $0xa8] sm:$0xff] %vm1313, %v1679
        %1755 = vst.msk [vmem:[%s1732 + $0xb0] sm:$0xff] %vm1313, %v1681
        %1756 = vst.msk [vmem:[%s1732 + $0xb8] sm:$0xff] %vm1313, %v1683
        %1757 = vst.msk [vmem:[%s1732 + $0xc0] sm:$0xff] %vm1313, %v1685
        %1758 = vst.msk [vmem:[%s1732 + $0xc8] sm:$0xff] %vm1313, %v1687
        %1759 = vst.msk [vmem:[%s1732 + $0xd0] sm:$0xff] %vm1313, %v1689
        %1760 = vst.msk [vmem:[%s1732 + $0xd8] sm:$0xff] %vm1313, %v1691
        %1761 = vst.msk [vmem:[%s1732 + $0xe0] sm:$0xff] %vm1313, %v1693
        %1762 = vst.msk [vmem:[%s1732 + $0xe8] sm:$0xff] %vm1313, %v1695
        %1763 = vst.msk [vmem:[%s1732 + $0xf0] sm:$0xff] %vm1313, %v1697
        %1764 = vst.msk [vmem:[%s1732 + $0xf8] sm:$0xff] %vm1313, %v1699
        %s1765 = sand.u32 %s207, 1
        %s1766 = scalar_lea.sflag [#allocation4], %s1765
        %s1767 = sand.u32 %s207, 1
        %s1768 = smul.addr %s1767, 256
        %s1769 = scalar_lea.vmem [#allocation7], %s1768
        %s1770 = smul.u32 32, %s36
        %p1771 = scmp.lt.s32.totalorder %s35, 1
        %s1772 = scalar_select %p1771, %s35, 1
        %p1773 = scmp.lt.s32.totalorder %s1770, 31
        %s1774 = scalar_select %p1773, %s1770, 31
        %s1775 = smul.addr %s1772, 128
        %s1776 = sadd.s32 %s1774, %s1775
        %s1777 = smul.addr %s1776, 8
        %s1778 = scalar_lea.vmem %s8, %s1777
        %s1779 = sand.u32 %s263, 1
        %s1780 = scalar_lea.sflag [#allocation9], %s1779
        %s1781 = sand.u32 %s263, 1
        %s1782 = smul.addr %s1781, 256
        %s1783 = scalar_lea.vmem [#allocation8], %s1782
        // Predicated region
        $region57: #{tpu_custom_call.1} parent=47 // pred_check
          %p1784 = pneg %p217
        $region58: #{tpu_custom_call.1} parent=47 // pred_check_branch
          %1786 = sbr.rel (%p1784) target = $region60
        $region59: #{tpu_custom_call.1} parent=47 // pred_region
          %s1787 = smul.u32 2, %s36
          %s1789 = ssub.s32 4096, 4096
          %1790 = vsyncadd %s1766, %s1789
          %s1791 = smul.addr %s35, 32
          %s1792 = sadd.s32 %s1787, %s1791
          %s1793 = smul.addr %s1792, 128
          %s1794 = scalar_lea.hbm %s7, %s1793
          %s1795 = sshll.u32 %s1769, 4
          %s1796 = int_to_ptr.vmem [resolvable:$true] %s1795
          %1801 = dma.vmem_to_hbm [thread:$0]  %s1796, 4096, %s1794, %s1766, 256, 256, 16
        $region60: #{tpu_custom_call.1} parent=47 // pred_fallthru
          _
        // Predicated region
        $region61: #{tpu_custom_call.1} parent=47 // pred_check
          %p1802 = pneg %p245
        $region62: #{tpu_custom_call.1} parent=47 // pred_check_branch
          %1804 = sbr.rel (%p1802) target = $region64
        $region63: #{tpu_custom_call.1} parent=47 // pred_region
          %s1805 = smul.u32 32, %s36
        $region64: #{tpu_custom_call.1} parent=47 // pred_fallthru
          _
        // Predicated region
        $region65: #{tpu_custom_call.1} parent=47 // pred_check
          %p1806 = pneg %p273
        $region66: #{tpu_custom_call.1} parent=47 // pred_check_branch
          %1808 = sbr.rel (%p1806) target = $region68
        $region67: #{tpu_custom_call.1} parent=47 // pred_region
          %s1809 = smul.u32 2, %s36
          %s1811 = ssub.s32 4096, 4096
          %1812 = vsyncadd %s1780, %s1811
          %s1813 = smul.addr %s35, 32
          %s1814 = sadd.s32 %s1809, %s1813
          %s1815 = smul.addr %s1814, 128
          %s1816 = scalar_lea.hbm %s9, %s1815
          %s1817 = sshll.u32 %s1783, 4
          %s1818 = int_to_ptr.vmem [resolvable:$true] %s1817
          %1823 = dma.vmem_to_hbm [thread:$0]  %s1818, 4096, %s1816, %s1780, 256, 256, 16
        $region68: #{tpu_custom_call.1} parent=47 // pred_fallthru
          _
      $region48: #{tpu_custom_call.1} parent=5 // pred_fallthru
        _
      %p1824 = scmp.le.s32.totalorder 2, %s26
      // Predicated region
      $region69: #{tpu_custom_call.1} parent=5 // pred_check
        %p1825 = pneg %p1824
      $region70: #{tpu_custom_call.1} parent=5 // pred_check_branch
        %1827 = sbr.rel (%p1825) target = $region72
      $region71: #{tpu_custom_call.1} parent=5 // pred_region
        %s1828 = ssub.s32 %s26, 2
        // Predicated region
        $region73: #{tpu_custom_call.1} parent=71 // pred_check
          %p1829 = pneg %p223
        $region74: #{tpu_custom_call.1} parent=71 // pred_check_branch
          %1831 = sbr.rel (%p1829) target = $region76
        $region75: #{tpu_custom_call.1} parent=71 // pred_region
          %s1832 = sand.u32 %s208, 1
          %s1833 = scalar_lea.sflag [#allocation4], %s1832
          %s1834 = sand.u32 %s208, 1
          %s1835 = smul.addr %s1834, 256
          %s1836 = scalar_lea.vmem [#allocation7], %s1835
          %1837 = dma.done %s1833, 4096
        $region76: #{tpu_custom_call.1} parent=71 // pred_fallthru
          _
        // Predicated region
        $region77: #{tpu_custom_call.1} parent=71 // pred_check
          %p1838 = pneg %p251
        $region78: #{tpu_custom_call.1} parent=71 // pred_check_branch
          %1840 = sbr.rel (%p1838) target = $region80
        $region79: #{tpu_custom_call.1} parent=71 // pred_region
          %s1841 = smul.u32 32, %s38
          %p1842 = scmp.lt.s32.totalorder %s37, 1
          %s1843 = scalar_select %p1842, %s37, 1
          %p1844 = scmp.lt.s32.totalorder %s1841, 31
          %s1845 = scalar_select %p1844, %s1841, 31
          %s1846 = smul.addr %s1843, 128
          %s1847 = sadd.s32 %s1845, %s1846
          %s1848 = smul.addr %s1847, 8
          %s1849 = scalar_lea.vmem %s8, %s1848
        $region80: #{tpu_custom_call.1} parent=71 // pred_fallthru
          _
        // Predicated region
        $region81: #{tpu_custom_call.1} parent=71 // pred_check
          %p1850 = pneg %p279
        $region82: #{tpu_custom_call.1} parent=71 // pred_check_branch
          %1852 = sbr.rel (%p1850) target = $region84
        $region83: #{tpu_custom_call.1} parent=71 // pred_region
          %s1853 = sand.u32 %s264, 1
          %s1854 = scalar_lea.sflag [#allocation9], %s1853
          %s1855 = sand.u32 %s264, 1
          %s1856 = smul.addr %s1855, 256
          %s1857 = scalar_lea.vmem [#allocation8], %s1856
          %1858 = dma.done %s1854, 4096
        $region84: #{tpu_custom_call.1} parent=71 // pred_fallthru
          _
      $region72: #{tpu_custom_call.1} parent=5 // pred_fallthru
        _
    $region6: #{tpu_custom_call.1} parent=1 // loop_footer
      %s30 = sadd.s32 1, %s26
    $region7: #{tpu_custom_call.1} parent=1 // loop_footer_branch
      %25 = sbr.rel target = $region3
    $region8: #{tpu_custom_call.1} parent=1 // loop_exit
      _
    %1859 = vsyncpa [#allocation3], 1
    %s1860 = scalar_lea.sflag [#allocation3], 1
    %1861 = vsyncpa %s1860, 1
    %1862 = vsyncpa [#allocation6], 1
    %1863 = vsyncpa [#allocation4], 1
    %s1864 = scalar_lea.sflag [#allocation4], 1
    %1865 = vsyncpa %s1864, 1
    %1866 = vsyncpa [#allocation9], 1
    %s1867 = scalar_lea.sflag [#allocation9], 1
    %1868 = vsyncpa %s1867, 1

</llo_original>
